<compile_context>
chip_gen: v7x
topology: tpu7x:2x2x1
jax: 0.10.0
libtpu: 0.0.40
codegen_flags: <defaults>
</compile_context>

<pallas_src>
import numpy as np
import jax
import jax.numpy as jnp
from jax import lax
from jax.experimental import pallas as pl
from jax.experimental.pallas import tpu as pltpu


def _bilinear_matrix(out_size: int, in_size: int) -> np.ndarray:
    """(out_size, in_size) matrix matching torch bilinear upsample,
    align_corners=False (PyTorch default for nn.Upsample(mode='bilinear'))."""
    scale = out_size / in_size
    dst = np.arange(out_size, dtype=np.float64)
    src = (dst + 0.5) / scale - 0.5
    src = np.maximum(src, 0.0)                      # PyTorch clamps negative coords
    i0 = np.minimum(np.floor(src).astype(np.int64), in_size - 1)
    i1 = np.minimum(i0 + 1, in_size - 1)
    w1 = src - i0
    w0 = 1.0 - w1
    A = np.zeros((out_size, in_size), dtype=np.float64)
    A[np.arange(out_size), i0] += w0
    A[np.arange(out_size), i1] += w1
    return A.astype(np.float32)


def _round_up(x: int, m: int) -> int:
    return -(-x // m) * m


def _pad2(h: int, w: int) -> int:
    """Element count of an (h, w) VMEM slab after (8, 128) tile padding."""
    return _round_up(max(h, 1), 8) * _round_up(max(w, 1), 128)


def _vmem_capacity_bytes() -> int:
    try:
        return int(pltpu.get_tpu_info().vmem_capacity_bytes)
    except Exception:
        return 64 * 1024 * 1024          # conservative (v7x per-core) fallback


def _pick_c_blk(C: int, H: int, W: int, itemsize: int,
                budget_bytes: int, force_split: bool) -> int:
    """Largest channel block whose PADDED, double-buffered VMEM footprint fits
    `budget_bytes`.  Prefers an exact divisor of C when one is within 2x."""
    per_c_io = (_pad2(H, W) * 2                      # f_4 input + output block
                + _pad2(H // 2, W // 2)
                + _pad2(H // 4, W // 4)
                + _pad2(H // 8, W // 8)) * itemsize
    per_c_scratch = 2 * _pad2(H // 2, W) * 4         # named scratch + compiler temp
    per_c = 2 * per_c_io + per_c_scratch             # inputs/output double-buffered
    c_blk = max(1, min(C, budget_bytes // per_c))
    if force_split and C >= 2:
        c_blk = min(c_blk, -(-C // 2))                # guarantee >= 2 channel blocks
    for d in range(c_blk, 0, -1):                     # prefer an exact divisor of C
        if C % d == 0:
            if 2 * d >= c_blk:
                c_blk = d
            break
    return c_blk


def _upsample_block(x_ref, ah_ref, awt_ref, o_ref, t_ref, precision):
    """o_ref[c] = A_h @ x_ref[c] @ A_w^T for every channel in the block."""
    c_blk, h_in, w_in = x_ref.shape
    w_out = awt_ref.shape[1]
    ah = ah_ref[...]                                  # (H_out, h_in)
    awt = awt_ref[...]                                # (w_in, W_out)

    if h_in % 8 == 0:
        # W-pass: one whole-block matmul (M = c_blk*h_in) into VMEM scratch.
        x2d = x_ref[...].reshape(c_blk * h_in, w_in)
        t = jnp.dot(x2d, awt, preferred_element_type=jnp.float32,
                    precision=precision)
        t_ref[:, 0:h_in, :] = t.reshape(c_blk, h_in, w_out)

        # H-pass: fori_loop over channels reading scratch slices.
        def h_pass(c, carry):
            o_ref[c] = jnp.dot(ah, t_ref[c, 0:h_in, :],
                               preferred_element_type=jnp.float32,
                               precision=precision).astype(o_ref.dtype)
            return carry

        lax.fori_loop(0, c_blk, h_pass, 0)
    else:
        # Sublane-unaligned h_in (tiny inputs): per-channel two-pass; avoids
        # the cross-channel reshape that would force a relayout.
        def both(c, carry):
            tc = jnp.dot(x_ref[c], awt, preferred_element_type=jnp.float32,
                         precision=precision)
            o_ref[c] = jnp.dot(ah, tc, preferred_element_type=jnp.float32,
                               precision=precision).astype(o_ref.dtype)
            return carry

        lax.fori_loop(0, c_blk, both, 0)


def ffm_forward(f_4, f_8, f_16, f_32):
    """FFM.forward: upsample f_8/f_16/f_32 to f_4's spatial size and write all
    four sources directly into their channel slice of the fused output."""
    N, C, H, W = f_4.shape
    assert H % 8 == 0 and W % 8 == 0, "target (//4) resolution must be /8-divisible"
    assert f_8.shape == (N, C, H // 2, W // 2)
    assert f_16.shape == (N, C, H // 4, W // 4)
    assert f_32.shape == (N, C, H // 8, W // 8)
    dtype = f_4.dtype
    itemsize = jnp.dtype(dtype).itemsize

    # bf16 interpolation weights are exact (multiples of 1/16); keeps the MXU
    # on its native bf16 path for bf16 activations.  f32 uses HIGHEST precision
    # (kernel is HBM-bound, so the extra MXU passes are free).
    mat_dtype = jnp.bfloat16 if dtype == jnp.bfloat16 else jnp.float32
    precision = lax.Precision.HIGHEST if dtype == jnp.float32 else lax.Precision.DEFAULT

    a_h2 = jnp.asarray(_bilinear_matrix(H, H // 2), dtype=mat_dtype)
    a_w2t = jnp.asarray(_bilinear_matrix(W, W // 2).T, dtype=mat_dtype)
    a_h4 = jnp.asarray(_bilinear_matrix(H, H // 4), dtype=mat_dtype)
    a_w4t = jnp.asarray(_bilinear_matrix(W, W // 4).T, dtype=mat_dtype)
    a_h8 = jnp.asarray(_bilinear_matrix(H, H // 8), dtype=mat_dtype)
    a_w8t = jnp.asarray(_bilinear_matrix(W, W // 8).T, dtype=mat_dtype)

    # Per-generation VMEM budget: ~5/8 of physical capacity as the scoped
    # limit (v7x: 40 MiB of 64; v5e/v6e: 80 MiB of 128), 3/4 of that for blocks.
    vmem_cap = _vmem_capacity_bytes()
    vmem_limit = min((vmem_cap * 5) // 8, 100 * 1024 * 1024)
    budget = max((vmem_limit * 3) // 4, 2 * 1024 * 1024)

    c_blk = _pick_c_blk(C, H, W, itemsize, budget, force_split=(N == 1))
    n_cb = -(-C // c_blk)

    def in_spec(h_in, w_in):
        # Index map ignores s -> each input block is DMA'd once per (n, cb)
        # and revisited across the 4 source steps.
        return pl.BlockSpec((None, c_blk, h_in, w_in),
                            lambda n, cb, s: (n, cb, 0, 0))

    def mat_spec(a):
        return pl.BlockSpec(a.shape, lambda n, cb, s: (0, 0))

    # Output laid out (N, 4, C, H, W); source order on the inner grid axis is
    #   s=0: f_4 copy, s=1: f_32 (8x), s=2: f_16 (4x), s=3: f_8 (2x)
    # so the heaviest compute runs last and hides the next block's prefetch.
    # Concat slot for step s is (4 - s) % 4  ->  [0, 3, 2, 1].
    out_spec = pl.BlockSpec((None, None, c_blk, H, W),
                            lambda n, cb, s: (n, (4 - s) % 4, cb, 0, 0))

    def kernel(f4_ref, f8_ref, f16_ref, f32_ref,
               ah2_ref, awt2_ref, ah4_ref, awt4_ref, ah8_ref, awt8_ref,
               o_ref, t_ref):
        s = pl.program_id(2)

        @pl.when(s == 0)
        def _():
            o_ref[...] = f4_ref[...].astype(o_ref.dtype)   # f_4 pass-through

        @pl.when(s == 1)
        def _():
            _upsample_block(f32_ref, ah8_ref, awt8_ref, o_ref, t_ref, precision)

        @pl.when(s == 2)
        def _():
            _upsample_block(f16_ref, ah4_ref, awt4_ref, o_ref, t_ref, precision)

        @pl.when(s == 3)
        def _():
            _upsample_block(f8_ref, ah2_ref, awt2_ref, o_ref, t_ref, precision)

    # Advisory cost estimate (kernel is HBM-bandwidth bound).
    def up_flops(h_in, w_in):
        return 2 * N * C * (h_in * w_in * W + H * h_in * W)

    flops = up_flops(H // 2, W // 2) + up_flops(H // 4, W // 4) + up_flops(H // 8, W // 8)
    bytes_accessed = (
        sum(int(np.prod(t.shape)) * jnp.dtype(t.dtype).itemsize
            for t in (f_4, f_8, f_16, f_32))
        + N * 4 * C * H * W * itemsize
        + sum(int(np.prod(a.shape)) * jnp.dtype(mat_dtype).itemsize
              for a in (a_h2, a_w2t, a_h4, a_w4t, a_h8, a_w8t)))

    # NOTE: stores are lane-masked when W < 128 / not a multiple of 128; at the
    # module's production resolution (Original//4) W is typically >= 128 and
    # lane-dense, so no wrapper-side padding pass (extra HBM traffic) is added.
    out5 = pl.pallas_call(
        kernel,
        out_shape=jax.ShapeDtypeStruct((N, 4, C, H, W), dtype),
        grid=(N, n_cb, 4),
        in_specs=[
            in_spec(H, W),                 # f_4 (copied through)
            in_spec(H // 2, W // 2),       # f_8
            in_spec(H // 4, W // 4),       # f_16
            in_spec(H // 8, W // 8),       # f_32
            mat_spec(a_h2), mat_spec(a_w2t),
            mat_spec(a_h4), mat_spec(a_w4t),
            mat_spec(a_h8), mat_spec(a_w8t),
        ],
        out_specs=out_spec,
        scratch_shapes=[pltpu.VMEM((c_blk, H // 2, W), jnp.float32)],
        compiler_params=pltpu.CompilerParams(
            dimension_semantics=("parallel", "parallel", "arbitrary"),
            vmem_limit_bytes=int(vmem_limit),
        ),
        cost_estimate=pl.CostEstimate(
            flops=int(flops), transcendentals=0, bytes_accessed=int(bytes_accessed)),
    )(f_4, f_8, f_16, f_32, a_h2, a_w2t, a_h4, a_w4t, a_h8, a_w8t)

    # Free view: (N, 4, C, H, W) -> (N, 4C, H, W), matching torch.cat(dim=1).
    return out5.reshape(N, 4 * C, H, W)


if __name__ == "__main__":
    key = jax.random.PRNGKey(0)
    k1, k2, k3, k4 = jax.random.split(key, 4)
    N, C = 2, 4
    H, W = 16, 16  # target (Original//4) resolution
    f_4 = jax.random.normal(k1, (N, C, H, W), dtype=jnp.float32)
    f_8 = jax.random.normal(k2, (N, C, H // 2, W // 2), dtype=jnp.float32)
    f_16 = jax.random.normal(k3, (N, C, H // 4, W // 4), dtype=jnp.float32)
    f_32 = jax.random.normal(k4, (N, C, H // 8, W // 8), dtype=jnp.float32)

    out = jax.jit(ffm_forward)(f_4, f_8, f_16, f_32)
    jax.block_until_ready(out)
    assert out.shape == (N, 4 * C, H, W), out.shape

    # Reference: same separable interpolation matrices applied in plain numpy.
    def ref_up(x, scale):
        h_in, w_in = x.shape[-2:]
        A_h = _bilinear_matrix(h_in * scale, h_in)
        A_w = _bilinear_matrix(w_in * scale, w_in)
        return np.einsum('oh,nchw,vw->ncov', A_h, np.asarray(x, np.float32), A_w)

    ref = np.concatenate(
        [np.asarray(f_4), ref_up(f_8, 2), ref_up(f_16, 4), ref_up(f_32, 8)], axis=1)
    np.testing.assert_allclose(np.asarray(out), ref, rtol=1e-5, atol=1e-5)
    # f_4 passes through bit-exactly into the first C channels.
    assert bool(jnp.array_equal(out[:, :C], f_4))
    print("KERNEL_OK")
</pallas_src>

<mosaic_0001>
module attributes {stable_mosaic.version = 11 : i64} {
  func.func @kernel(%arg0: i32, %arg1: i32, %arg2: i32, %arg3: memref<1x4x16x16xf32, #tpu.memory_space<vmem>>, %arg4: memref<1x4x8x8xf32, #tpu.memory_space<vmem>>, %arg5: memref<1x4x4x4xf32, #tpu.memory_space<vmem>>, %arg6: memref<1x4x2x2xf32, #tpu.memory_space<vmem>>, %arg7: memref<16x8xf32, #tpu.memory_space<vmem>>, %arg8: memref<8x16xf32, #tpu.memory_space<vmem>>, %arg9: memref<16x4xf32, #tpu.memory_space<vmem>>, %arg10: memref<4x16xf32, #tpu.memory_space<vmem>>, %arg11: memref<16x2xf32, #tpu.memory_space<vmem>>, %arg12: memref<2x16xf32, #tpu.memory_space<vmem>>, %arg13: memref<1x1x4x16x16xf32, #tpu.memory_space<vmem>>, %arg14: memref<4x8x16xf32, #tpu.memory_space<vmem>>) attributes {dimension_semantics = [#tpu.dimension_semantics<parallel>, #tpu.dimension_semantics<parallel>, #tpu.dimension_semantics<arbitrary>], iteration_bounds = array<i64: 2, 1, 4>, scalar_prefetch = 0 : i64, scratch_operands = 1 : i64, tpu.core_type = #tpu.core_type<tc>, window_params = [{transform_indices = @transform_0, window_bounds = array<i64: 1, 4, 16, 16>}, {transform_indices = @transform_1, window_bounds = array<i64: 1, 4, 8, 8>}, {transform_indices = @transform_2, window_bounds = array<i64: 1, 4, 4, 4>}, {transform_indices = @transform_3, window_bounds = array<i64: 1, 4, 2, 2>}, {pipeline_mode = #tpu.pipeline_mode<synchronous>, transform_indices = @transform_4, window_bounds = array<i64: 16, 8>}, {pipeline_mode = #tpu.pipeline_mode<synchronous>, transform_indices = @transform_5, window_bounds = array<i64: 8, 16>}, {pipeline_mode = #tpu.pipeline_mode<synchronous>, transform_indices = @transform_6, window_bounds = array<i64: 16, 4>}, {pipeline_mode = #tpu.pipeline_mode<synchronous>, transform_indices = @transform_7, window_bounds = array<i64: 4, 16>}, {pipeline_mode = #tpu.pipeline_mode<synchronous>, transform_indices = @transform_8, window_bounds = array<i64: 16, 2>}, {pipeline_mode = #tpu.pipeline_mode<synchronous>, transform_indices = @transform_9, window_bounds = array<i64: 2, 16>}, {transform_indices = @transform_10, window_bounds = array<i64: 1, 1, 4, 16, 16>}]} {
    %c0_i32 = arith.constant 0 : i32
    %0 = arith.cmpi eq, %arg2, %c0_i32 : i32
    %1 = arith.extui %0 : i1 to i32
    %c0_i32_0 = arith.constant 0 : i32
    %2 = arith.cmpi ne, %1, %c0_i32_0 : i32
    scf.if %2 {
      %c0 = arith.constant 0 : index
      %c0_4 = arith.constant 0 : index
      %c0_5 = arith.constant 0 : index
      %c0_6 = arith.constant 0 : index
      %12 = vector.load %arg3[%c0, %c0_4, %c0_5, %c0_6] : memref<1x4x16x16xf32, #tpu.memory_space<vmem>>, vector<1x4x16x16xf32>
      %13 = vector.shape_cast %12 : vector<1x4x16x16xf32> to vector<4x16x16xf32>
      %c0_7 = arith.constant 0 : index
      %c0_8 = arith.constant 0 : index
      %c0_9 = arith.constant 0 : index
      %c0_10 = arith.constant 0 : index
      %c0_11 = arith.constant 0 : index
      %14 = vector.load %arg13[%c0_7, %c0_8, %c0_9, %c0_10, %c0_11] : memref<1x1x4x16x16xf32, #tpu.memory_space<vmem>>, vector<1x1x4x16x16xf32>
      %15 = vector.shape_cast %14 : vector<1x1x4x16x16xf32> to vector<4x16x16xf32>
      %16 = vector.shape_cast %13 : vector<4x16x16xf32> to vector<1x1x4x16x16xf32>
      tpu.vector_store %arg13[%c0_7, %c0_8, %c0_9, %c0_10, %c0_11], %16 {strides = array<i32>} : memref<1x1x4x16x16xf32, #tpu.memory_space<vmem>>, vector<1x1x4x16x16xf32>,
    } else {
    }
    %c1_i32 = arith.constant 1 : i32
    %3 = arith.cmpi eq, %arg2, %c1_i32 : i32
    %4 = arith.extui %3 : i1 to i32
    %c0_i32_1 = arith.constant 0 : i32
    %5 = arith.cmpi ne, %4, %c0_i32_1 : i32
    scf.if %5 {
      %c0 = arith.constant 0 : index
      %c0_4 = arith.constant 0 : index
      %12 = vector.load %arg11[%c0, %c0_4] : memref<16x2xf32, #tpu.memory_space<vmem>>, vector<16x2xf32>
      %c0_5 = arith.constant 0 : index
      %c0_6 = arith.constant 0 : index
      %13 = vector.load %arg12[%c0_5, %c0_6] : memref<2x16xf32, #tpu.memory_space<vmem>>, vector<2x16xf32>
      %c0_i32_7 = arith.constant 0 : i32
      %c4_i32 = arith.constant 4 : i32
      %14 = arith.addi %c0_i32_7, %c4_i32 : i32
      %c1_i32_8 = arith.constant 1 : i32
      scf.for %arg15 = %c0_i32_7 to %14 step %c1_i32_8  : i32 {
        %c0_10 = arith.constant 0 : index
        %15 = arith.index_cast %arg15 : i32 to index
        %c0_11 = arith.constant 0 : index
        %c0_12 = arith.constant 0 : index
        %16 = vector.load %arg6[%c0_10, %15, %c0_11, %c0_12] : memref<1x4x2x2xf32, #tpu.memory_space<vmem>>, vector<1x1x2x2xf32>
        %17 = vector.shape_cast %16 : vector<1x1x2x2xf32> to vector<2x2xf32>
        %cst = arith.constant dense<0.000000e+00> : vector<2x16xf32>
        %18 = tpu.matmul %17, %13, %cst {dimension_numbers = #tpu.dot_dimension_numbers<[1], [0], [0], [1], [0, 0, 1, 1], [], []>, precision = #tpu.contract_precision<fp32>} : vector<2x2xf32>, vector<2x16xf32>, vector<2x16xf32> -> vector<2x16xf32>
        %cst_13 = arith.constant dense<0.000000e+00> : vector<16x16xf32>
        %19 = tpu.matmul %12, %18, %cst_13 {dimension_numbers = #tpu.dot_dimension_numbers<[1], [0], [0], [1], [0, 0, 1, 1], [], []>, precision = #tpu.contract_precision<fp32>} : vector<16x2xf32>, vector<2x16xf32>, vector<16x16xf32> -> vector<16x16xf32>
        %c0_14 = arith.constant 0 : index
        %c0_15 = arith.constant 0 : index
        %20 = arith.index_cast %arg15 : i32 to index
        %c0_16 = arith.constant 0 : index
        %c0_17 = arith.constant 0 : index
        %21 = vector.load %arg13[%c0_14, %c0_15, %20, %c0_16, %c0_17] : memref<1x1x4x16x16xf32, #tpu.memory_space<vmem>>, vector<1x1x1x16x16xf32>
        %22 = vector.shape_cast %21 : vector<1x1x1x16x16xf32> to vector<16x16xf32>
        %23 = vector.shape_cast %19 : vector<16x16xf32> to vector<1x1x1x16x16xf32>
        tpu.vector_store %arg13[%c0_14, %c0_15, %20, %c0_16, %c0_17], %23 {strides = array<i32>} : memref<1x1x4x16x16xf32, #tpu.memory_space<vmem>>, vector<1x1x1x16x16xf32>,
      }
      %c4_i32_9 = arith.constant 4 : i32
    } else {
    }
    %c2_i32 = arith.constant 2 : i32
    %6 = arith.cmpi eq, %arg2, %c2_i32 : i32
    %7 = arith.extui %6 : i1 to i32
    %c0_i32_2 = arith.constant 0 : i32
    %8 = arith.cmpi ne, %7, %c0_i32_2 : i32
    scf.if %8 {
      %c0 = arith.constant 0 : index
      %c0_4 = arith.constant 0 : index
      %12 = vector.load %arg9[%c0, %c0_4] : memref<16x4xf32, #tpu.memory_space<vmem>>, vector<16x4xf32>
      %c0_5 = arith.constant 0 : index
      %c0_6 = arith.constant 0 : index
      %13 = vector.load %arg10[%c0_5, %c0_6] : memref<4x16xf32, #tpu.memory_space<vmem>>, vector<4x16xf32>
      %c0_i32_7 = arith.constant 0 : i32
      %c4_i32 = arith.constant 4 : i32
      %14 = arith.addi %c0_i32_7, %c4_i32 : i32
      %c1_i32_8 = arith.constant 1 : i32
      scf.for %arg15 = %c0_i32_7 to %14 step %c1_i32_8  : i32 {
        %c0_10 = arith.constant 0 : index
        %15 = arith.index_cast %arg15 : i32 to index
        %c0_11 = arith.constant 0 : index
        %c0_12 = arith.constant 0 : index
        %16 = vector.load %arg5[%c0_10, %15, %c0_11, %c0_12] : memref<1x4x4x4xf32, #tpu.memory_space<vmem>>, vector<1x1x4x4xf32>
        %17 = vector.shape_cast %16 : vector<1x1x4x4xf32> to vector<4x4xf32>
        %cst = arith.constant dense<0.000000e+00> : vector<4x16xf32>
        %18 = tpu.matmul %17, %13, %cst {dimension_numbers = #tpu.dot_dimension_numbers<[1], [0], [0], [1], [0, 0, 1, 1], [], []>, precision = #tpu.contract_precision<fp32>} : vector<4x4xf32>, vector<4x16xf32>, vector<4x16xf32> -> vector<4x16xf32>
        %cst_13 = arith.constant dense<0.000000e+00> : vector<16x16xf32>
        %19 = tpu.matmul %12, %18, %cst_13 {dimension_numbers = #tpu.dot_dimension_numbers<[1], [0], [0], [1], [0, 0, 1, 1], [], []>, precision = #tpu.contract_precision<fp32>} : vector<16x4xf32>, vector<4x16xf32>, vector<16x16xf32> -> vector<16x16xf32>
        %c0_14 = arith.constant 0 : index
        %c0_15 = arith.constant 0 : index
        %20 = arith.index_cast %arg15 : i32 to index
        %c0_16 = arith.constant 0 : index
        %c0_17 = arith.constant 0 : index
        %21 = vector.load %arg13[%c0_14, %c0_15, %20, %c0_16, %c0_17] : memref<1x1x4x16x16xf32, #tpu.memory_space<vmem>>, vector<1x1x1x16x16xf32>
        %22 = vector.shape_cast %21 : vector<1x1x1x16x16xf32> to vector<16x16xf32>
        %23 = vector.shape_cast %19 : vector<16x16xf32> to vector<1x1x1x16x16xf32>
        tpu.vector_store %arg13[%c0_14, %c0_15, %20, %c0_16, %c0_17], %23 {strides = array<i32>} : memref<1x1x4x16x16xf32, #tpu.memory_space<vmem>>, vector<1x1x1x16x16xf32>,
      }
      %c4_i32_9 = arith.constant 4 : i32
    } else {
    }
    %c3_i32 = arith.constant 3 : i32
    %9 = arith.cmpi eq, %arg2, %c3_i32 : i32
    %10 = arith.extui %9 : i1 to i32
    %c0_i32_3 = arith.constant 0 : i32
    %11 = arith.cmpi ne, %10, %c0_i32_3 : i32
    scf.if %11 {
      %c0 = arith.constant 0 : index
      %c0_4 = arith.constant 0 : index
      %12 = vector.load %arg7[%c0, %c0_4] : memref<16x8xf32, #tpu.memory_space<vmem>>, vector<16x8xf32>
      %c0_5 = arith.constant 0 : index
      %c0_6 = arith.constant 0 : index
      %13 = vector.load %arg8[%c0_5, %c0_6] : memref<8x16xf32, #tpu.memory_space<vmem>>, vector<8x16xf32>
      %c0_7 = arith.constant 0 : index
      %c0_8 = arith.constant 0 : index
      %c0_9 = arith.constant 0 : index
      %c0_10 = arith.constant 0 : index
      %14 = vector.load %arg4[%c0_7, %c0_8, %c0_9, %c0_10] : memref<1x4x8x8xf32, #tpu.memory_space<vmem>>, vector<1x4x8x8xf32>
      %15 = vector.shape_cast %14 : vector<1x4x8x8xf32> to vector<4x8x8xf32>
      %16 = vector.shape_cast %15 : vector<4x8x8xf32> to vector<32x8xf32>
      %cst = arith.constant dense<0.000000e+00> : vector<32x16xf32>
      %17 = tpu.matmul %16, %13, %cst {dimension_numbers = #tpu.dot_dimension_numbers<[1], [0], [0], [1], [0, 0, 1, 1], [], []>, precision = #tpu.contract_precision<fp32>} : vector<32x8xf32>, vector<8x16xf32>, vector<32x16xf32> -> vector<32x16xf32>
      %18 = vector.shape_cast %17 : vector<32x16xf32> to vector<4x8x16xf32>
      %c0_11 = arith.constant 0 : index
      %c0_12 = arith.constant 0 : index
      %c0_13 = arith.constant 0 : index
      %19 = vector.load %arg14[%c0_11, %c0_12, %c0_13] : memref<4x8x16xf32, #tpu.memory_space<vmem>>, vector<4x8x16xf32>
      tpu.vector_store %arg14[%c0_11, %c0_12, %c0_13], %18 {strides = array<i32>} : memref<4x8x16xf32, #tpu.memory_space<vmem>>, vector<4x8x16xf32>,
      %c0_i32_14 = arith.constant 0 : i32
      %c4_i32 = arith.constant 4 : i32
      %20 = arith.addi %c0_i32_14, %c4_i32 : i32
      %c1_i32_15 = arith.constant 1 : i32
      scf.for %arg15 = %c0_i32_14 to %20 step %c1_i32_15  : i32 {
        %21 = arith.index_cast %arg15 : i32 to index
        %c0_17 = arith.constant 0 : index
        %c0_18 = arith.constant 0 : index
        %22 = vector.load %arg14[%21, %c0_17, %c0_18] : memref<4x8x16xf32, #tpu.memory_space<vmem>>, vector<1x8x16xf32>
        %23 = vector.shape_cast %22 : vector<1x8x16xf32> to vector<8x16xf32>
        %cst_19 = arith.constant dense<0.000000e+00> : vector<16x16xf32>
        %24 = tpu.matmul %12, %23, %cst_19 {dimension_numbers = #tpu.dot_dimension_numbers<[1], [0], [0], [1], [0, 0, 1, 1], [], []>, precision = #tpu.contract_precision<fp32>} : vector<16x8xf32>, vector<8x16xf32>, vector<16x16xf32> -> vector<16x16xf32>
        %c0_20 = arith.constant 0 : index
        %c0_21 = arith.constant 0 : index
        %25 = arith.index_cast %arg15 : i32 to index
        %c0_22 = arith.constant 0 : index
        %c0_23 = arith.constant 0 : index
        %26 = vector.load %arg13[%c0_20, %c0_21, %25, %c0_22, %c0_23] : memref<1x1x4x16x16xf32, #tpu.memory_space<vmem>>, vector<1x1x1x16x16xf32>
        %27 = vector.shape_cast %26 : vector<1x1x1x16x16xf32> to vector<16x16xf32>
        %28 = vector.shape_cast %24 : vector<16x16xf32> to vector<1x1x1x16x16xf32>
        tpu.vector_store %arg13[%c0_20, %c0_21, %25, %c0_22, %c0_23], %28 {strides = array<i32>} : memref<1x1x4x16x16xf32, #tpu.memory_space<vmem>>, vector<1x1x1x16x16xf32>,
      }
      %c4_i32_16 = arith.constant 4 : i32
    } else {
    }
    return
  }
  func.func @transform_0(%arg0: i32, %arg1: i32, %arg2: i32) -> (i32, i32, i32, i32) {
    %c0_i32 = arith.constant 0 : i32
    %c0_i32_0 = arith.constant 0 : i32
    %c0_i32_1 = arith.constant 0 : i32
    return %arg0, %arg1, %c0_i32, %c0_i32_0 : i32, i32, i32, i32
  }
  func.func @transform_1(%arg0: i32, %arg1: i32, %arg2: i32) -> (i32, i32, i32, i32) {
    %c0_i32 = arith.constant 0 : i32
    %c0_i32_0 = arith.constant 0 : i32
    %c0_i32_1 = arith.constant 0 : i32
    return %arg0, %arg1, %c0_i32, %c0_i32_0 : i32, i32, i32, i32
  }
  func.func @transform_2(%arg0: i32, %arg1: i32, %arg2: i32) -> (i32, i32, i32, i32) {
    %c0_i32 = arith.constant 0 : i32
    %c0_i32_0 = arith.constant 0 : i32
    %c0_i32_1 = arith.constant 0 : i32
    return %arg0, %arg1, %c0_i32, %c0_i32_0 : i32, i32, i32, i32
  }
  func.func @transform_3(%arg0: i32, %arg1: i32, %arg2: i32) -> (i32, i32, i32, i32) {
    %c0_i32 = arith.constant 0 : i32
    %c0_i32_0 = arith.constant 0 : i32
    %c0_i32_1 = arith.constant 0 : i32
    return %arg0, %arg1, %c0_i32, %c0_i32_0 : i32, i32, i32, i32
  }
  func.func @transform_4(%arg0: i32, %arg1: i32, %arg2: i32) -> (i32, i32) {
    %c0_i32 = arith.constant 0 : i32
    %c0_i32_0 = arith.constant 0 : i32
    %c0_i32_1 = arith.constant 0 : i32
    return %c0_i32, %c0_i32_0 : i32, i32
  }
  func.func @transform_5(%arg0: i32, %arg1: i32, %arg2: i32) -> (i32, i32) {
    %c0_i32 = arith.constant 0 : i32
    %c0_i32_0 = arith.constant 0 : i32
    %c0_i32_1 = arith.constant 0 : i32
    return %c0_i32, %c0_i32_0 : i32, i32
  }
  func.func @transform_6(%arg0: i32, %arg1: i32, %arg2: i32) -> (i32, i32) {
    %c0_i32 = arith.constant 0 : i32
    %c0_i32_0 = arith.constant 0 : i32
    %c0_i32_1 = arith.constant 0 : i32
    return %c0_i32, %c0_i32_0 : i32, i32
  }
  func.func @transform_7(%arg0: i32, %arg1: i32, %arg2: i32) -> (i32, i32) {
    %c0_i32 = arith.constant 0 : i32
    %c0_i32_0 = arith.constant 0 : i32
    %c0_i32_1 = arith.constant 0 : i32
    return %c0_i32, %c0_i32_0 : i32, i32
  }
  func.func @transform_8(%arg0: i32, %arg1: i32, %arg2: i32) -> (i32, i32) {
    %c0_i32 = arith.constant 0 : i32
    %c0_i32_0 = arith.constant 0 : i32
    %c0_i32_1 = arith.constant 0 : i32
    return %c0_i32, %c0_i32_0 : i32, i32
  }
  func.func @transform_9(%arg0: i32, %arg1: i32, %arg2: i32) -> (i32, i32) {
    %c0_i32 = arith.constant 0 : i32
    %c0_i32_0 = arith.constant 0 : i32
    %c0_i32_1 = arith.constant 0 : i32
    return %c0_i32, %c0_i32_0 : i32, i32
  }
  func.func @transform_10(%arg0: i32, %arg1: i32, %arg2: i32) -> (i32, i32, i32, i32, i32) {
    %c4_i32 = arith.constant 4 : i32
    %0 = arith.subi %c4_i32, %arg2 : i32
    %c4_i32_0 = arith.constant 4 : i32
    %c0_i32 = arith.constant 0 : i32
    %1 = arith.cmpi eq, %c4_i32_0, %c0_i32 : i32
    %c1_i32 = arith.constant 1 : i32
    %2 = arith.select %1, %c1_i32, %c4_i32_0 : i32
    %3 = arith.remsi %0, %2 : i32
    %c0_i32_1 = arith.constant 0 : i32
    %4 = arith.cmpi ne, %3, %c0_i32_1 : i32
    %c0_i32_2 = arith.constant 0 : i32
    %5 = arith.cmpi slt, %3, %c0_i32_2 : i32
    %c0_i32_3 = arith.constant 0 : i32
    %6 = arith.cmpi slt, %2, %c0_i32_3 : i32
    %7 = arith.xori %5, %6 : i1
    %8 = arith.andi %7, %4 : i1
    %9 = arith.addi %3, %2 : i32
    %10 = arith.select %8, %9, %3 : i32
    %c0_i32_4 = arith.constant 0 : i32
    %c0_i32_5 = arith.constant 0 : i32
    %c0_i32_6 = arith.constant 0 : i32
    return %arg0, %10, %arg1, %c0_i32_4, %c0_i32_5 : i32, i32, i32, i32, i32
  }
}

</mosaic_0001>

<llo_original>
// kernel: ffm_forward.1
$region0: #{ffm_forward.1}
  #allocation0 [shape = 'u32[]', space=smem, size = 0x4, offset = 0x4, fixed_abs, tag = 'smem constant byte address 0x4 - core index']
  #allocation1 [shape = 'u32[144,128]{1,0:T(1,128)}', space=vmem, size = 0x12000, scoped, tag = 'internal scratch']
  #allocation2 [shape = 'f32[4,8,16]{2,1,0:T(8,128)}', space=vmem, size = 0x4000, scoped, tag = 'scratch operand']
  %s0 = inlined_call_operand.hbm [shape: f32[2,4,16,16], index: 0, kind: input, shape index: {}]
  %s1 = inlined_call_operand.hbm [shape: f32[2,4,8,8], index: 1, kind: input, shape index: {}]
  %s2 = inlined_call_operand.hbm [shape: f32[2,4,4,4], index: 2, kind: input, shape index: {}]
  %s3 = inlined_call_operand.vmem [shape: f32[2,4,2,2], index: 3, kind: input, shape index: {}]
  %s4 = inlined_call_operand.hbm [shape: f32[16,8], index: 4, kind: input, shape index: {}]
  %s5 = inlined_call_operand.vmem [shape: f32[8,16], index: 5, kind: input, shape index: {}]
  %s6 = inlined_call_operand.vmem [shape: f32[16,4], index: 6, kind: input, shape index: {}]
  %s7 = inlined_call_operand.vmem [shape: f32[4,16], index: 7, kind: input, shape index: {}]
  %s8 = inlined_call_operand.vmem [shape: f32[16,2], index: 8, kind: input, shape index: {}]
  %s9 = inlined_call_operand.vmem [shape: f32[2,16], index: 9, kind: input, shape index: {}]
  %s10 = inlined_call_operand.hbm [shape: f32[2,4,4,16,16], index: 10, kind: output, shape index: {}]
  %s11 = sld [smem:[#allocation0]]
  $region126: #{ffm_forward.1} parent=0
    _
  %s13 = ssub.s32 1, %s11
  %s14 = scalar_select 0, %s13, %s11
  $region1: #{ffm_forward.1} parent=0
    #allocation3 [shape = 'u8[65536]{0}', space=vmem, size = 0x10000, scoped, tag = 'input window, operand 0']
    #allocation4 [shape = 's32[2]{0}', space=sflag, size = 0x8, scoped, tag = 'scoped memory for ffm_forward.1']
    #allocation5 [shape = 's32[2]{0}', space=sflag, size = 0x8, scoped, tag = 'scoped memory for ffm_forward.1']
    #allocation6 [shape = 'u8[32768]{0}', space=vmem, size = 0x8000, scoped, tag = 'input window, operand 1']
    #allocation7 [shape = 's32[2]{0}', space=sflag, size = 0x8, scoped, tag = 'scoped memory for ffm_forward.1']
    #allocation8 [shape = 'u8[16384]{0}', space=vmem, size = 0x4000, scoped, tag = 'input window, operand 2']
    #allocation9 [shape = 'u8[8192]{0}', space=vmem, size = 0x2000, scoped, tag = 'input window, operand 4, single buffered']
    #allocation10 [shape = 's32[1]{0}', space=sflag, size = 0x4, scoped, tag = 'scoped memory for ffm_forward.1']
    #allocation11 [shape = 'u8[65536]{0}', space=vmem, size = 0x10000, scoped, tag = 'output window, operand 0']
    %15 = vsyncpa [#allocation4], 0
    %s16 = scalar_lea.sflag [#allocation4], 1
    %17 = vsyncpa %s16, 0
    %18 = vsyncpa [#allocation7], 0
    %s19 = scalar_lea.sflag [#allocation7], 1
    %20 = vsyncpa %s19, 0
    %21 = vsyncpa [#allocation10], 0
    %22 = vsyncpa [#allocation5], 0
    %s23 = scalar_lea.sflag [#allocation5], 1
    %24 = vsyncpa %s23, 0
    loop: start=0, step=1, limit=10
    $region2: #{ffm_forward.1} parent=1 // loop_pre_header
      _
    $region3: #{ffm_forward.1} parent=1 // loop_header
      %s26 = sphi 0, %s30
      %p27 = scmp.ge.s32.totalorder %s26, 10
      %s33 = sphi 0, %s52
      %s34 = sphi 0, %s48
      %s35 = sphi 0, %s44
      %s36 = sphi 0, %s33
      %s37 = sphi 0, %s34
      %s38 = sphi 0, %s35
      %s39 = sphi 0, %s36
      %s40 = sphi 0, %s37
      %s41 = sphi 0, %s38
      %s57 = sphi 0, %s59
      %s60 = sphi 0, %s57
      %s61 = sphi 0, %s60
      %s77 = sphi 0, %s61
      %s85 = sphi 0, %s87
      %s88 = sphi 0, %s85
      %s89 = sphi 0, %s88
      %s105 = sphi 0, %s89
      %s113 = sphi 0, %s115
      %s116 = sphi 0, %s113
      %s117 = sphi 0, %s116
      %s133 = sphi 0, %s117
      %s141 = sphi 0, %s143
      %s144 = sphi 0, %s141
      %s145 = sphi 0, %s144
      %s161 = sphi 0, %s145
      %s165 = sphi 0, %s165
      %s167 = sphi 0, %s165
      %s168 = sphi 0, %s167
      %s182 = sphi 0, %s168
      %s186 = sphi 0, %s186
      %s188 = sphi 0, %s186
      %s189 = sphi 0, %s188
      %s203 = sphi 0, %s189
      %s207 = sphi 0, %s207
      %s209 = sphi 0, %s207
      %s210 = sphi 0, %s209
      %s224 = sphi 0, %s210
      %s228 = sphi 0, %s228
      %s230 = sphi 0, %s228
      %s231 = sphi 0, %s230
      %s245 = sphi 0, %s231
      %s249 = sphi 0, %s249
      %s251 = sphi 0, %s249
      %s252 = sphi 0, %s251
      %s266 = sphi 0, %s252
      %s270 = sphi 0, %s270
      %s272 = sphi 0, %s270
      %s273 = sphi 0, %s272
      %s287 = sphi 0, %s273
      %s323 = sphi 0, %s325
      %s326 = sphi 0, %s323
      %s327 = sphi 0, %s326
      %s343 = sphi 0, %s327
    $region4: #{ffm_forward.1} parent=1 // loop_header_branch
      %29 = sbr.rel (%p27) target = $region8
    $region5: #{ffm_forward.1} parent=1 // loop_body
      %s31 = ssub.s32 %s26, 1
      %s32 = ssub.s32 %s26, 2
      %s42 = sadd.s32 1, %s35
      %p43 = scmp.ge.s32.totalorder %s42, 4
      %s44 = scalar_select %p43, 0, %s42
      %s45 = sadd.s32 1, %s34
      %s46 = scalar_select %p43, %s45, %s34
      %p47 = scmp.ge.s32.totalorder %s46, 1
      %s48 = scalar_select %p47, 0, %s46
      %s49 = sadd.s32 1, %s33
      %s50 = scalar_select %p47, %s49, %s33
      %p51 = scmp.ge.s32.totalorder %s50, 2
      %s52 = scalar_select %p51, 0, %s50
      %s53 = ssub.s32 %s33, %s52
      %s54 = ssub.s32 %s34, %s48
      %s55 = sor.u32 %s53, %s54
      %p56 = scmp.eq.s32.totalorder %s55, 0
      %s58 = sadd.s32 %s57, 1
      %s59 = scalar_select %p56, %s57, %s58
      %p62 = pneg %p56
      %p63 = scmp.eq.s32.totalorder %s26, 7
      %p64 = por %p62, %p63
      %p65 = scmp.ne.s32.totalorder %s57, %s60
      %p66 = scmp.eq.s32.totalorder %s26, 0
      %p67 = por %p65, %p66
      %p68 = scmp.ne.s32.totalorder %s57, %s60
      %p69 = scmp.eq.s32.totalorder %s31, 7
      %p70 = por %p68, %p69
      %p71 = scmp.ne.s32.totalorder %s60, %s61
      %p72 = scmp.eq.s32.totalorder %s31, 0
      %p73 = por %p71, %p72
      %p74 = scmp.ne.s32.totalorder %s60, %s61
      %p75 = scmp.eq.s32.totalorder %s32, 7
      %p76 = por %p74, %p75
      %p78 = scmp.ne.s32.totalorder %s61, %s77
      %p79 = scmp.eq.s32.totalorder %s32, 0
      %p80 = por %p78, %p79
      %s81 = ssub.s32 %s33, %s52
      %s82 = ssub.s32 %s34, %s48
      %s83 = sor.u32 %s81, %s82
      %p84 = scmp.eq.s32.totalorder %s83, 0
      %s86 = sadd.s32 %s85, 1
      %s87 = scalar_select %p84, %s85, %s86
      %p90 = pneg %p84
      %p91 = scmp.eq.s32.totalorder %s26, 7
      %p92 = por %p90, %p91
      %p93 = scmp.ne.s32.totalorder %s85, %s88
      %p94 = scmp.eq.s32.totalorder %s26, 0
      %p95 = por %p93, %p94
      %p96 = scmp.ne.s32.totalorder %s85, %s88
      %p97 = scmp.eq.s32.totalorder %s31, 7
      %p98 = por %p96, %p97
      %p99 = scmp.ne.s32.totalorder %s88, %s89
      %p100 = scmp.eq.s32.totalorder %s31, 0
      %p101 = por %p99, %p100
      %p102 = scmp.ne.s32.totalorder %s88, %s89
      %p103 = scmp.eq.s32.totalorder %s32, 7
      %p104 = por %p102, %p103
      %p106 = scmp.ne.s32.totalorder %s89, %s105
      %p107 = scmp.eq.s32.totalorder %s32, 0
      %p108 = por %p106, %p107
      %s109 = ssub.s32 %s33, %s52
      %s110 = ssub.s32 %s34, %s48
      %s111 = sor.u32 %s109, %s110
      %p112 = scmp.eq.s32.totalorder %s111, 0
      %s114 = sadd.s32 %s113, 1
      %s115 = scalar_select %p112, %s113, %s114
      %p118 = pneg %p112
      %p119 = scmp.eq.s32.totalorder %s26, 7
      %p120 = por %p118, %p119
      %p121 = scmp.ne.s32.totalorder %s113, %s116
      %p122 = scmp.eq.s32.totalorder %s26, 0
      %p123 = por %p121, %p122
      %p124 = scmp.ne.s32.totalorder %s113, %s116
      %p125 = scmp.eq.s32.totalorder %s31, 7
      %p126 = por %p124, %p125
      %p127 = scmp.ne.s32.totalorder %s116, %s117
      %p128 = scmp.eq.s32.totalorder %s31, 0
      %p129 = por %p127, %p128
      %p130 = scmp.ne.s32.totalorder %s116, %s117
      %p131 = scmp.eq.s32.totalorder %s32, 7
      %p132 = por %p130, %p131
      %p134 = scmp.ne.s32.totalorder %s117, %s133
      %p135 = scmp.eq.s32.totalorder %s32, 0
      %p136 = por %p134, %p135
      %s137 = ssub.s32 %s33, %s52
      %s138 = ssub.s32 %s34, %s48
      %s139 = sor.u32 %s137, %s138
      %p140 = scmp.eq.s32.totalorder %s139, 0
      %s142 = sadd.s32 %s141, 1
      %s143 = scalar_select %p140, %s141, %s142
      %p146 = pneg %p140
      %p147 = scmp.eq.s32.totalorder %s26, 7
      %p148 = por %p146, %p147
      %p149 = scmp.ne.s32.totalorder %s141, %s144
      %p150 = scmp.eq.s32.totalorder %s26, 0
      %p151 = por %p149, %p150
      %p152 = scmp.ne.s32.totalorder %s141, %s144
      %p153 = scmp.eq.s32.totalorder %s31, 7
      %p154 = por %p152, %p153
      %p155 = scmp.ne.s32.totalorder %s144, %s145
      %p156 = scmp.eq.s32.totalorder %s31, 0
      %p157 = por %p155, %p156
      %p158 = scmp.ne.s32.totalorder %s144, %s145
      %p159 = scmp.eq.s32.totalorder %s32, 7
      %p160 = por %p158, %p159
      %p162 = scmp.ne.s32.totalorder %s145, %s161
      %p163 = scmp.eq.s32.totalorder %s32, 0
      %p164 = por %p162, %p163
      %s166 = sadd.s32 %s165, 1
      %p169 = scmp.eq.s32.totalorder %s26, 7
      %p170 = scmp.ne.s32.totalorder %s165, %s167
      %p171 = scmp.eq.s32.totalorder %s26, 0
      %p172 = por %p170, %p171
      %p173 = scmp.ne.s32.totalorder %s165, %s167
      %p174 = scmp.eq.s32.totalorder %s31, 7
      %p175 = por %p173, %p174
      %p176 = scmp.ne.s32.totalorder %s167, %s168
      %p177 = scmp.eq.s32.totalorder %s31, 0
      %p178 = por %p176, %p177
      %p179 = scmp.ne.s32.totalorder %s167, %s168
      %p180 = scmp.eq.s32.totalorder %s32, 7
      %p181 = por %p179, %p180
      %p183 = scmp.ne.s32.totalorder %s168, %s182
      %p184 = scmp.eq.s32.totalorder %s32, 0
      %p185 = por %p183, %p184
      %s187 = sadd.s32 %s186, 1
      %p190 = scmp.eq.s32.totalorder %s26, 7
      %p191 = scmp.ne.s32.totalorder %s186, %s188
      %p192 = scmp.eq.s32.totalorder %s26, 0
      %p193 = por %p191, %p192
      %p194 = scmp.ne.s32.totalorder %s186, %s188
      %p195 = scmp.eq.s32.totalorder %s31, 7
      %p196 = por %p194, %p195
      %p197 = scmp.ne.s32.totalorder %s188, %s189
      %p198 = scmp.eq.s32.totalorder %s31, 0
      %p199 = por %p197, %p198
      %p200 = scmp.ne.s32.totalorder %s188, %s189
      %p201 = scmp.eq.s32.totalorder %s32, 7
      %p202 = por %p200, %p201
      %p204 = scmp.ne.s32.totalorder %s189, %s203
      %p205 = scmp.eq.s32.totalorder %s32, 0
      %p206 = por %p204, %p205
      %s208 = sadd.s32 %s207, 1
      %p211 = scmp.eq.s32.totalorder %s26, 7
      %p212 = scmp.ne.s32.totalorder %s207, %s209
      %p213 = scmp.eq.s32.totalorder %s26, 0
      %p214 = por %p212, %p213
      %p215 = scmp.ne.s32.totalorder %s207, %s209
      %p216 = scmp.eq.s32.totalorder %s31, 7
      %p217 = por %p215, %p216
      %p218 = scmp.ne.s32.totalorder %s209, %s210
      %p219 = scmp.eq.s32.totalorder %s31, 0
      %p220 = por %p218, %p219
      %p221 = scmp.ne.s32.totalorder %s209, %s210
      %p222 = scmp.eq.s32.totalorder %s32, 7
      %p223 = por %p221, %p222
      %p225 = scmp.ne.s32.totalorder %s210, %s224
      %p226 = scmp.eq.s32.totalorder %s32, 0
      %p227 = por %p225, %p226
      %s229 = sadd.s32 %s228, 1
      %p232 = scmp.eq.s32.totalorder %s26, 7
      %p233 = scmp.ne.s32.totalorder %s228, %s230
      %p234 = scmp.eq.s32.totalorder %s26, 0
      %p235 = por %p233, %p234
      %p236 = scmp.ne.s32.totalorder %s228, %s230
      %p237 = scmp.eq.s32.totalorder %s31, 7
      %p238 = por %p236, %p237
      %p239 = scmp.ne.s32.totalorder %s230, %s231
      %p240 = scmp.eq.s32.totalorder %s31, 0
      %p241 = por %p239, %p240
      %p242 = scmp.ne.s32.totalorder %s230, %s231
      %p243 = scmp.eq.s32.totalorder %s32, 7
      %p244 = por %p242, %p243
      %p246 = scmp.ne.s32.totalorder %s231, %s245
      %p247 = scmp.eq.s32.totalorder %s32, 0
      %p248 = por %p246, %p247
      %s250 = sadd.s32 %s249, 1
      %p253 = scmp.eq.s32.totalorder %s26, 7
      %p254 = scmp.ne.s32.totalorder %s249, %s251
      %p255 = scmp.eq.s32.totalorder %s26, 0
      %p256 = por %p254, %p255
      %p257 = scmp.ne.s32.totalorder %s249, %s251
      %p258 = scmp.eq.s32.totalorder %s31, 7
      %p259 = por %p257, %p258
      %p260 = scmp.ne.s32.totalorder %s251, %s252
      %p261 = scmp.eq.s32.totalorder %s31, 0
      %p262 = por %p260, %p261
      %p263 = scmp.ne.s32.totalorder %s251, %s252
      %p264 = scmp.eq.s32.totalorder %s32, 7
      %p265 = por %p263, %p264
      %p267 = scmp.ne.s32.totalorder %s252, %s266
      %p268 = scmp.eq.s32.totalorder %s32, 0
      %p269 = por %p267, %p268
      %s271 = sadd.s32 %s270, 1
      %p274 = scmp.eq.s32.totalorder %s26, 7
      %p275 = scmp.ne.s32.totalorder %s270, %s272
      %p276 = scmp.eq.s32.totalorder %s26, 0
      %p277 = por %p275, %p276
      %p278 = scmp.ne.s32.totalorder %s270, %s272
      %p279 = scmp.eq.s32.totalorder %s31, 7
      %p280 = por %p278, %p279
      %p281 = scmp.ne.s32.totalorder %s272, %s273
      %p282 = scmp.eq.s32.totalorder %s31, 0
      %p283 = por %p281, %p282
      %p284 = scmp.ne.s32.totalorder %s272, %s273
      %p285 = scmp.eq.s32.totalorder %s32, 7
      %p286 = por %p284, %p285
      %p288 = scmp.ne.s32.totalorder %s273, %s287
      %p289 = scmp.eq.s32.totalorder %s32, 0
      %p290 = por %p288, %p289
      %s291 = ssub.s32 4, %s35
      %p292 = scmp.lt.s32.totalorder %s291, 0
      %s293 = ssub.s32 0, %s291
      %s294 = scalar_select %p292, %s293, %s291
      %s295 = sand.u32 %s294, 3
      %s296 = ssub.s32 0, %s295
      %s297 = scalar_select %p292, %s296, %s295
      %p298 = scmp.ne.s32.totalorder %s297, 0
      %p299 = scmp.lt.s32.totalorder %s297, 0
      %p300 = pnand %p299, %p298
      %p301 = pneg %p300
      %s302 = sadd.s32 %s297, 4
      %s303 = scalar_select %p301, %s302, %s297
      %s304 = ssub.s32 4, %s44
      %p305 = scmp.lt.s32.totalorder %s304, 0
      %s306 = ssub.s32 0, %s304
      %s307 = scalar_select %p305, %s306, %s304
      %s308 = sand.u32 %s307, 3
      %s309 = ssub.s32 0, %s308
      %s310 = scalar_select %p305, %s309, %s308
      %p311 = scmp.ne.s32.totalorder %s310, 0
      %p312 = scmp.lt.s32.totalorder %s310, 0
      %p313 = pnand %p312, %p311
      %p314 = pneg %p313
      %s315 = sadd.s32 %s310, 4
      %s316 = scalar_select %p314, %s315, %s310
      %s317 = ssub.s32 %s33, %s52
      %s318 = ssub.s32 %s303, %s316
      %s319 = sor.u32 %s317, %s318
      %s320 = ssub.s32 %s34, %s48
      %s321 = sor.u32 %s319, %s320
      %p322 = scmp.eq.s32.totalorder %s321, 0
      %s324 = sadd.s32 %s323, 1
      %s325 = scalar_select %p322, %s323, %s324
      %p328 = pneg %p322
      %p329 = scmp.eq.s32.totalorder %s26, 7
      %p330 = por %p328, %p329
      %p331 = scmp.ne.s32.totalorder %s323, %s326
      %p332 = scmp.eq.s32.totalorder %s26, 0
      %p333 = por %p331, %p332
      %p334 = scmp.ne.s32.totalorder %s323, %s326
      %p335 = scmp.eq.s32.totalorder %s31, 7
      %p336 = por %p334, %p335
      %p337 = scmp.ne.s32.totalorder %s326, %s327
      %p338 = scmp.eq.s32.totalorder %s31, 0
      %p339 = por %p337, %p338
      %p340 = scmp.ne.s32.totalorder %s326, %s327
      %p341 = scmp.eq.s32.totalorder %s32, 7
      %p342 = por %p340, %p341
      %p344 = scmp.ne.s32.totalorder %s327, %s343
      %p345 = scmp.eq.s32.totalorder %s32, 0
      %p346 = por %p344, %p345
      %p347 = scmp.le.s32.totalorder 1, %s26
      %p348 = scmp.lt.s32.totalorder %s26, 9
      %p349 = pnand %p347, %p348
      %p350 = pneg %p349
      // Predicated region
      $region9: #{ffm_forward.1} parent=5 // pred_check
        _
      $region10: #{ffm_forward.1} parent=5 // pred_check_branch
        %352 = sbr.rel (%p349) target = $region12
      $region11: #{ffm_forward.1} parent=5 // pred_region
        %s353 = ssub.s32 %s26, 1
        // Predicated region
        $region13: #{ffm_forward.1} parent=11 // pred_check
          %p354 = pneg %p178
        $region14: #{ffm_forward.1} parent=11 // pred_check_branch
          %356 = sbr.rel (%p354) target = $region16
        $region15: #{ffm_forward.1} parent=11 // pred_region
          %s358 = ssub.s32 256, 256
          %359 = vsyncadd [#allocation10], %s358
          %s360 = sshll.u32 [#allocation9], 4
          %s361 = int_to_ptr.vmem [resolvable:$true] %s360
          %366 = dma.hbm_to_vmem [thread:$0]  %s4, 256, %s361, [#allocation10], 128, 128, 8
        $region16: #{ffm_forward.1} parent=11 // pred_fallthru
          _
        // Predicated region
        $region17: #{ffm_forward.1} parent=11 // pred_check
          %p367 = pneg %p199
        $region18: #{ffm_forward.1} parent=11 // pred_check_branch
          %369 = sbr.rel (%p367) target = $region20
        $region19: #{ffm_forward.1} parent=11 // pred_region
          _
        $region20: #{ffm_forward.1} parent=11 // pred_fallthru
          _
        // Predicated region
        $region21: #{ffm_forward.1} parent=11 // pred_check
          %p370 = pneg %p220
        $region22: #{ffm_forward.1} parent=11 // pred_check_branch
          %372 = sbr.rel (%p370) target = $region24
        $region23: #{ffm_forward.1} parent=11 // pred_region
          _
        $region24: #{ffm_forward.1} parent=11 // pred_fallthru
          _
        // Predicated region
        $region25: #{ffm_forward.1} parent=11 // pred_check
          %p373 = pneg %p241
        $region26: #{ffm_forward.1} parent=11 // pred_check_branch
          %375 = sbr.rel (%p373) target = $region28
        $region27: #{ffm_forward.1} parent=11 // pred_region
          _
        $region28: #{ffm_forward.1} parent=11 // pred_fallthru
          _
        // Predicated region
        $region29: #{ffm_forward.1} parent=11 // pred_check
          %p376 = pneg %p262
        $region30: #{ffm_forward.1} parent=11 // pred_check_branch
          %378 = sbr.rel (%p376) target = $region32
        $region31: #{ffm_forward.1} parent=11 // pred_region
          _
        $region32: #{ffm_forward.1} parent=11 // pred_fallthru
          _
        // Predicated region
        $region33: #{ffm_forward.1} parent=11 // pred_check
          %p379 = pneg %p283
        $region34: #{ffm_forward.1} parent=11 // pred_check_branch
          %381 = sbr.rel (%p379) target = $region36
        $region35: #{ffm_forward.1} parent=11 // pred_region
          _
        $region36: #{ffm_forward.1} parent=11 // pred_fallthru
          _
      $region12: #{ffm_forward.1} parent=5 // pred_fallthru
        _
      %p382 = scmp.lt.s32.totalorder %s26, 8
      // Predicated region
      $region37: #{ffm_forward.1} parent=5 // pred_check
        %p383 = pneg %p382
      $region38: #{ffm_forward.1} parent=5 // pred_check_branch
        %385 = sbr.rel (%p383) target = $region40
      $region39: #{ffm_forward.1} parent=5 // pred_region
        // Predicated region
        $region41: #{ffm_forward.1} parent=39 // pred_check
          %p386 = pneg %p67
        $region42: #{ffm_forward.1} parent=39 // pred_check_branch
          %388 = sbr.rel (%p386) target = $region44
        $region43: #{ffm_forward.1} parent=39 // pred_region
          %s389 = sand.u32 %s57, 1
          %s390 = scalar_lea.sflag [#allocation4], %s389
          %s391 = sand.u32 %s57, 1
          %s392 = smul.addr %s391, 64
          %s393 = scalar_lea.vmem [#allocation3], %s392
          %s394 = smul.u32 4, %s34
          %s396 = ssub.s32 1024, 1024
          %397 = vsyncadd %s390, %s396
          %s398 = smul.addr %s394, 2
          %s399 = smul.addr %s33, 8
          %s400 = sadd.s32 %s398, %s399
          %s401 = smul.addr %s400, 128
          %s402 = scalar_lea.hbm %s0, %s401
          %s403 = sshll.u32 %s393, 4
          %s404 = int_to_ptr.vmem [resolvable:$true] %s403
          %409 = dma.hbm_to_vmem [thread:$0]  %s402, 1024, %s404, %s390, 128, 128, 8
        $region44: #{ffm_forward.1} parent=39 // pred_fallthru
          _
        // Predicated region
        $region45: #{ffm_forward.1} parent=39 // pred_check
          %p410 = pneg %p95
        $region46: #{ffm_forward.1} parent=39 // pred_check_branch
          %412 = sbr.rel (%p410) target = $region48
        $region47: #{ffm_forward.1} parent=39 // pred_region
          %s413 = sand.u32 %s26, 1
          %s414 = scalar_lea.sflag [#allocation7], %s413
          %s415 = sand.u32 %s85, 1
          %s416 = smul.addr %s415, 32
          %s417 = scalar_lea.vmem [#allocation6], %s416
          %s418 = smul.u32 4, %s34
          %s420 = ssub.s32 512, 512
          %421 = vsyncadd %s414, %s420
          %s422 = smul.addr %s33, 4
          %s423 = sadd.s32 %s418, %s422
          %s424 = smul.addr %s423, 128
          %s425 = scalar_lea.hbm %s1, %s424
          %s426 = sshll.u32 %s417, 4
          %s427 = int_to_ptr.vmem [resolvable:$true] %s426
          %432 = dma.hbm_to_vmem [thread:$0]  %s425, 512, %s427, %s414, 128, 128, 8
        $region48: #{ffm_forward.1} parent=39 // pred_fallthru
          _
        // Predicated region
        $region49: #{ffm_forward.1} parent=39 // pred_check
          %p433 = pneg %p123
        $region50: #{ffm_forward.1} parent=39 // pred_check_branch
          %435 = sbr.rel (%p433) target = $region52
        $region51: #{ffm_forward.1} parent=39 // pred_region
          %s436 = sand.u32 %s26, 1
          %s437 = scalar_lea.sflag [#allocation7], %s436
          %s438 = sand.u32 %s113, 1
          %s439 = smul.addr %s438, 16
          %s440 = scalar_lea.vmem [#allocation8], %s439
          %s441 = smul.u32 4, %s34
          %s443 = ssub.s32 256, 256
          %444 = vsyncadd %s437, %s443
          %s445 = smul.addr %s33, 4
          %s446 = sadd.s32 %s441, %s445
          %s447 = smul.addr %s446, 64
          %s448 = scalar_lea.hbm %s2, %s447
          %s449 = sshll.u32 %s440, 4
          %s450 = int_to_ptr.vmem [resolvable:$true] %s449
          %455 = dma.hbm_to_vmem [thread:$0]  %s448, 256, %s450, %s437, 64, 64, 4
        $region52: #{ffm_forward.1} parent=39 // pred_fallthru
          _
        // Predicated region
        $region53: #{ffm_forward.1} parent=39 // pred_check
          %p456 = pneg %p151
        $region54: #{ffm_forward.1} parent=39 // pred_check_branch
          %458 = sbr.rel (%p456) target = $region56
        $region55: #{ffm_forward.1} parent=39 // pred_region
          %s459 = smul.u32 4, %s34
          %p460 = scmp.lt.s32.totalorder %s33, 1
          %s461 = scalar_select %p460, %s33, 1
          %p462 = scmp.lt.s32.totalorder %s459, 3
          %s463 = scalar_select %p462, %s459, 3
          %s464 = smul.addr %s461, 4
          %s465 = sadd.s32 %s463, %s464
          %s466 = smul.addr %s465, 2
          %s467 = scalar_lea.vmem %s3, %s466
          %s468 = smul.u32 4, %s34
        $region56: #{ffm_forward.1} parent=39 // pred_fallthru
          _
      $region40: #{ffm_forward.1} parent=5 // pred_fallthru
        _
      %p469 = scmp.le.s32.totalorder 1, %s26
      %p470 = scmp.lt.s32.totalorder %s26, 9
      %p471 = pnand %p469, %p470
      %p472 = pneg %p471
      // Predicated region
      $region57: #{ffm_forward.1} parent=5 // pred_check
        _
      $region58: #{ffm_forward.1} parent=5 // pred_check_branch
        %474 = sbr.rel (%p471) target = $region60
      $region59: #{ffm_forward.1} parent=5 // pred_region
        %s475 = ssub.s32 %s26, 1
        %s476 = sand.u32 %s60, 1
        %s477 = scalar_lea.sflag [#allocation4], %s476
        %s478 = sand.u32 %s60, 1
        %s479 = smul.addr %s478, 64
        %s480 = scalar_lea.vmem [#allocation3], %s479
        // Predicated region
        $region61: #{ffm_forward.1} parent=59 // pred_check
          %p481 = pneg %p73
        $region62: #{ffm_forward.1} parent=59 // pred_check_branch
          %483 = sbr.rel (%p481) target = $region64
        $region63: #{ffm_forward.1} parent=59 // pred_region
          %484 = dma.done %s477, 1024
        $region64: #{ffm_forward.1} parent=59 // pred_fallthru
          _
        %s485 = sand.u32 %s31, 1
        %s486 = scalar_lea.sflag [#allocation7], %s485
        %s487 = sand.u32 %s88, 1
        %s488 = smul.addr %s487, 32
        %s489 = scalar_lea.vmem [#allocation6], %s488
        // Predicated region
        $region65: #{ffm_forward.1} parent=59 // pred_check
          %p490 = pneg %p101
        $region66: #{ffm_forward.1} parent=59 // pred_check_branch
          %492 = sbr.rel (%p490) target = $region68
        $region67: #{ffm_forward.1} parent=59 // pred_region
          %493 = dma.done %s486, 512
        $region68: #{ffm_forward.1} parent=59 // pred_fallthru
          _
        %s494 = sand.u32 %s31, 1
        %s495 = scalar_lea.sflag [#allocation7], %s494
        %s496 = sand.u32 %s116, 1
        %s497 = smul.addr %s496, 16
        %s498 = scalar_lea.vmem [#allocation8], %s497
        // Predicated region
        $region69: #{ffm_forward.1} parent=59 // pred_check
          %p499 = pneg %p129
        $region70: #{ffm_forward.1} parent=59 // pred_check_branch
          %501 = sbr.rel (%p499) target = $region72
        $region71: #{ffm_forward.1} parent=59 // pred_region
          %502 = dma.done %s495, 256
        $region72: #{ffm_forward.1} parent=59 // pred_fallthru
          _
        // Predicated region
        $region73: #{ffm_forward.1} parent=59 // pred_check
          %p503 = pneg %p178
        $region74: #{ffm_forward.1} parent=59 // pred_check_branch
          %505 = sbr.rel (%p503) target = $region76
        $region75: #{ffm_forward.1} parent=59 // pred_region
          %506 = dma.done [#allocation10], 256
        $region76: #{ffm_forward.1} parent=59 // pred_fallthru
          _
        %s507 = sand.u32 %s60, 1
        %s508 = scalar_lea.sflag [#allocation4], %s507
        %s509 = sand.u32 %s60, 1
        %s510 = smul.addr %s509, 64
        %s511 = scalar_lea.vmem [#allocation3], %s510
        %p512 = pneg %p73
        %p513 = pneg %p70
        %s514 = sand.u32 %s31, 1
        %s515 = scalar_lea.sflag [#allocation7], %s514
        %s516 = sand.u32 %s88, 1
        %s517 = smul.addr %s516, 32
        %s518 = scalar_lea.vmem [#allocation6], %s517
        %p519 = pneg %p101
        %p520 = pneg %p98
        %s521 = sand.u32 %s31, 1
        %s522 = scalar_lea.sflag [#allocation7], %s521
        %s523 = sand.u32 %s116, 1
        %s524 = smul.addr %s523, 16
        %s525 = scalar_lea.vmem [#allocation8], %s524
        %p526 = pneg %p129
        %p527 = pneg %p126
        %s528 = smul.u32 4, %s37
        %p529 = scmp.lt.s32.totalorder %s36, 1
        %s530 = scalar_select %p529, %s36, 1
        %p531 = scmp.lt.s32.totalorder %s528, 3
        %s532 = scalar_select %p531, %s528, 3
        %s533 = smul.addr %s530, 4
        %s534 = sadd.s32 %s532, %s533
        %s535 = smul.addr %s534, 2
        %s536 = scalar_lea.vmem %s3, %s535
        %p537 = pneg %p157
        %p538 = pneg %p154
        %p539 = pneg %p178
        %p540 = pneg %p175
        %p541 = pneg %p199
        %p542 = pneg %p196
        %p543 = pneg %p220
        %p544 = pneg %p217
        %p545 = pneg %p241
        %p546 = pneg %p238
        %p547 = pneg %p262
        %p548 = pneg %p259
        %p549 = pneg %p283
        %p550 = pneg %p280
        %p551 = pneg %p339
        %p552 = pneg %p336
        %s553 = sand.u32 %s326, 1
        %s554 = scalar_lea.sflag [#allocation5], %s553
        %s555 = sand.u32 %s326, 1
        %s556 = smul.addr %s555, 64
        %s557 = scalar_lea.vmem [#allocation11], %s556
        %s558 = smul.u32 4, %s37
        %s559 = smul.u32 4, %s37
        %s560 = smul.u32 4, %s37
        %s561 = smul.u32 4, %s37
        %p562 = scmp.lt.s32.totalorder %s36, 1
        %s563 = scalar_select %p562, %s36, 1
        %p564 = scmp.lt.s32.totalorder %s561, 3
        %s565 = scalar_select %p564, %s561, 3
        %s566 = smul.addr %s563, 4
        %s567 = sadd.s32 %s565, %s566
        %s568 = smul.addr %s567, 2
        %s569 = scalar_lea.vmem %s3, %s568
        %s570 = smul.u32 4, %s37
        %s571 = ssub.s32 4, %s38
        %p572 = scmp.lt.s32.totalorder %s571, 0
        %s573 = ssub.s32 0, %s571
        %s574 = scalar_select %p572, %s573, %s571
        %s575 = sand.u32 %s574, 3
        %s576 = ssub.s32 0, %s575
        %s577 = scalar_select %p572, %s576, %s575
        %p578 = scmp.ne.s32.totalorder %s577, 0
        %p579 = scmp.lt.s32.totalorder %s577, 0
        %p580 = pnand %p579, %p578
        %p581 = pneg %p580
        %s582 = sadd.s32 %s577, 4
        %s583 = scalar_select %p581, %s582, %s577
        %s584 = smul.u32 4, %s37
        %p585 = scmp.eq.s32.totalorder %s38, 0
        // Predicated region
        $region77: #{ffm_forward.1} parent=59 // pred_check
          %p586 = pneg %p585
        $region78: #{ffm_forward.1} parent=59 // pred_check_branch
          %588 = sbr.rel (%p586) target = $region80
        $region79: #{ffm_forward.1} parent=59 // pred_region
          %v589 = vld [vmem:[%s480] sm:$0xff]
          %v590 = vld [vmem:[%s480 + $0x8] sm:$0xff]
          %v591 = vld [vmem:[%s480 + $0x10] sm:$0xff]
          %v592 = vld [vmem:[%s480 + $0x18] sm:$0xff]
          %v593 = vld [vmem:[%s480 + $0x20] sm:$0xff]
          %v594 = vld [vmem:[%s480 + $0x28] sm:$0xff]
          %v595 = vld [vmem:[%s480 + $0x30] sm:$0xff]
          %v596 = vld [vmem:[%s480 + $0x38] sm:$0xff]
          %vm597 = vcmask 130048
          %598 = vst.msk [vmem:[%s557] sm:$0xff] %vm597, %v589
          %599 = vst.msk [vmem:[%s557 + $0x8] sm:$0xff] %vm597, %v590
          %600 = vst.msk [vmem:[%s557 + $0x10] sm:$0xff] %vm597, %v591
          %601 = vst.msk [vmem:[%s557 + $0x18] sm:$0xff] %vm597, %v592
          %602 = vst.msk [vmem:[%s557 + $0x20] sm:$0xff] %vm597, %v593
          %603 = vst.msk [vmem:[%s557 + $0x28] sm:$0xff] %vm597, %v594
          %604 = vst.msk [vmem:[%s557 + $0x30] sm:$0xff] %vm597, %v595
          %605 = vst.msk [vmem:[%s557 + $0x38] sm:$0xff] %vm597, %v596
        $region80: #{ffm_forward.1} parent=59 // pred_fallthru
          _
        %p606 = scmp.eq.s32.totalorder %s38, 1
        // Predicated region
        $region81: #{ffm_forward.1} parent=59 // pred_check
          %p607 = pneg %p606
        $region82: #{ffm_forward.1} parent=59 // pred_check_branch
          %609 = sbr.rel (%p607) target = $region84
        $region83: #{ffm_forward.1} parent=59 // pred_region
          %v610 = vld [vmem:[%s8] sm:$0xff]
          %v611 = vld [vmem:[%s8 + $0x8] sm:$0xff]
          %v612 = vld [vmem:[%s9] sm:$0x3]
          loop: start=0, step=1, limit=4
          $region85: #{ffm_forward.1} parent=83 // loop_pre_header
            _
          $region86: #{ffm_forward.1} parent=83 // loop_header
            %s614 = sphi 0, %s618
            %p615 = scmp.ge.s32.totalorder %s614, 4
          $region87: #{ffm_forward.1} parent=83 // loop_header_branch
            %617 = sbr.rel (%p615) target = $region91
          $region88: #{ffm_forward.1} parent=83 // loop_body
            %s619 = smul.u32 %s614, 2
            %s620 = scalar_lea.vmem %s569, %s619
            %v621 = vld [vmem:[%s620] sm:$0x3]
            %vm622 = vcmask 15360
            %v624 = vsel %vm622, %v621, 0
            %vm626 = vcmask 1041408
            %v628 = vsel %vm626, %v612, 0
            %630 = vmatprep.subr.mxu0 0.0
            %v631 = vand.u32 %v628, 4294901760
            %632 = vmatpush1.msra.mxu0 %v631
            %633 = vmatprep.subr.mxu0 0.0
            %634 = vmatpush1.msra.mxu0 0.0
            %635 = vmatprep.subr.mxu0 0.0
            %636 = vmatpush1.msra.mxu0 0.0
            %637 = vmatprep.subr.mxu0 0.0
            %638 = vmatpush1.msra.mxu0 0.0
            %639 = vmatprep.subr.mxu0 0.0
            %640 = vmatpush1.msra.mxu0 0.0
            %641 = vmatprep.subr.mxu0 0.0
            %642 = vmatpush1.msra.mxu0 0.0
            %643 = vmatprep.subr.mxu0 0.0
            %644 = vmatpush1.msra.mxu0 0.0
            %645 = vmatprep.subr.mxu0 0.0
            %646 = vmatpush1.msra.mxu0 0.0
            %647 = vmatprep.subr.mxu0 0.0
            %648 = vmatpush1.msra.mxu0 0.0
            %649 = vmatprep.subr.mxu0 0.0
            %650 = vmatpush1.msra.mxu0 0.0
            %651 = vmatprep.subr.mxu0 0.0
            %652 = vmatpush1.msra.mxu0 0.0
            %653 = vmatprep.subr.mxu0 0.0
            %654 = vmatpush1.msra.mxu0 0.0
            %655 = vmatprep.subr.mxu0 0.0
            %656 = vmatpush1.msra.mxu0 0.0
            %657 = vmatprep.subr.mxu0 0.0
            %658 = vmatpush1.msra.mxu0 0.0
            %659 = vmatprep.subr.mxu0 0.0
            %660 = vmatpush1.msra.mxu0 0.0
            %661 = vmatprep.subr.mxu0 0.0
            %662 = vmatpush1.msra.mxu0 0.0
            %663 = vmatprep.subr.mxu0 0.0
            %664 = vmatpush1.msra.mxu0 0.0
            %665 = vmatprep.subr.mxu0 0.0
            %666 = vmatpush1.msra.mxu0 0.0
            %667 = vmatprep.subr.mxu0 0.0
            %668 = vmatpush1.msra.mxu0 0.0
            %669 = vmatprep.subr.mxu0 0.0
            %670 = vmatpush1.msra.mxu0 0.0
            %671 = vmatprep.subr.mxu0 0.0
            %672 = vmatpush1.msra.mxu0 0.0
            %673 = vmatprep.subr.mxu0 0.0
            %674 = vmatpush1.msra.mxu0 0.0
            %675 = vmatprep.subr.mxu0 0.0
            %676 = vmatpush1.msra.mxu0 0.0
            %677 = vmatprep.subr.mxu0 0.0
            %678 = vmatpush1.msra.mxu0 0.0
            %679 = vmatprep.subr.mxu0 0.0
            %680 = vmatpush1.msra.mxu0 0.0
            %681 = vmatprep.subr.mxu0 0.0
            %682 = vmatpush1.msra.mxu0 0.0
            %683 = vmatprep.subr.mxu0 0.0
            %684 = vmatpush1.msra.mxu0 0.0
            %685 = vmatprep.subr.mxu0 0.0
            %686 = vmatpush1.msra.mxu0 0.0
            %687 = vmatprep.subr.mxu0 0.0
            %688 = vmatpush1.msra.mxu0 0.0
            %689 = vmatprep.subr.mxu0 0.0
            %690 = vmatpush1.msra.mxu0 0.0
            %691 = vmatprep.subr.mxu0 0.0
            %692 = vmatpush1.msra.mxu0 0.0
            %693 = vmatprep.subr.mxu0 0.0
            %694 = vmatpush1.msra.mxu0 0.0
            %695 = vmatprep.mubr.f32.mxu0 0.0
            %v696 = vand.u32 %v624, 4294901760
            %v697 = vsub.f32 %v624, %v696
            %v698 = vand.u32 %v697, 4294901760
            %v699 = vsub.f32 %v697, %v698
            %v700 = vand.u32 %v699, 4294901760
            %701 = vmatmul.mubr.f32.gmra.mrb[0].mxu0 %v700
            %v702 = vpop.f32.mrb[0].mxu0
            %v703 = vadd.f32 0.0, %v702
            %v704 = vpop.f32.mrb[0].mxu0
            %705 = vdwg.mxu0
            %706 = vmatprep.subr.mxu0 0.0
            %v707 = vand.u32 %v628, 4294901760
            %v708 = vsub.f32 %v628, %v707
            %v709 = vand.u32 %v708, 4294901760
            %v710 = vsub.f32 %v708, %v709
            %v711 = vand.u32 %v710, 4294901760
            %712 = vmatpush1.msra.mxu0 %v711
            %713 = vmatprep.subr.mxu0 0.0
            %714 = vmatpush1.msra.mxu0 0.0
            %715 = vmatprep.subr.mxu0 0.0
            %716 = vmatpush1.msra.mxu0 0.0
            %717 = vmatprep.subr.mxu0 0.0
            %718 = vmatpush1.msra.mxu0 0.0
            %719 = vmatprep.subr.mxu0 0.0
            %720 = vmatpush1.msra.mxu0 0.0
            %721 = vmatprep.subr.mxu0 0.0
            %722 = vmatpush1.msra.mxu0 0.0
            %723 = vmatprep.subr.mxu0 0.0
            %724 = vmatpush1.msra.mxu0 0.0
            %725 = vmatprep.subr.mxu0 0.0
            %726 = vmatpush1.msra.mxu0 0.0
            %727 = vmatprep.subr.mxu0 0.0
            %728 = vmatpush1.msra.mxu0 0.0
            %729 = vmatprep.subr.mxu0 0.0
            %730 = vmatpush1.msra.mxu0 0.0
            %731 = vmatprep.subr.mxu0 0.0
            %732 = vmatpush1.msra.mxu0 0.0
            %733 = vmatprep.subr.mxu0 0.0
            %734 = vmatpush1.msra.mxu0 0.0
            %735 = vmatprep.subr.mxu0 0.0
            %736 = vmatpush1.msra.mxu0 0.0
            %737 = vmatprep.subr.mxu0 0.0
            %738 = vmatpush1.msra.mxu0 0.0
            %739 = vmatprep.subr.mxu0 0.0
            %740 = vmatpush1.msra.mxu0 0.0
            %741 = vmatprep.subr.mxu0 0.0
            %742 = vmatpush1.msra.mxu0 0.0
            %743 = vmatprep.subr.mxu0 0.0
            %744 = vmatpush1.msra.mxu0 0.0
            %745 = vmatprep.subr.mxu0 0.0
            %746 = vmatpush1.msra.mxu0 0.0
            %747 = vmatprep.subr.mxu0 0.0
            %748 = vmatpush1.msra.mxu0 0.0
            %749 = vmatprep.subr.mxu0 0.0
            %750 = vmatpush1.msra.mxu0 0.0
            %751 = vmatprep.subr.mxu0 0.0
            %752 = vmatpush1.msra.mxu0 0.0
            %753 = vmatprep.subr.mxu0 0.0
            %754 = vmatpush1.msra.mxu0 0.0
            %755 = vmatprep.subr.mxu0 0.0
            %756 = vmatpush1.msra.mxu0 0.0
            %757 = vmatprep.subr.mxu0 0.0
            %758 = vmatpush1.msra.mxu0 0.0
            %759 = vmatprep.subr.mxu0 0.0
            %760 = vmatpush1.msra.mxu0 0.0
            %761 = vmatprep.subr.mxu0 0.0
            %762 = vmatpush1.msra.mxu0 0.0
            %763 = vmatprep.subr.mxu0 0.0
            %764 = vmatpush1.msra.mxu0 0.0
            %765 = vmatprep.subr.mxu0 0.0
            %766 = vmatpush1.msra.mxu0 0.0
            %767 = vmatprep.subr.mxu0 0.0
            %768 = vmatpush1.msra.mxu0 0.0
            %769 = vmatprep.subr.mxu0 0.0
            %770 = vmatpush1.msra.mxu0 0.0
            %771 = vmatprep.subr.mxu0 0.0
            %772 = vmatpush1.msra.mxu0 0.0
            %773 = vmatprep.subr.mxu0 0.0
            %774 = vmatpush1.msra.mxu0 0.0
            %775 = vmatprep.mubr.f32.mxu0 0.0
            %v776 = vand.u32 %v624, 4294901760
            %777 = vmatmul.mubr.f32.gmra.mrb[0].mxu0 %v776
            %v778 = vpop.f32.mrb[0].mxu0
            %v779 = vadd.f32 %v703, %v778
            %v780 = vpop.f32.mrb[0].mxu0
            %781 = vdwg.mxu0
            %782 = vmatprep.subr.mxu0 0.0
            %v783 = vand.u32 %v628, 4294901760
            %v784 = vsub.f32 %v628, %v783
            %785 = vmatpush1.msra.mxu0 %v784
            %786 = vmatprep.subr.mxu0 0.0
            %787 = vmatpush1.msra.mxu0 0.0
            %788 = vmatprep.subr.mxu0 0.0
            %789 = vmatpush1.msra.mxu0 0.0
            %790 = vmatprep.subr.mxu0 0.0
            %791 = vmatpush1.msra.mxu0 0.0
            %792 = vmatprep.subr.mxu0 0.0
            %793 = vmatpush1.msra.mxu0 0.0
            %794 = vmatprep.subr.mxu0 0.0
            %795 = vmatpush1.msra.mxu0 0.0
            %796 = vmatprep.subr.mxu0 0.0
            %797 = vmatpush1.msra.mxu0 0.0
            %798 = vmatprep.subr.mxu0 0.0
            %799 = vmatpush1.msra.mxu0 0.0
            %800 = vmatprep.subr.mxu0 0.0
            %801 = vmatpush1.msra.mxu0 0.0
            %802 = vmatprep.subr.mxu0 0.0
            %803 = vmatpush1.msra.mxu0 0.0
            %804 = vmatprep.subr.mxu0 0.0
            %805 = vmatpush1.msra.mxu0 0.0
            %806 = vmatprep.subr.mxu0 0.0
            %807 = vmatpush1.msra.mxu0 0.0
            %808 = vmatprep.subr.mxu0 0.0
            %809 = vmatpush1.msra.mxu0 0.0
            %810 = vmatprep.subr.mxu0 0.0
            %811 = vmatpush1.msra.mxu0 0.0
            %812 = vmatprep.subr.mxu0 0.0
            %813 = vmatpush1.msra.mxu0 0.0
            %814 = vmatprep.subr.mxu0 0.0
            %815 = vmatpush1.msra.mxu0 0.0
            %816 = vmatprep.subr.mxu0 0.0
            %817 = vmatpush1.msra.mxu0 0.0
            %818 = vmatprep.subr.mxu0 0.0
            %819 = vmatpush1.msra.mxu0 0.0
            %820 = vmatprep.subr.mxu0 0.0
            %821 = vmatpush1.msra.mxu0 0.0
            %822 = vmatprep.subr.mxu0 0.0
            %823 = vmatpush1.msra.mxu0 0.0
            %824 = vmatprep.subr.mxu0 0.0
            %825 = vmatpush1.msra.mxu0 0.0
            %826 = vmatprep.subr.mxu0 0.0
            %827 = vmatpush1.msra.mxu0 0.0
            %828 = vmatprep.subr.mxu0 0.0
            %829 = vmatpush1.msra.mxu0 0.0
            %830 = vmatprep.subr.mxu0 0.0
            %831 = vmatpush1.msra.mxu0 0.0
            %832 = vmatprep.subr.mxu0 0.0
            %833 = vmatpush1.msra.mxu0 0.0
            %834 = vmatprep.subr.mxu0 0.0
            %835 = vmatpush1.msra.mxu0 0.0
            %836 = vmatprep.subr.mxu0 0.0
            %837 = vmatpush1.msra.mxu0 0.0
            %838 = vmatprep.subr.mxu0 0.0
            %839 = vmatpush1.msra.mxu0 0.0
            %840 = vmatprep.subr.mxu0 0.0
            %841 = vmatpush1.msra.mxu0 0.0
            %842 = vmatprep.subr.mxu0 0.0
            %843 = vmatpush1.msra.mxu0 0.0
            %844 = vmatprep.subr.mxu0 0.0
            %845 = vmatpush1.msra.mxu0 0.0
            %846 = vmatprep.subr.mxu0 0.0
            %847 = vmatpush1.msra.mxu0 0.0
            %848 = vmatprep.mubr.f32.mxu0 0.0
            %v849 = vand.u32 %v624, 4294901760
            %v850 = vsub.f32 %v624, %v849
            %851 = vmatmul.mubr.f32.gmra.mrb[0].mxu0 %v850
            %v852 = vpop.f32.mrb[0].mxu0
            %v853 = vadd.f32 %v779, %v852
            %v854 = vpop.f32.mrb[0].mxu0
            %855 = vdwg.mxu0
            %856 = vmatprep.subr.mxu0 0.0
            %v857 = vand.u32 %v628, 4294901760
            %858 = vmatpush1.msra.mxu0 %v857
            %859 = vmatprep.subr.mxu0 0.0
            %860 = vmatpush1.msra.mxu0 0.0
            %861 = vmatprep.subr.mxu0 0.0
            %862 = vmatpush1.msra.mxu0 0.0
            %863 = vmatprep.subr.mxu0 0.0
            %864 = vmatpush1.msra.mxu0 0.0
            %865 = vmatprep.subr.mxu0 0.0
            %866 = vmatpush1.msra.mxu0 0.0
            %867 = vmatprep.subr.mxu0 0.0
            %868 = vmatpush1.msra.mxu0 0.0
            %869 = vmatprep.subr.mxu0 0.0
            %870 = vmatpush1.msra.mxu0 0.0
            %871 = vmatprep.subr.mxu0 0.0
            %872 = vmatpush1.msra.mxu0 0.0
            %873 = vmatprep.subr.mxu0 0.0
            %874 = vmatpush1.msra.mxu0 0.0
            %875 = vmatprep.subr.mxu0 0.0
            %876 = vmatpush1.msra.mxu0 0.0
            %877 = vmatprep.subr.mxu0 0.0
            %878 = vmatpush1.msra.mxu0 0.0
            %879 = vmatprep.subr.mxu0 0.0
            %880 = vmatpush1.msra.mxu0 0.0
            %881 = vmatprep.subr.mxu0 0.0
            %882 = vmatpush1.msra.mxu0 0.0
            %883 = vmatprep.subr.mxu0 0.0
            %884 = vmatpush1.msra.mxu0 0.0
            %885 = vmatprep.subr.mxu0 0.0
            %886 = vmatpush1.msra.mxu0 0.0
            %887 = vmatprep.subr.mxu0 0.0
            %888 = vmatpush1.msra.mxu0 0.0
            %889 = vmatprep.subr.mxu0 0.0
            %890 = vmatpush1.msra.mxu0 0.0
            %891 = vmatprep.subr.mxu0 0.0
            %892 = vmatpush1.msra.mxu0 0.0
            %893 = vmatprep.subr.mxu0 0.0
            %894 = vmatpush1.msra.mxu0 0.0
            %895 = vmatprep.subr.mxu0 0.0
            %896 = vmatpush1.msra.mxu0 0.0
            %897 = vmatprep.subr.mxu0 0.0
            %898 = vmatpush1.msra.mxu0 0.0
            %899 = vmatprep.subr.mxu0 0.0
            %900 = vmatpush1.msra.mxu0 0.0
            %901 = vmatprep.subr.mxu0 0.0
            %902 = vmatpush1.msra.mxu0 0.0
            %903 = vmatprep.subr.mxu0 0.0
            %904 = vmatpush1.msra.mxu0 0.0
            %905 = vmatprep.subr.mxu0 0.0
            %906 = vmatpush1.msra.mxu0 0.0
            %907 = vmatprep.subr.mxu0 0.0
            %908 = vmatpush1.msra.mxu0 0.0
            %909 = vmatprep.subr.mxu0 0.0
            %910 = vmatpush1.msra.mxu0 0.0
            %911 = vmatprep.subr.mxu0 0.0
            %912 = vmatpush1.msra.mxu0 0.0
            %913 = vmatprep.subr.mxu0 0.0
            %914 = vmatpush1.msra.mxu0 0.0
            %915 = vmatprep.subr.mxu0 0.0
            %916 = vmatpush1.msra.mxu0 0.0
            %917 = vmatprep.subr.mxu0 0.0
            %918 = vmatpush1.msra.mxu0 0.0
            %919 = vmatprep.subr.mxu0 0.0
            %920 = vmatpush1.msra.mxu0 0.0
            %921 = vmatprep.mubr.f32.mxu0 0.0
            %v922 = vand.u32 %v624, 4294901760
            %v923 = vsub.f32 %v624, %v922
            %v924 = vand.u32 %v923, 4294901760
            %925 = vmatmul.mubr.f32.gmra.mrb[0].mxu0 %v924
            %v926 = vpop.f32.mrb[0].mxu0
            %v927 = vadd.f32 %v853, %v926
            %v928 = vpop.f32.mrb[0].mxu0
            %929 = vdwg.mxu0
            %930 = vmatprep.subr.mxu0 0.0
            %v931 = vand.u32 %v628, 4294901760
            %v932 = vsub.f32 %v628, %v931
            %v933 = vand.u32 %v932, 4294901760
            %934 = vmatpush1.msra.mxu0 %v933
            %935 = vmatprep.subr.mxu0 0.0
            %936 = vmatpush1.msra.mxu0 0.0
            %937 = vmatprep.subr.mxu0 0.0
            %938 = vmatpush1.msra.mxu0 0.0
            %939 = vmatprep.subr.mxu0 0.0
            %940 = vmatpush1.msra.mxu0 0.0
            %941 = vmatprep.subr.mxu0 0.0
            %942 = vmatpush1.msra.mxu0 0.0
            %943 = vmatprep.subr.mxu0 0.0
            %944 = vmatpush1.msra.mxu0 0.0
            %945 = vmatprep.subr.mxu0 0.0
            %946 = vmatpush1.msra.mxu0 0.0
            %947 = vmatprep.subr.mxu0 0.0
            %948 = vmatpush1.msra.mxu0 0.0
            %949 = vmatprep.subr.mxu0 0.0
            %950 = vmatpush1.msra.mxu0 0.0
            %951 = vmatprep.subr.mxu0 0.0
            %952 = vmatpush1.msra.mxu0 0.0
            %953 = vmatprep.subr.mxu0 0.0
            %954 = vmatpush1.msra.mxu0 0.0
            %955 = vmatprep.subr.mxu0 0.0
            %956 = vmatpush1.msra.mxu0 0.0
            %957 = vmatprep.subr.mxu0 0.0
            %958 = vmatpush1.msra.mxu0 0.0
            %959 = vmatprep.subr.mxu0 0.0
            %960 = vmatpush1.msra.mxu0 0.0
            %961 = vmatprep.subr.mxu0 0.0
            %962 = vmatpush1.msra.mxu0 0.0
            %963 = vmatprep.subr.mxu0 0.0
            %964 = vmatpush1.msra.mxu0 0.0
            %965 = vmatprep.subr.mxu0 0.0
            %966 = vmatpush1.msra.mxu0 0.0
            %967 = vmatprep.subr.mxu0 0.0
            %968 = vmatpush1.msra.mxu0 0.0
            %969 = vmatprep.subr.mxu0 0.0
            %970 = vmatpush1.msra.mxu0 0.0
            %971 = vmatprep.subr.mxu0 0.0
            %972 = vmatpush1.msra.mxu0 0.0
            %973 = vmatprep.subr.mxu0 0.0
            %974 = vmatpush1.msra.mxu0 0.0
            %975 = vmatprep.subr.mxu0 0.0
            %976 = vmatpush1.msra.mxu0 0.0
            %977 = vmatprep.subr.mxu0 0.0
            %978 = vmatpush1.msra.mxu0 0.0
            %979 = vmatprep.subr.mxu0 0.0
            %980 = vmatpush1.msra.mxu0 0.0
            %981 = vmatprep.subr.mxu0 0.0
            %982 = vmatpush1.msra.mxu0 0.0
            %983 = vmatprep.subr.mxu0 0.0
            %984 = vmatpush1.msra.mxu0 0.0
            %985 = vmatprep.subr.mxu0 0.0
            %986 = vmatpush1.msra.mxu0 0.0
            %987 = vmatprep.subr.mxu0 0.0
            %988 = vmatpush1.msra.mxu0 0.0
            %989 = vmatprep.subr.mxu0 0.0
            %990 = vmatpush1.msra.mxu0 0.0
            %991 = vmatprep.subr.mxu0 0.0
            %992 = vmatpush1.msra.mxu0 0.0
            %993 = vmatprep.subr.mxu0 0.0
            %994 = vmatpush1.msra.mxu0 0.0
            %995 = vmatprep.subr.mxu0 0.0
            %996 = vmatpush1.msra.mxu0 0.0
            %997 = vmatprep.mubr.f32.mxu0 0.0
            %v998 = vand.u32 %v624, 4294901760
            %999 = vmatmul.mubr.f32.gmra.mrb[0].mxu0 %v998
            %v1000 = vpop.f32.mrb[0].mxu0
            %v1001 = vadd.f32 %v927, %v1000
            %v1002 = vpop.f32.mrb[0].mxu0
            %1003 = vdwg.mxu0
            %1004 = vmatprep.subr.mxu0 0.0
            %v1005 = vand.u32 %v628, 4294901760
            %1006 = vmatpush1.msra.mxu0 %v1005
            %1007 = vmatprep.subr.mxu0 0.0
            %1008 = vmatpush1.msra.mxu0 0.0
            %1009 = vmatprep.subr.mxu0 0.0
            %1010 = vmatpush1.msra.mxu0 0.0
            %1011 = vmatprep.subr.mxu0 0.0
            %1012 = vmatpush1.msra.mxu0 0.0
            %1013 = vmatprep.subr.mxu0 0.0
            %1014 = vmatpush1.msra.mxu0 0.0
            %1015 = vmatprep.subr.mxu0 0.0
            %1016 = vmatpush1.msra.mxu0 0.0
            %1017 = vmatprep.subr.mxu0 0.0
            %1018 = vmatpush1.msra.mxu0 0.0
            %1019 = vmatprep.subr.mxu0 0.0
            %1020 = vmatpush1.msra.mxu0 0.0
            %1021 = vmatprep.subr.mxu0 0.0
            %1022 = vmatpush1.msra.mxu0 0.0
            %1023 = vmatprep.subr.mxu0 0.0
            %1024 = vmatpush1.msra.mxu0 0.0
            %1025 = vmatprep.subr.mxu0 0.0
            %1026 = vmatpush1.msra.mxu0 0.0
            %1027 = vmatprep.subr.mxu0 0.0
            %1028 = vmatpush1.msra.mxu0 0.0
            %1029 = vmatprep.subr.mxu0 0.0
            %1030 = vmatpush1.msra.mxu0 0.0
            %1031 = vmatprep.subr.mxu0 0.0
            %1032 = vmatpush1.msra.mxu0 0.0
            %1033 = vmatprep.subr.mxu0 0.0
            %1034 = vmatpush1.msra.mxu0 0.0
            %1035 = vmatprep.subr.mxu0 0.0
            %1036 = vmatpush1.msra.mxu0 0.0
            %1037 = vmatprep.subr.mxu0 0.0
            %1038 = vmatpush1.msra.mxu0 0.0
            %1039 = vmatprep.subr.mxu0 0.0
            %1040 = vmatpush1.msra.mxu0 0.0
            %1041 = vmatprep.subr.mxu0 0.0
            %1042 = vmatpush1.msra.mxu0 0.0
            %1043 = vmatprep.subr.mxu0 0.0
            %1044 = vmatpush1.msra.mxu0 0.0
            %1045 = vmatprep.subr.mxu0 0.0
            %1046 = vmatpush1.msra.mxu0 0.0
            %1047 = vmatprep.subr.mxu0 0.0
            %1048 = vmatpush1.msra.mxu0 0.0
            %1049 = vmatprep.subr.mxu0 0.0
            %1050 = vmatpush1.msra.mxu0 0.0
            %1051 = vmatprep.subr.mxu0 0.0
            %1052 = vmatpush1.msra.mxu0 0.0
            %1053 = vmatprep.subr.mxu0 0.0
            %1054 = vmatpush1.msra.mxu0 0.0
            %1055 = vmatprep.subr.mxu0 0.0
            %1056 = vmatpush1.msra.mxu0 0.0
            %1057 = vmatprep.subr.mxu0 0.0
            %1058 = vmatpush1.msra.mxu0 0.0
            %1059 = vmatprep.subr.mxu0 0.0
            %1060 = vmatpush1.msra.mxu0 0.0
            %1061 = vmatprep.subr.mxu0 0.0
            %1062 = vmatpush1.msra.mxu0 0.0
            %1063 = vmatprep.subr.mxu0 0.0
            %1064 = vmatpush1.msra.mxu0 0.0
            %1065 = vmatprep.subr.mxu0 0.0
            %1066 = vmatpush1.msra.mxu0 0.0
            %1067 = vmatprep.subr.mxu0 0.0
            %1068 = vmatpush1.msra.mxu0 0.0
            %1069 = vmatprep.mubr.f32.mxu0 0.0
            %v1070 = vand.u32 %v624, 4294901760
            %1071 = vmatmul.mubr.f32.gmra.mrb[0].mxu0 %v1070
            %v1072 = vpop.f32.mrb[0].mxu0
            %v1073 = vadd.f32 %v1001, %v1072
            %v1074 = vpop.f32.mrb[0].mxu0
            %1075 = vdwg.mxu0
            %v1077 = vsel %vm622, %v610, 0
            %v1080 = vsel %vm622, %v611, 0
            %v1083 = vsel %vm626, %v1073, 0
            %1085 = vmatprep.subr.mxu0 0.0
            %v1086 = vand.u32 %v1083, 4294901760
            %1087 = vmatpush1.msra.mxu0 %v1086
            %1088 = vmatprep.subr.mxu0 0.0
            %1089 = vmatpush1.msra.mxu0 0.0
            %1090 = vmatprep.subr.mxu0 0.0
            %1091 = vmatpush1.msra.mxu0 0.0
            %1092 = vmatprep.subr.mxu0 0.0
            %1093 = vmatpush1.msra.mxu0 0.0
            %1094 = vmatprep.subr.mxu0 0.0
            %1095 = vmatpush1.msra.mxu0 0.0
            %1096 = vmatprep.subr.mxu0 0.0
            %1097 = vmatpush1.msra.mxu0 0.0
            %1098 = vmatprep.subr.mxu0 0.0
            %1099 = vmatpush1.msra.mxu0 0.0
            %1100 = vmatprep.subr.mxu0 0.0
            %1101 = vmatpush1.msra.mxu0 0.0
            %1102 = vmatprep.subr.mxu0 0.0
            %1103 = vmatpush1.msra.mxu0 0.0
            %1104 = vmatprep.subr.mxu0 0.0
            %1105 = vmatpush1.msra.mxu0 0.0
            %1106 = vmatprep.subr.mxu0 0.0
            %1107 = vmatpush1.msra.mxu0 0.0
            %1108 = vmatprep.subr.mxu0 0.0
            %1109 = vmatpush1.msra.mxu0 0.0
            %1110 = vmatprep.subr.mxu0 0.0
            %1111 = vmatpush1.msra.mxu0 0.0
            %1112 = vmatprep.subr.mxu0 0.0
            %1113 = vmatpush1.msra.mxu0 0.0
            %1114 = vmatprep.subr.mxu0 0.0
            %1115 = vmatpush1.msra.mxu0 0.0
            %1116 = vmatprep.subr.mxu0 0.0
            %1117 = vmatpush1.msra.mxu0 0.0
            %1118 = vmatprep.subr.mxu0 0.0
            %1119 = vmatpush1.msra.mxu0 0.0
            %1120 = vmatprep.subr.mxu0 0.0
            %1121 = vmatpush1.msra.mxu0 0.0
            %1122 = vmatprep.subr.mxu0 0.0
            %1123 = vmatpush1.msra.mxu0 0.0
            %1124 = vmatprep.subr.mxu0 0.0
            %1125 = vmatpush1.msra.mxu0 0.0
            %1126 = vmatprep.subr.mxu0 0.0
            %1127 = vmatpush1.msra.mxu0 0.0
            %1128 = vmatprep.subr.mxu0 0.0
            %1129 = vmatpush1.msra.mxu0 0.0
            %1130 = vmatprep.subr.mxu0 0.0
            %1131 = vmatpush1.msra.mxu0 0.0
            %1132 = vmatprep.subr.mxu0 0.0
            %1133 = vmatpush1.msra.mxu0 0.0
            %1134 = vmatprep.subr.mxu0 0.0
            %1135 = vmatpush1.msra.mxu0 0.0
            %1136 = vmatprep.subr.mxu0 0.0
            %1137 = vmatpush1.msra.mxu0 0.0
            %1138 = vmatprep.subr.mxu0 0.0
            %1139 = vmatpush1.msra.mxu0 0.0
            %1140 = vmatprep.subr.mxu0 0.0
            %1141 = vmatpush1.msra.mxu0 0.0
            %1142 = vmatprep.subr.mxu0 0.0
            %1143 = vmatpush1.msra.mxu0 0.0
            %1144 = vmatprep.subr.mxu0 0.0
            %1145 = vmatpush1.msra.mxu0 0.0
            %1146 = vmatprep.subr.mxu0 0.0
            %1147 = vmatpush1.msra.mxu0 0.0
            %1148 = vmatprep.subr.mxu0 0.0
            %1149 = vmatpush1.msra.mxu0 0.0
            %1150 = vmatprep.mubr.f32.mxu0 0.0
            %v1151 = vand.u32 %v1077, 4294901760
            %v1152 = vsub.f32 %v1077, %v1151
            %v1153 = vand.u32 %v1152, 4294901760
            %v1154 = vsub.f32 %v1152, %v1153
            %v1155 = vand.u32 %v1154, 4294901760
            %1156 = vmatmul.mubr.f32.gmra.mrb[0].mxu0 %v1155
            %v1157 = vpop.f32.mrb[0].mxu0
            %v1158 = vadd.f32 0.0, %v1157
            %v1159 = vpop.f32.mrb[0].mxu0
            %1160 = vmatprep.mubr.f32.mxu0 0.0
            %v1161 = vand.u32 %v1080, 4294901760
            %v1162 = vsub.f32 %v1080, %v1161
            %v1163 = vand.u32 %v1162, 4294901760
            %v1164 = vsub.f32 %v1162, %v1163
            %v1165 = vand.u32 %v1164, 4294901760
            %1166 = vmatmul.mubr.f32.gmra.mrb[0].mxu0 %v1165
            %v1167 = vpop.f32.mrb[0].mxu0
            %v1168 = vadd.f32 0.0, %v1167
            %v1169 = vpop.f32.mrb[0].mxu0
            %1170 = vdwg.mxu0
            %1171 = vmatprep.subr.mxu0 0.0
            %v1172 = vand.u32 %v1083, 4294901760
            %v1173 = vsub.f32 %v1083, %v1172
            %v1174 = vand.u32 %v1173, 4294901760
            %v1175 = vsub.f32 %v1173, %v1174
            %v1176 = vand.u32 %v1175, 4294901760
            %1177 = vmatpush1.msra.mxu0 %v1176
            %1178 = vmatprep.subr.mxu0 0.0
            %1179 = vmatpush1.msra.mxu0 0.0
            %1180 = vmatprep.subr.mxu0 0.0
            %1181 = vmatpush1.msra.mxu0 0.0
            %1182 = vmatprep.subr.mxu0 0.0
            %1183 = vmatpush1.msra.mxu0 0.0
            %1184 = vmatprep.subr.mxu0 0.0
            %1185 = vmatpush1.msra.mxu0 0.0
            %1186 = vmatprep.subr.mxu0 0.0
            %1187 = vmatpush1.msra.mxu0 0.0
            %1188 = vmatprep.subr.mxu0 0.0
            %1189 = vmatpush1.msra.mxu0 0.0
            %1190 = vmatprep.subr.mxu0 0.0
            %1191 = vmatpush1.msra.mxu0 0.0
            %1192 = vmatprep.subr.mxu0 0.0
            %1193 = vmatpush1.msra.mxu0 0.0
            %1194 = vmatprep.subr.mxu0 0.0
            %1195 = vmatpush1.msra.mxu0 0.0
            %1196 = vmatprep.subr.mxu0 0.0
            %1197 = vmatpush1.msra.mxu0 0.0
            %1198 = vmatprep.subr.mxu0 0.0
            %1199 = vmatpush1.msra.mxu0 0.0
            %1200 = vmatprep.subr.mxu0 0.0
            %1201 = vmatpush1.msra.mxu0 0.0
            %1202 = vmatprep.subr.mxu0 0.0
            %1203 = vmatpush1.msra.mxu0 0.0
            %1204 = vmatprep.subr.mxu0 0.0
            %1205 = vmatpush1.msra.mxu0 0.0
            %1206 = vmatprep.subr.mxu0 0.0
            %1207 = vmatpush1.msra.mxu0 0.0
            %1208 = vmatprep.subr.mxu0 0.0
            %1209 = vmatpush1.msra.mxu0 0.0
            %1210 = vmatprep.subr.mxu0 0.0
            %1211 = vmatpush1.msra.mxu0 0.0
            %1212 = vmatprep.subr.mxu0 0.0
            %1213 = vmatpush1.msra.mxu0 0.0
            %1214 = vmatprep.subr.mxu0 0.0
            %1215 = vmatpush1.msra.mxu0 0.0
            %1216 = vmatprep.subr.mxu0 0.0
            %1217 = vmatpush1.msra.mxu0 0.0
            %1218 = vmatprep.subr.mxu0 0.0
            %1219 = vmatpush1.msra.mxu0 0.0
            %1220 = vmatprep.subr.mxu0 0.0
            %1221 = vmatpush1.msra.mxu0 0.0
            %1222 = vmatprep.subr.mxu0 0.0
            %1223 = vmatpush1.msra.mxu0 0.0
            %1224 = vmatprep.subr.mxu0 0.0
            %1225 = vmatpush1.msra.mxu0 0.0
            %1226 = vmatprep.subr.mxu0 0.0
            %1227 = vmatpush1.msra.mxu0 0.0
            %1228 = vmatprep.subr.mxu0 0.0
            %1229 = vmatpush1.msra.mxu0 0.0
            %1230 = vmatprep.subr.mxu0 0.0
            %1231 = vmatpush1.msra.mxu0 0.0
            %1232 = vmatprep.subr.mxu0 0.0
            %1233 = vmatpush1.msra.mxu0 0.0
            %1234 = vmatprep.subr.mxu0 0.0
            %1235 = vmatpush1.msra.mxu0 0.0
            %1236 = vmatprep.subr.mxu0 0.0
            %1237 = vmatpush1.msra.mxu0 0.0
            %1238 = vmatprep.subr.mxu0 0.0
            %1239 = vmatpush1.msra.mxu0 0.0
            %1240 = vmatprep.mubr.f32.mxu0 0.0
            %v1241 = vand.u32 %v1077, 4294901760
            %1242 = vmatmul.mubr.f32.gmra.mrb[0].mxu0 %v1241
            %v1243 = vpop.f32.mrb[0].mxu0
            %v1244 = vadd.f32 %v1158, %v1243
            %v1245 = vpop.f32.mrb[0].mxu0
            %1246 = vmatprep.mubr.f32.mxu0 0.0
            %v1247 = vand.u32 %v1080, 4294901760
            %1248 = vmatmul.mubr.f32.gmra.mrb[0].mxu0 %v1247
            %v1249 = vpop.f32.mrb[0].mxu0
            %v1250 = vadd.f32 %v1168, %v1249
            %v1251 = vpop.f32.mrb[0].mxu0
            %1252 = vdwg.mxu0
            %1253 = vmatprep.subr.mxu0 0.0
            %v1254 = vand.u32 %v1083, 4294901760
            %v1255 = vsub.f32 %v1083, %v1254
            %1256 = vmatpush1.msra.mxu0 %v1255
            %1257 = vmatprep.subr.mxu0 0.0
            %1258 = vmatpush1.msra.mxu0 0.0
            %1259 = vmatprep.subr.mxu0 0.0
            %1260 = vmatpush1.msra.mxu0 0.0
            %1261 = vmatprep.subr.mxu0 0.0
            %1262 = vmatpush1.msra.mxu0 0.0
            %1263 = vmatprep.subr.mxu0 0.0
            %1264 = vmatpush1.msra.mxu0 0.0
            %1265 = vmatprep.subr.mxu0 0.0
            %1266 = vmatpush1.msra.mxu0 0.0
            %1267 = vmatprep.subr.mxu0 0.0
            %1268 = vmatpush1.msra.mxu0 0.0
            %1269 = vmatprep.subr.mxu0 0.0
            %1270 = vmatpush1.msra.mxu0 0.0
            %1271 = vmatprep.subr.mxu0 0.0
            %1272 = vmatpush1.msra.mxu0 0.0
            %1273 = vmatprep.subr.mxu0 0.0
            %1274 = vmatpush1.msra.mxu0 0.0
            %1275 = vmatprep.subr.mxu0 0.0
            %1276 = vmatpush1.msra.mxu0 0.0
            %1277 = vmatprep.subr.mxu0 0.0
            %1278 = vmatpush1.msra.mxu0 0.0
            %1279 = vmatprep.subr.mxu0 0.0
            %1280 = vmatpush1.msra.mxu0 0.0
            %1281 = vmatprep.subr.mxu0 0.0
            %1282 = vmatpush1.msra.mxu0 0.0
            %1283 = vmatprep.subr.mxu0 0.0
            %1284 = vmatpush1.msra.mxu0 0.0
            %1285 = vmatprep.subr.mxu0 0.0
            %1286 = vmatpush1.msra.mxu0 0.0
            %1287 = vmatprep.subr.mxu0 0.0
            %1288 = vmatpush1.msra.mxu0 0.0
            %1289 = vmatprep.subr.mxu0 0.0
            %1290 = vmatpush1.msra.mxu0 0.0
            %1291 = vmatprep.subr.mxu0 0.0
            %1292 = vmatpush1.msra.mxu0 0.0
            %1293 = vmatprep.subr.mxu0 0.0
            %1294 = vmatpush1.msra.mxu0 0.0
            %1295 = vmatprep.subr.mxu0 0.0
            %1296 = vmatpush1.msra.mxu0 0.0
            %1297 = vmatprep.subr.mxu0 0.0
            %1298 = vmatpush1.msra.mxu0 0.0
            %1299 = vmatprep.subr.mxu0 0.0
            %1300 = vmatpush1.msra.mxu0 0.0
            %1301 = vmatprep.subr.mxu0 0.0
            %1302 = vmatpush1.msra.mxu0 0.0
            %1303 = vmatprep.subr.mxu0 0.0
            %1304 = vmatpush1.msra.mxu0 0.0
            %1305 = vmatprep.subr.mxu0 0.0
            %1306 = vmatpush1.msra.mxu0 0.0
            %1307 = vmatprep.subr.mxu0 0.0
            %1308 = vmatpush1.msra.mxu0 0.0
            %1309 = vmatprep.subr.mxu0 0.0
            %1310 = vmatpush1.msra.mxu0 0.0
            %1311 = vmatprep.subr.mxu0 0.0
            %1312 = vmatpush1.msra.mxu0 0.0
            %1313 = vmatprep.subr.mxu0 0.0
            %1314 = vmatpush1.msra.mxu0 0.0
            %1315 = vmatprep.subr.mxu0 0.0
            %1316 = vmatpush1.msra.mxu0 0.0
            %1317 = vmatprep.subr.mxu0 0.0
            %1318 = vmatpush1.msra.mxu0 0.0
            %1319 = vmatprep.mubr.f32.mxu0 0.0
            %v1320 = vand.u32 %v1077, 4294901760
            %v1321 = vsub.f32 %v1077, %v1320
            %1322 = vmatmul.mubr.f32.gmra.mrb[0].mxu0 %v1321
            %v1323 = vpop.f32.mrb[0].mxu0
            %v1324 = vadd.f32 %v1244, %v1323
            %v1325 = vpop.f32.mrb[0].mxu0
            %1326 = vmatprep.mubr.f32.mxu0 0.0
            %v1327 = vand.u32 %v1080, 4294901760
            %v1328 = vsub.f32 %v1080, %v1327
            %1329 = vmatmul.mubr.f32.gmra.mrb[0].mxu0 %v1328
            %v1330 = vpop.f32.mrb[0].mxu0
            %v1331 = vadd.f32 %v1250, %v1330
            %v1332 = vpop.f32.mrb[0].mxu0
            %1333 = vdwg.mxu0
            %1334 = vmatprep.subr.mxu0 0.0
            %v1335 = vand.u32 %v1083, 4294901760
            %1336 = vmatpush1.msra.mxu0 %v1335
            %1337 = vmatprep.subr.mxu0 0.0
            %1338 = vmatpush1.msra.mxu0 0.0
            %1339 = vmatprep.subr.mxu0 0.0
            %1340 = vmatpush1.msra.mxu0 0.0
            %1341 = vmatprep.subr.mxu0 0.0
            %1342 = vmatpush1.msra.mxu0 0.0
            %1343 = vmatprep.subr.mxu0 0.0
            %1344 = vmatpush1.msra.mxu0 0.0
            %1345 = vmatprep.subr.mxu0 0.0
            %1346 = vmatpush1.msra.mxu0 0.0
            %1347 = vmatprep.subr.mxu0 0.0
            %1348 = vmatpush1.msra.mxu0 0.0
            %1349 = vmatprep.subr.mxu0 0.0
            %1350 = vmatpush1.msra.mxu0 0.0
            %1351 = vmatprep.subr.mxu0 0.0
            %1352 = vmatpush1.msra.mxu0 0.0
            %1353 = vmatprep.subr.mxu0 0.0
            %1354 = vmatpush1.msra.mxu0 0.0
            %1355 = vmatprep.subr.mxu0 0.0
            %1356 = vmatpush1.msra.mxu0 0.0
            %1357 = vmatprep.subr.mxu0 0.0
            %1358 = vmatpush1.msra.mxu0 0.0
            %1359 = vmatprep.subr.mxu0 0.0
            %1360 = vmatpush1.msra.mxu0 0.0
            %1361 = vmatprep.subr.mxu0 0.0
            %1362 = vmatpush1.msra.mxu0 0.0
            %1363 = vmatprep.subr.mxu0 0.0
            %1364 = vmatpush1.msra.mxu0 0.0
            %1365 = vmatprep.subr.mxu0 0.0
            %1366 = vmatpush1.msra.mxu0 0.0
            %1367 = vmatprep.subr.mxu0 0.0
            %1368 = vmatpush1.msra.mxu0 0.0
            %1369 = vmatprep.subr.mxu0 0.0
            %1370 = vmatpush1.msra.mxu0 0.0
            %1371 = vmatprep.subr.mxu0 0.0
            %1372 = vmatpush1.msra.mxu0 0.0
            %1373 = vmatprep.subr.mxu0 0.0
            %1374 = vmatpush1.msra.mxu0 0.0
            %1375 = vmatprep.subr.mxu0 0.0
            %1376 = vmatpush1.msra.mxu0 0.0
            %1377 = vmatprep.subr.mxu0 0.0
            %1378 = vmatpush1.msra.mxu0 0.0
            %1379 = vmatprep.subr.mxu0 0.0
            %1380 = vmatpush1.msra.mxu0 0.0
            %1381 = vmatprep.subr.mxu0 0.0
            %1382 = vmatpush1.msra.mxu0 0.0
            %1383 = vmatprep.subr.mxu0 0.0
            %1384 = vmatpush1.msra.mxu0 0.0
            %1385 = vmatprep.subr.mxu0 0.0
            %1386 = vmatpush1.msra.mxu0 0.0
            %1387 = vmatprep.subr.mxu0 0.0
            %1388 = vmatpush1.msra.mxu0 0.0
            %1389 = vmatprep.subr.mxu0 0.0
            %1390 = vmatpush1.msra.mxu0 0.0
            %1391 = vmatprep.subr.mxu0 0.0
            %1392 = vmatpush1.msra.mxu0 0.0
            %1393 = vmatprep.subr.mxu0 0.0
            %1394 = vmatpush1.msra.mxu0 0.0
            %1395 = vmatprep.subr.mxu0 0.0
            %1396 = vmatpush1.msra.mxu0 0.0
            %1397 = vmatprep.subr.mxu0 0.0
            %1398 = vmatpush1.msra.mxu0 0.0
            %1399 = vmatprep.mubr.f32.mxu0 0.0
            %v1400 = vand.u32 %v1077, 4294901760
            %v1401 = vsub.f32 %v1077, %v1400
            %v1402 = vand.u32 %v1401, 4294901760
            %1403 = vmatmul.mubr.f32.gmra.mrb[0].mxu0 %v1402
            %v1404 = vpop.f32.mrb[0].mxu0
            %v1405 = vadd.f32 %v1324, %v1404
            %v1406 = vpop.f32.mrb[0].mxu0
            %1407 = vmatprep.mubr.f32.mxu0 0.0
            %v1408 = vand.u32 %v1080, 4294901760
            %v1409 = vsub.f32 %v1080, %v1408
            %v1410 = vand.u32 %v1409, 4294901760
            %1411 = vmatmul.mubr.f32.gmra.mrb[0].mxu0 %v1410
            %v1412 = vpop.f32.mrb[0].mxu0
            %v1413 = vadd.f32 %v1331, %v1412
            %v1414 = vpop.f32.mrb[0].mxu0
            %1415 = vdwg.mxu0
            %1416 = vmatprep.subr.mxu0 0.0
            %v1417 = vand.u32 %v1083, 4294901760
            %v1418 = vsub.f32 %v1083, %v1417
            %v1419 = vand.u32 %v1418, 4294901760
            %1420 = vmatpush1.msra.mxu0 %v1419
            %1421 = vmatprep.subr.mxu0 0.0
            %1422 = vmatpush1.msra.mxu0 0.0
            %1423 = vmatprep.subr.mxu0 0.0
            %1424 = vmatpush1.msra.mxu0 0.0
            %1425 = vmatprep.subr.mxu0 0.0
            %1426 = vmatpush1.msra.mxu0 0.0
            %1427 = vmatprep.subr.mxu0 0.0
            %1428 = vmatpush1.msra.mxu0 0.0
            %1429 = vmatprep.subr.mxu0 0.0
            %1430 = vmatpush1.msra.mxu0 0.0
            %1431 = vmatprep.subr.mxu0 0.0
            %1432 = vmatpush1.msra.mxu0 0.0
            %1433 = vmatprep.subr.mxu0 0.0
            %1434 = vmatpush1.msra.mxu0 0.0
            %1435 = vmatprep.subr.mxu0 0.0
            %1436 = vmatpush1.msra.mxu0 0.0
            %1437 = vmatprep.subr.mxu0 0.0
            %1438 = vmatpush1.msra.mxu0 0.0
            %1439 = vmatprep.subr.mxu0 0.0
            %1440 = vmatpush1.msra.mxu0 0.0
            %1441 = vmatprep.subr.mxu0 0.0
            %1442 = vmatpush1.msra.mxu0 0.0
            %1443 = vmatprep.subr.mxu0 0.0
            %1444 = vmatpush1.msra.mxu0 0.0
            %1445 = vmatprep.subr.mxu0 0.0
            %1446 = vmatpush1.msra.mxu0 0.0
            %1447 = vmatprep.subr.mxu0 0.0
            %1448 = vmatpush1.msra.mxu0 0.0
            %1449 = vmatprep.subr.mxu0 0.0
            %1450 = vmatpush1.msra.mxu0 0.0
            %1451 = vmatprep.subr.mxu0 0.0
            %1452 = vmatpush1.msra.mxu0 0.0
            %1453 = vmatprep.subr.mxu0 0.0
            %1454 = vmatpush1.msra.mxu0 0.0
            %1455 = vmatprep.subr.mxu0 0.0
            %1456 = vmatpush1.msra.mxu0 0.0
            %1457 = vmatprep.subr.mxu0 0.0
            %1458 = vmatpush1.msra.mxu0 0.0
            %1459 = vmatprep.subr.mxu0 0.0
            %1460 = vmatpush1.msra.mxu0 0.0
            %1461 = vmatprep.subr.mxu0 0.0
            %1462 = vmatpush1.msra.mxu0 0.0
            %1463 = vmatprep.subr.mxu0 0.0
            %1464 = vmatpush1.msra.mxu0 0.0
            %1465 = vmatprep.subr.mxu0 0.0
            %1466 = vmatpush1.msra.mxu0 0.0
            %1467 = vmatprep.subr.mxu0 0.0
            %1468 = vmatpush1.msra.mxu0 0.0
            %1469 = vmatprep.subr.mxu0 0.0
            %1470 = vmatpush1.msra.mxu0 0.0
            %1471 = vmatprep.subr.mxu0 0.0
            %1472 = vmatpush1.msra.mxu0 0.0
            %1473 = vmatprep.subr.mxu0 0.0
            %1474 = vmatpush1.msra.mxu0 0.0
            %1475 = vmatprep.subr.mxu0 0.0
            %1476 = vmatpush1.msra.mxu0 0.0
            %1477 = vmatprep.subr.mxu0 0.0
            %1478 = vmatpush1.msra.mxu0 0.0
            %1479 = vmatprep.subr.mxu0 0.0
            %1480 = vmatpush1.msra.mxu0 0.0
            %1481 = vmatprep.subr.mxu0 0.0
            %1482 = vmatpush1.msra.mxu0 0.0
            %1483 = vmatprep.mubr.f32.mxu0 0.0
            %v1484 = vand.u32 %v1077, 4294901760
            %1485 = vmatmul.mubr.f32.gmra.mrb[0].mxu0 %v1484
            %v1486 = vpop.f32.mrb[0].mxu0
            %v1487 = vadd.f32 %v1405, %v1486
            %v1488 = vpop.f32.mrb[0].mxu0
            %1489 = vmatprep.mubr.f32.mxu0 0.0
            %v1490 = vand.u32 %v1080, 4294901760
            %1491 = vmatmul.mubr.f32.gmra.mrb[0].mxu0 %v1490
            %v1492 = vpop.f32.mrb[0].mxu0
            %v1493 = vadd.f32 %v1413, %v1492
            %v1494 = vpop.f32.mrb[0].mxu0
            %1495 = vdwg.mxu0
            %1496 = vmatprep.subr.mxu0 0.0
            %v1497 = vand.u32 %v1083, 4294901760
            %1498 = vmatpush1.msra.mxu0 %v1497
            %1499 = vmatprep.subr.mxu0 0.0
            %1500 = vmatpush1.msra.mxu0 0.0
            %1501 = vmatprep.subr.mxu0 0.0
            %1502 = vmatpush1.msra.mxu0 0.0
            %1503 = vmatprep.subr.mxu0 0.0
            %1504 = vmatpush1.msra.mxu0 0.0
            %1505 = vmatprep.subr.mxu0 0.0
            %1506 = vmatpush1.msra.mxu0 0.0
            %1507 = vmatprep.subr.mxu0 0.0
            %1508 = vmatpush1.msra.mxu0 0.0
            %1509 = vmatprep.subr.mxu0 0.0
            %1510 = vmatpush1.msra.mxu0 0.0
            %1511 = vmatprep.subr.mxu0 0.0
            %1512 = vmatpush1.msra.mxu0 0.0
            %1513 = vmatprep.subr.mxu0 0.0
            %1514 = vmatpush1.msra.mxu0 0.0
            %1515 = vmatprep.subr.mxu0 0.0
            %1516 = vmatpush1.msra.mxu0 0.0
            %1517 = vmatprep.subr.mxu0 0.0
            %1518 = vmatpush1.msra.mxu0 0.0
            %1519 = vmatprep.subr.mxu0 0.0
            %1520 = vmatpush1.msra.mxu0 0.0
            %1521 = vmatprep.subr.mxu0 0.0
            %1522 = vmatpush1.msra.mxu0 0.0
            %1523 = vmatprep.subr.mxu0 0.0
            %1524 = vmatpush1.msra.mxu0 0.0
            %1525 = vmatprep.subr.mxu0 0.0
            %1526 = vmatpush1.msra.mxu0 0.0
            %1527 = vmatprep.subr.mxu0 0.0
            %1528 = vmatpush1.msra.mxu0 0.0
            %1529 = vmatprep.subr.mxu0 0.0
            %1530 = vmatpush1.msra.mxu0 0.0
            %1531 = vmatprep.subr.mxu0 0.0
            %1532 = vmatpush1.msra.mxu0 0.0
            %1533 = vmatprep.subr.mxu0 0.0
            %1534 = vmatpush1.msra.mxu0 0.0
            %1535 = vmatprep.subr.mxu0 0.0
            %1536 = vmatpush1.msra.mxu0 0.0
            %1537 = vmatprep.subr.mxu0 0.0
            %1538 = vmatpush1.msra.mxu0 0.0
            %1539 = vmatprep.subr.mxu0 0.0
            %1540 = vmatpush1.msra.mxu0 0.0
            %1541 = vmatprep.subr.mxu0 0.0
            %1542 = vmatpush1.msra.mxu0 0.0
            %1543 = vmatprep.subr.mxu0 0.0
            %1544 = vmatpush1.msra.mxu0 0.0
            %1545 = vmatprep.subr.mxu0 0.0
            %1546 = vmatpush1.msra.mxu0 0.0
            %1547 = vmatprep.subr.mxu0 0.0
            %1548 = vmatpush1.msra.mxu0 0.0
            %1549 = vmatprep.subr.mxu0 0.0
            %1550 = vmatpush1.msra.mxu0 0.0
            %1551 = vmatprep.subr.mxu0 0.0
            %1552 = vmatpush1.msra.mxu0 0.0
            %1553 = vmatprep.subr.mxu0 0.0
            %1554 = vmatpush1.msra.mxu0 0.0
            %1555 = vmatprep.subr.mxu0 0.0
            %1556 = vmatpush1.msra.mxu0 0.0
            %1557 = vmatprep.subr.mxu0 0.0
            %1558 = vmatpush1.msra.mxu0 0.0
            %1559 = vmatprep.subr.mxu0 0.0
            %1560 = vmatpush1.msra.mxu0 0.0
            %1561 = vmatprep.mubr.f32.mxu0 0.0
            %v1562 = vand.u32 %v1077, 4294901760
            %1563 = vmatmul.mubr.f32.gmra.mrb[0].mxu0 %v1562
            %v1564 = vpop.f32.mrb[0].mxu0
            %v1565 = vadd.f32 %v1487, %v1564
            %v1566 = vpop.f32.mrb[0].mxu0
            %1567 = vmatprep.mubr.f32.mxu0 0.0
            %v1568 = vand.u32 %v1080, 4294901760
            %1569 = vmatmul.mubr.f32.gmra.mrb[0].mxu0 %v1568
            %v1570 = vpop.f32.mrb[0].mxu0
            %v1571 = vadd.f32 %v1493, %v1570
            %v1572 = vpop.f32.mrb[0].mxu0
            %1573 = vdwg.mxu0
            %s1574 = smul.u32 %s614, 16
            %s1575 = scalar_lea.vmem %s557, %s1574 [#allocation11]
            %vm1576 = vcmask 130048
            %1577 = vst.msk [vmem:[%s1575] sm:$0xff] %vm1576, %v1565
            %1578 = vst.msk [vmem:[%s1575 + $0x8] sm:$0xff] %vm1576, %v1571
          $region89: #{ffm_forward.1} parent=83 // loop_footer
            %s618 = sadd.s32 1, %s614
          $region90: #{ffm_forward.1} parent=83 // loop_footer_branch
            %613 = sbr.rel target = $region86
          $region91: #{ffm_forward.1} parent=83 // loop_exit
            _
        $region84: #{ffm_forward.1} parent=59 // pred_fallthru
          _
        %p1579 = scmp.eq.s32.totalorder %s38, 2
        // Predicated region
        $region92: #{ffm_forward.1} parent=59 // pred_check
          %p1580 = pneg %p1579
        $region93: #{ffm_forward.1} parent=59 // pred_check_branch
          %1582 = sbr.rel (%p1580) target = $region95
        $region94: #{ffm_forward.1} parent=59 // pred_region
          %v1583 = vld [vmem:[%s6] sm:$0xff]
          %v1584 = vld [vmem:[%s6 + $0x8] sm:$0xff]
          %v1585 = vld [vmem:[%s7] sm:$0xf]
          loop: start=0, step=1, limit=4
          $region96: #{ffm_forward.1} parent=94 // loop_pre_header
            _
          $region97: #{ffm_forward.1} parent=94 // loop_header
            %s1587 = sphi 0, %s1591
            %p1588 = scmp.ge.s32.totalorder %s1587, 4
          $region98: #{ffm_forward.1} parent=94 // loop_header_branch
            %1590 = sbr.rel (%p1588) target = $region102
          $region99: #{ffm_forward.1} parent=94 // loop_body
            %s1592 = smul.u32 %s1587, 4
            %s1593 = scalar_lea.vmem %s498, %s1592 [#allocation8]
            %v1594 = vld [vmem:[%s1593] sm:$0xf]
            %vm1595 = vcmask 31744
            %v1597 = vsel %vm1595, %v1594, 0
            %vm1599 = vcmask 1043456
            %v1601 = vsel %vm1599, %v1585, 0
            %1603 = vmatprep.subr.mxu0 0.0
            %v1604 = vand.u32 %v1601, 4294901760
            %1605 = vmatpush1.msra.mxu0 %v1604
            %1606 = vmatprep.subr.mxu0 0.0
            %1607 = vmatpush1.msra.mxu0 0.0
            %1608 = vmatprep.subr.mxu0 0.0
            %1609 = vmatpush1.msra.mxu0 0.0
            %1610 = vmatprep.subr.mxu0 0.0
            %1611 = vmatpush1.msra.mxu0 0.0
            %1612 = vmatprep.subr.mxu0 0.0
            %1613 = vmatpush1.msra.mxu0 0.0
            %1614 = vmatprep.subr.mxu0 0.0
            %1615 = vmatpush1.msra.mxu0 0.0
            %1616 = vmatprep.subr.mxu0 0.0
            %1617 = vmatpush1.msra.mxu0 0.0
            %1618 = vmatprep.subr.mxu0 0.0
            %1619 = vmatpush1.msra.mxu0 0.0
            %1620 = vmatprep.subr.mxu0 0.0
            %1621 = vmatpush1.msra.mxu0 0.0
            %1622 = vmatprep.subr.mxu0 0.0
            %1623 = vmatpush1.msra.mxu0 0.0
            %1624 = vmatprep.subr.mxu0 0.0
            %1625 = vmatpush1.msra.mxu0 0.0
            %1626 = vmatprep.subr.mxu0 0.0
            %1627 = vmatpush1.msra.mxu0 0.0
            %1628 = vmatprep.subr.mxu0 0.0
            %1629 = vmatpush1.msra.mxu0 0.0
            %1630 = vmatprep.subr.mxu0 0.0
            %1631 = vmatpush1.msra.mxu0 0.0
            %1632 = vmatprep.subr.mxu0 0.0
            %1633 = vmatpush1.msra.mxu0 0.0
            %1634 = vmatprep.subr.mxu0 0.0
            %1635 = vmatpush1.msra.mxu0 0.0
            %1636 = vmatprep.subr.mxu0 0.0
            %1637 = vmatpush1.msra.mxu0 0.0
            %1638 = vmatprep.subr.mxu0 0.0
            %1639 = vmatpush1.msra.mxu0 0.0
            %1640 = vmatprep.subr.mxu0 0.0
            %1641 = vmatpush1.msra.mxu0 0.0
            %1642 = vmatprep.subr.mxu0 0.0
            %1643 = vmatpush1.msra.mxu0 0.0
            %1644 = vmatprep.subr.mxu0 0.0
            %1645 = vmatpush1.msra.mxu0 0.0
            %1646 = vmatprep.subr.mxu0 0.0
            %1647 = vmatpush1.msra.mxu0 0.0
            %1648 = vmatprep.subr.mxu0 0.0
            %1649 = vmatpush1.msra.mxu0 0.0
            %1650 = vmatprep.subr.mxu0 0.0
            %1651 = vmatpush1.msra.mxu0 0.0
            %1652 = vmatprep.subr.mxu0 0.0
            %1653 = vmatpush1.msra.mxu0 0.0
            %1654 = vmatprep.subr.mxu0 0.0
            %1655 = vmatpush1.msra.mxu0 0.0
            %1656 = vmatprep.subr.mxu0 0.0
            %1657 = vmatpush1.msra.mxu0 0.0
            %1658 = vmatprep.subr.mxu0 0.0
            %1659 = vmatpush1.msra.mxu0 0.0
            %1660 = vmatprep.subr.mxu0 0.0
            %1661 = vmatpush1.msra.mxu0 0.0
            %1662 = vmatprep.subr.mxu0 0.0
            %1663 = vmatpush1.msra.mxu0 0.0
            %1664 = vmatprep.subr.mxu0 0.0
            %1665 = vmatpush1.msra.mxu0 0.0
            %1666 = vmatprep.subr.mxu0 0.0
            %1667 = vmatpush1.msra.mxu0 0.0
            %1668 = vmatprep.mubr.f32.mxu0 0.0
            %v1669 = vand.u32 %v1597, 4294901760
            %v1670 = vsub.f32 %v1597, %v1669
            %v1671 = vand.u32 %v1670, 4294901760
            %v1672 = vsub.f32 %v1670, %v1671
            %v1673 = vand.u32 %v1672, 4294901760
            %1674 = vmatmul.mubr.f32.gmra.mrb[0].mxu0 %v1673
            %v1675 = vpop.f32.mrb[0].mxu0
            %v1676 = vadd.f32 0.0, %v1675
            %v1677 = vpop.f32.mrb[0].mxu0
            %1678 = vdwg.mxu0
            %1679 = vmatprep.subr.mxu0 0.0
            %v1680 = vand.u32 %v1601, 4294901760
            %v1681 = vsub.f32 %v1601, %v1680
            %v1682 = vand.u32 %v1681, 4294901760
            %v1683 = vsub.f32 %v1681, %v1682
            %v1684 = vand.u32 %v1683, 4294901760
            %1685 = vmatpush1.msra.mxu0 %v1684
            %1686 = vmatprep.subr.mxu0 0.0
            %1687 = vmatpush1.msra.mxu0 0.0
            %1688 = vmatprep.subr.mxu0 0.0
            %1689 = vmatpush1.msra.mxu0 0.0
            %1690 = vmatprep.subr.mxu0 0.0
            %1691 = vmatpush1.msra.mxu0 0.0
            %1692 = vmatprep.subr.mxu0 0.0
            %1693 = vmatpush1.msra.mxu0 0.0
            %1694 = vmatprep.subr.mxu0 0.0
            %1695 = vmatpush1.msra.mxu0 0.0
            %1696 = vmatprep.subr.mxu0 0.0
            %1697 = vmatpush1.msra.mxu0 0.0
            %1698 = vmatprep.subr.mxu0 0.0
            %1699 = vmatpush1.msra.mxu0 0.0
            %1700 = vmatprep.subr.mxu0 0.0
            %1701 = vmatpush1.msra.mxu0 0.0
            %1702 = vmatprep.subr.mxu0 0.0
            %1703 = vmatpush1.msra.mxu0 0.0
            %1704 = vmatprep.subr.mxu0 0.0
            %1705 = vmatpush1.msra.mxu0 0.0
            %1706 = vmatprep.subr.mxu0 0.0
            %1707 = vmatpush1.msra.mxu0 0.0
            %1708 = vmatprep.subr.mxu0 0.0
            %1709 = vmatpush1.msra.mxu0 0.0
            %1710 = vmatprep.subr.mxu0 0.0
            %1711 = vmatpush1.msra.mxu0 0.0
            %1712 = vmatprep.subr.mxu0 0.0
            %1713 = vmatpush1.msra.mxu0 0.0
            %1714 = vmatprep.subr.mxu0 0.0
            %1715 = vmatpush1.msra.mxu0 0.0
            %1716 = vmatprep.subr.mxu0 0.0
            %1717 = vmatpush1.msra.mxu0 0.0
            %1718 = vmatprep.subr.mxu0 0.0
            %1719 = vmatpush1.msra.mxu0 0.0
            %1720 = vmatprep.subr.mxu0 0.0
            %1721 = vmatpush1.msra.mxu0 0.0
            %1722 = vmatprep.subr.mxu0 0.0
            %1723 = vmatpush1.msra.mxu0 0.0
            %1724 = vmatprep.subr.mxu0 0.0
            %1725 = vmatpush1.msra.mxu0 0.0
            %1726 = vmatprep.subr.mxu0 0.0
            %1727 = vmatpush1.msra.mxu0 0.0
            %1728 = vmatprep.subr.mxu0 0.0
            %1729 = vmatpush1.msra.mxu0 0.0
            %1730 = vmatprep.subr.mxu0 0.0
            %1731 = vmatpush1.msra.mxu0 0.0
            %1732 = vmatprep.subr.mxu0 0.0
            %1733 = vmatpush1.msra.mxu0 0.0
            %1734 = vmatprep.subr.mxu0 0.0
            %1735 = vmatpush1.msra.mxu0 0.0
            %1736 = vmatprep.subr.mxu0 0.0
            %1737 = vmatpush1.msra.mxu0 0.0
            %1738 = vmatprep.subr.mxu0 0.0
            %1739 = vmatpush1.msra.mxu0 0.0
            %1740 = vmatprep.subr.mxu0 0.0
            %1741 = vmatpush1.msra.mxu0 0.0
            %1742 = vmatprep.subr.mxu0 0.0
            %1743 = vmatpush1.msra.mxu0 0.0
            %1744 = vmatprep.subr.mxu0 0.0
            %1745 = vmatpush1.msra.mxu0 0.0
            %1746 = vmatprep.subr.mxu0 0.0
            %1747 = vmatpush1.msra.mxu0 0.0
            %1748 = vmatprep.mubr.f32.mxu0 0.0
            %v1749 = vand.u32 %v1597, 4294901760
            %1750 = vmatmul.mubr.f32.gmra.mrb[0].mxu0 %v1749
            %v1751 = vpop.f32.mrb[0].mxu0
            %v1752 = vadd.f32 %v1676, %v1751
            %v1753 = vpop.f32.mrb[0].mxu0
            %1754 = vdwg.mxu0
            %1755 = vmatprep.subr.mxu0 0.0
            %v1756 = vand.u32 %v1601, 4294901760
            %v1757 = vsub.f32 %v1601, %v1756
            %1758 = vmatpush1.msra.mxu0 %v1757
            %1759 = vmatprep.subr.mxu0 0.0
            %1760 = vmatpush1.msra.mxu0 0.0
            %1761 = vmatprep.subr.mxu0 0.0
            %1762 = vmatpush1.msra.mxu0 0.0
            %1763 = vmatprep.subr.mxu0 0.0
            %1764 = vmatpush1.msra.mxu0 0.0
            %1765 = vmatprep.subr.mxu0 0.0
            %1766 = vmatpush1.msra.mxu0 0.0
            %1767 = vmatprep.subr.mxu0 0.0
            %1768 = vmatpush1.msra.mxu0 0.0
            %1769 = vmatprep.subr.mxu0 0.0
            %1770 = vmatpush1.msra.mxu0 0.0
            %1771 = vmatprep.subr.mxu0 0.0
            %1772 = vmatpush1.msra.mxu0 0.0
            %1773 = vmatprep.subr.mxu0 0.0
            %1774 = vmatpush1.msra.mxu0 0.0
            %1775 = vmatprep.subr.mxu0 0.0
            %1776 = vmatpush1.msra.mxu0 0.0
            %1777 = vmatprep.subr.mxu0 0.0
            %1778 = vmatpush1.msra.mxu0 0.0
            %1779 = vmatprep.subr.mxu0 0.0
            %1780 = vmatpush1.msra.mxu0 0.0
            %1781 = vmatprep.subr.mxu0 0.0
            %1782 = vmatpush1.msra.mxu0 0.0
            %1783 = vmatprep.subr.mxu0 0.0
            %1784 = vmatpush1.msra.mxu0 0.0
            %1785 = vmatprep.subr.mxu0 0.0
            %1786 = vmatpush1.msra.mxu0 0.0
            %1787 = vmatprep.subr.mxu0 0.0
            %1788 = vmatpush1.msra.mxu0 0.0
            %1789 = vmatprep.subr.mxu0 0.0
            %1790 = vmatpush1.msra.mxu0 0.0
            %1791 = vmatprep.subr.mxu0 0.0
            %1792 = vmatpush1.msra.mxu0 0.0
            %1793 = vmatprep.subr.mxu0 0.0
            %1794 = vmatpush1.msra.mxu0 0.0
            %1795 = vmatprep.subr.mxu0 0.0
            %1796 = vmatpush1.msra.mxu0 0.0
            %1797 = vmatprep.subr.mxu0 0.0
            %1798 = vmatpush1.msra.mxu0 0.0
            %1799 = vmatprep.subr.mxu0 0.0
            %1800 = vmatpush1.msra.mxu0 0.0
            %1801 = vmatprep.subr.mxu0 0.0
            %1802 = vmatpush1.msra.mxu0 0.0
            %1803 = vmatprep.subr.mxu0 0.0
            %1804 = vmatpush1.msra.mxu0 0.0
            %1805 = vmatprep.subr.mxu0 0.0
            %1806 = vmatpush1.msra.mxu0 0.0
            %1807 = vmatprep.subr.mxu0 0.0
            %1808 = vmatpush1.msra.mxu0 0.0
            %1809 = vmatprep.subr.mxu0 0.0
            %1810 = vmatpush1.msra.mxu0 0.0
            %1811 = vmatprep.subr.mxu0 0.0
            %1812 = vmatpush1.msra.mxu0 0.0
            %1813 = vmatprep.subr.mxu0 0.0
            %1814 = vmatpush1.msra.mxu0 0.0
            %1815 = vmatprep.subr.mxu0 0.0
            %1816 = vmatpush1.msra.mxu0 0.0
            %1817 = vmatprep.subr.mxu0 0.0
            %1818 = vmatpush1.msra.mxu0 0.0
            %1819 = vmatprep.subr.mxu0 0.0
            %1820 = vmatpush1.msra.mxu0 0.0
            %1821 = vmatprep.mubr.f32.mxu0 0.0
            %v1822 = vand.u32 %v1597, 4294901760
            %v1823 = vsub.f32 %v1597, %v1822
            %1824 = vmatmul.mubr.f32.gmra.mrb[0].mxu0 %v1823
            %v1825 = vpop.f32.mrb[0].mxu0
            %v1826 = vadd.f32 %v1752, %v1825
            %v1827 = vpop.f32.mrb[0].mxu0
            %1828 = vdwg.mxu0
            %1829 = vmatprep.subr.mxu0 0.0
            %v1830 = vand.u32 %v1601, 4294901760
            %1831 = vmatpush1.msra.mxu0 %v1830
            %1832 = vmatprep.subr.mxu0 0.0
            %1833 = vmatpush1.msra.mxu0 0.0
            %1834 = vmatprep.subr.mxu0 0.0
            %1835 = vmatpush1.msra.mxu0 0.0
            %1836 = vmatprep.subr.mxu0 0.0
            %1837 = vmatpush1.msra.mxu0 0.0
            %1838 = vmatprep.subr.mxu0 0.0
            %1839 = vmatpush1.msra.mxu0 0.0
            %1840 = vmatprep.subr.mxu0 0.0
            %1841 = vmatpush1.msra.mxu0 0.0
            %1842 = vmatprep.subr.mxu0 0.0
            %1843 = vmatpush1.msra.mxu0 0.0
            %1844 = vmatprep.subr.mxu0 0.0
            %1845 = vmatpush1.msra.mxu0 0.0
            %1846 = vmatprep.subr.mxu0 0.0
            %1847 = vmatpush1.msra.mxu0 0.0
            %1848 = vmatprep.subr.mxu0 0.0
            %1849 = vmatpush1.msra.mxu0 0.0
            %1850 = vmatprep.subr.mxu0 0.0
            %1851 = vmatpush1.msra.mxu0 0.0
            %1852 = vmatprep.subr.mxu0 0.0
            %1853 = vmatpush1.msra.mxu0 0.0
            %1854 = vmatprep.subr.mxu0 0.0
            %1855 = vmatpush1.msra.mxu0 0.0
            %1856 = vmatprep.subr.mxu0 0.0
            %1857 = vmatpush1.msra.mxu0 0.0
            %1858 = vmatprep.subr.mxu0 0.0
            %1859 = vmatpush1.msra.mxu0 0.0
            %1860 = vmatprep.subr.mxu0 0.0
            %1861 = vmatpush1.msra.mxu0 0.0
            %1862 = vmatprep.subr.mxu0 0.0
            %1863 = vmatpush1.msra.mxu0 0.0
            %1864 = vmatprep.subr.mxu0 0.0
            %1865 = vmatpush1.msra.mxu0 0.0
            %1866 = vmatprep.subr.mxu0 0.0
            %1867 = vmatpush1.msra.mxu0 0.0
            %1868 = vmatprep.subr.mxu0 0.0
            %1869 = vmatpush1.msra.mxu0 0.0
            %1870 = vmatprep.subr.mxu0 0.0
            %1871 = vmatpush1.msra.mxu0 0.0
            %1872 = vmatprep.subr.mxu0 0.0
            %1873 = vmatpush1.msra.mxu0 0.0
            %1874 = vmatprep.subr.mxu0 0.0
            %1875 = vmatpush1.msra.mxu0 0.0
            %1876 = vmatprep.subr.mxu0 0.0
            %1877 = vmatpush1.msra.mxu0 0.0
            %1878 = vmatprep.subr.mxu0 0.0
            %1879 = vmatpush1.msra.mxu0 0.0
            %1880 = vmatprep.subr.mxu0 0.0
            %1881 = vmatpush1.msra.mxu0 0.0
            %1882 = vmatprep.subr.mxu0 0.0
            %1883 = vmatpush1.msra.mxu0 0.0
            %1884 = vmatprep.subr.mxu0 0.0
            %1885 = vmatpush1.msra.mxu0 0.0
            %1886 = vmatprep.subr.mxu0 0.0
            %1887 = vmatpush1.msra.mxu0 0.0
            %1888 = vmatprep.subr.mxu0 0.0
            %1889 = vmatpush1.msra.mxu0 0.0
            %1890 = vmatprep.subr.mxu0 0.0
            %1891 = vmatpush1.msra.mxu0 0.0
            %1892 = vmatprep.subr.mxu0 0.0
            %1893 = vmatpush1.msra.mxu0 0.0
            %1894 = vmatprep.mubr.f32.mxu0 0.0
            %v1895 = vand.u32 %v1597, 4294901760
            %v1896 = vsub.f32 %v1597, %v1895
            %v1897 = vand.u32 %v1896, 4294901760
            %1898 = vmatmul.mubr.f32.gmra.mrb[0].mxu0 %v1897
            %v1899 = vpop.f32.mrb[0].mxu0
            %v1900 = vadd.f32 %v1826, %v1899
            %v1901 = vpop.f32.mrb[0].mxu0
            %1902 = vdwg.mxu0
            %1903 = vmatprep.subr.mxu0 0.0
            %v1904 = vand.u32 %v1601, 4294901760
            %v1905 = vsub.f32 %v1601, %v1904
            %v1906 = vand.u32 %v1905, 4294901760
            %1907 = vmatpush1.msra.mxu0 %v1906
            %1908 = vmatprep.subr.mxu0 0.0
            %1909 = vmatpush1.msra.mxu0 0.0
            %1910 = vmatprep.subr.mxu0 0.0
            %1911 = vmatpush1.msra.mxu0 0.0
            %1912 = vmatprep.subr.mxu0 0.0
            %1913 = vmatpush1.msra.mxu0 0.0
            %1914 = vmatprep.subr.mxu0 0.0
            %1915 = vmatpush1.msra.mxu0 0.0
            %1916 = vmatprep.subr.mxu0 0.0
            %1917 = vmatpush1.msra.mxu0 0.0
            %1918 = vmatprep.subr.mxu0 0.0
            %1919 = vmatpush1.msra.mxu0 0.0
            %1920 = vmatprep.subr.mxu0 0.0
            %1921 = vmatpush1.msra.mxu0 0.0
            %1922 = vmatprep.subr.mxu0 0.0
            %1923 = vmatpush1.msra.mxu0 0.0
            %1924 = vmatprep.subr.mxu0 0.0
            %1925 = vmatpush1.msra.mxu0 0.0
            %1926 = vmatprep.subr.mxu0 0.0
            %1927 = vmatpush1.msra.mxu0 0.0
            %1928 = vmatprep.subr.mxu0 0.0
            %1929 = vmatpush1.msra.mxu0 0.0
            %1930 = vmatprep.subr.mxu0 0.0
            %1931 = vmatpush1.msra.mxu0 0.0
            %1932 = vmatprep.subr.mxu0 0.0
            %1933 = vmatpush1.msra.mxu0 0.0
            %1934 = vmatprep.subr.mxu0 0.0
            %1935 = vmatpush1.msra.mxu0 0.0
            %1936 = vmatprep.subr.mxu0 0.0
            %1937 = vmatpush1.msra.mxu0 0.0
            %1938 = vmatprep.subr.mxu0 0.0
            %1939 = vmatpush1.msra.mxu0 0.0
            %1940 = vmatprep.subr.mxu0 0.0
            %1941 = vmatpush1.msra.mxu0 0.0
            %1942 = vmatprep.subr.mxu0 0.0
            %1943 = vmatpush1.msra.mxu0 0.0
            %1944 = vmatprep.subr.mxu0 0.0
            %1945 = vmatpush1.msra.mxu0 0.0
            %1946 = vmatprep.subr.mxu0 0.0
            %1947 = vmatpush1.msra.mxu0 0.0
            %1948 = vmatprep.subr.mxu0 0.0
            %1949 = vmatpush1.msra.mxu0 0.0
            %1950 = vmatprep.subr.mxu0 0.0
            %1951 = vmatpush1.msra.mxu0 0.0
            %1952 = vmatprep.subr.mxu0 0.0
            %1953 = vmatpush1.msra.mxu0 0.0
            %1954 = vmatprep.subr.mxu0 0.0
            %1955 = vmatpush1.msra.mxu0 0.0
            %1956 = vmatprep.subr.mxu0 0.0
            %1957 = vmatpush1.msra.mxu0 0.0
            %1958 = vmatprep.subr.mxu0 0.0
            %1959 = vmatpush1.msra.mxu0 0.0
            %1960 = vmatprep.subr.mxu0 0.0
            %1961 = vmatpush1.msra.mxu0 0.0
            %1962 = vmatprep.subr.mxu0 0.0
            %1963 = vmatpush1.msra.mxu0 0.0
            %1964 = vmatprep.subr.mxu0 0.0
            %1965 = vmatpush1.msra.mxu0 0.0
            %1966 = vmatprep.subr.mxu0 0.0
            %1967 = vmatpush1.msra.mxu0 0.0
            %1968 = vmatprep.subr.mxu0 0.0
            %1969 = vmatpush1.msra.mxu0 0.0
            %1970 = vmatprep.mubr.f32.mxu0 0.0
            %v1971 = vand.u32 %v1597, 4294901760
            %1972 = vmatmul.mubr.f32.gmra.mrb[0].mxu0 %v1971
            %v1973 = vpop.f32.mrb[0].mxu0
            %v1974 = vadd.f32 %v1900, %v1973
            %v1975 = vpop.f32.mrb[0].mxu0
            %1976 = vdwg.mxu0
            %1977 = vmatprep.subr.mxu0 0.0
            %v1978 = vand.u32 %v1601, 4294901760
            %1979 = vmatpush1.msra.mxu0 %v1978
            %1980 = vmatprep.subr.mxu0 0.0
            %1981 = vmatpush1.msra.mxu0 0.0
            %1982 = vmatprep.subr.mxu0 0.0
            %1983 = vmatpush1.msra.mxu0 0.0
            %1984 = vmatprep.subr.mxu0 0.0
            %1985 = vmatpush1.msra.mxu0 0.0
            %1986 = vmatprep.subr.mxu0 0.0
            %1987 = vmatpush1.msra.mxu0 0.0
            %1988 = vmatprep.subr.mxu0 0.0
            %1989 = vmatpush1.msra.mxu0 0.0
            %1990 = vmatprep.subr.mxu0 0.0
            %1991 = vmatpush1.msra.mxu0 0.0
            %1992 = vmatprep.subr.mxu0 0.0
            %1993 = vmatpush1.msra.mxu0 0.0
            %1994 = vmatprep.subr.mxu0 0.0
            %1995 = vmatpush1.msra.mxu0 0.0
            %1996 = vmatprep.subr.mxu0 0.0
            %1997 = vmatpush1.msra.mxu0 0.0
            %1998 = vmatprep.subr.mxu0 0.0
            %1999 = vmatpush1.msra.mxu0 0.0
            %2000 = vmatprep.subr.mxu0 0.0
            %2001 = vmatpush1.msra.mxu0 0.0
            %2002 = vmatprep.subr.mxu0 0.0
            %2003 = vmatpush1.msra.mxu0 0.0
            %2004 = vmatprep.subr.mxu0 0.0
            %2005 = vmatpush1.msra.mxu0 0.0
            %2006 = vmatprep.subr.mxu0 0.0
            %2007 = vmatpush1.msra.mxu0 0.0
            %2008 = vmatprep.subr.mxu0 0.0
            %2009 = vmatpush1.msra.mxu0 0.0
            %2010 = vmatprep.subr.mxu0 0.0
            %2011 = vmatpush1.msra.mxu0 0.0
            %2012 = vmatprep.subr.mxu0 0.0
            %2013 = vmatpush1.msra.mxu0 0.0
            %2014 = vmatprep.subr.mxu0 0.0
            %2015 = vmatpush1.msra.mxu0 0.0
            %2016 = vmatprep.subr.mxu0 0.0
            %2017 = vmatpush1.msra.mxu0 0.0
            %2018 = vmatprep.subr.mxu0 0.0
            %2019 = vmatpush1.msra.mxu0 0.0
            %2020 = vmatprep.subr.mxu0 0.0
            %2021 = vmatpush1.msra.mxu0 0.0
            %2022 = vmatprep.subr.mxu0 0.0
            %2023 = vmatpush1.msra.mxu0 0.0
            %2024 = vmatprep.subr.mxu0 0.0
            %2025 = vmatpush1.msra.mxu0 0.0
            %2026 = vmatprep.subr.mxu0 0.0
            %2027 = vmatpush1.msra.mxu0 0.0
            %2028 = vmatprep.subr.mxu0 0.0
            %2029 = vmatpush1.msra.mxu0 0.0
            %2030 = vmatprep.subr.mxu0 0.0
            %2031 = vmatpush1.msra.mxu0 0.0
            %2032 = vmatprep.subr.mxu0 0.0
            %2033 = vmatpush1.msra.mxu0 0.0
            %2034 = vmatprep.subr.mxu0 0.0
            %2035 = vmatpush1.msra.mxu0 0.0
            %2036 = vmatprep.subr.mxu0 0.0
            %2037 = vmatpush1.msra.mxu0 0.0
            %2038 = vmatprep.subr.mxu0 0.0
            %2039 = vmatpush1.msra.mxu0 0.0
            %2040 = vmatprep.subr.mxu0 0.0
            %2041 = vmatpush1.msra.mxu0 0.0
            %2042 = vmatprep.mubr.f32.mxu0 0.0
            %v2043 = vand.u32 %v1597, 4294901760
            %2044 = vmatmul.mubr.f32.gmra.mrb[0].mxu0 %v2043
            %v2045 = vpop.f32.mrb[0].mxu0
            %v2046 = vadd.f32 %v1974, %v2045
            %v2047 = vpop.f32.mrb[0].mxu0
            %2048 = vdwg.mxu0
            %v2050 = vsel %vm1595, %v1583, 0
            %v2053 = vsel %vm1595, %v1584, 0
            %v2056 = vsel %vm1599, %v2046, 0
            %2058 = vmatprep.subr.mxu0 0.0
            %v2059 = vand.u32 %v2056, 4294901760
            %2060 = vmatpush1.msra.mxu0 %v2059
            %2061 = vmatprep.subr.mxu0 0.0
            %2062 = vmatpush1.msra.mxu0 0.0
            %2063 = vmatprep.subr.mxu0 0.0
            %2064 = vmatpush1.msra.mxu0 0.0
            %2065 = vmatprep.subr.mxu0 0.0
            %2066 = vmatpush1.msra.mxu0 0.0
            %2067 = vmatprep.subr.mxu0 0.0
            %2068 = vmatpush1.msra.mxu0 0.0
            %2069 = vmatprep.subr.mxu0 0.0
            %2070 = vmatpush1.msra.mxu0 0.0
            %2071 = vmatprep.subr.mxu0 0.0
            %2072 = vmatpush1.msra.mxu0 0.0
            %2073 = vmatprep.subr.mxu0 0.0
            %2074 = vmatpush1.msra.mxu0 0.0
            %2075 = vmatprep.subr.mxu0 0.0
            %2076 = vmatpush1.msra.mxu0 0.0
            %2077 = vmatprep.subr.mxu0 0.0
            %2078 = vmatpush1.msra.mxu0 0.0
            %2079 = vmatprep.subr.mxu0 0.0
            %2080 = vmatpush1.msra.mxu0 0.0
            %2081 = vmatprep.subr.mxu0 0.0
            %2082 = vmatpush1.msra.mxu0 0.0
            %2083 = vmatprep.subr.mxu0 0.0
            %2084 = vmatpush1.msra.mxu0 0.0
            %2085 = vmatprep.subr.mxu0 0.0
            %2086 = vmatpush1.msra.mxu0 0.0
            %2087 = vmatprep.subr.mxu0 0.0
            %2088 = vmatpush1.msra.mxu0 0.0
            %2089 = vmatprep.subr.mxu0 0.0
            %2090 = vmatpush1.msra.mxu0 0.0
            %2091 = vmatprep.subr.mxu0 0.0
            %2092 = vmatpush1.msra.mxu0 0.0
            %2093 = vmatprep.subr.mxu0 0.0
            %2094 = vmatpush1.msra.mxu0 0.0
            %2095 = vmatprep.subr.mxu0 0.0
            %2096 = vmatpush1.msra.mxu0 0.0
            %2097 = vmatprep.subr.mxu0 0.0
            %2098 = vmatpush1.msra.mxu0 0.0
            %2099 = vmatprep.subr.mxu0 0.0
            %2100 = vmatpush1.msra.mxu0 0.0
            %2101 = vmatprep.subr.mxu0 0.0
            %2102 = vmatpush1.msra.mxu0 0.0
            %2103 = vmatprep.subr.mxu0 0.0
            %2104 = vmatpush1.msra.mxu0 0.0
            %2105 = vmatprep.subr.mxu0 0.0
            %2106 = vmatpush1.msra.mxu0 0.0
            %2107 = vmatprep.subr.mxu0 0.0
            %2108 = vmatpush1.msra.mxu0 0.0
            %2109 = vmatprep.subr.mxu0 0.0
            %2110 = vmatpush1.msra.mxu0 0.0
            %2111 = vmatprep.subr.mxu0 0.0
            %2112 = vmatpush1.msra.mxu0 0.0
            %2113 = vmatprep.subr.mxu0 0.0
            %2114 = vmatpush1.msra.mxu0 0.0
            %2115 = vmatprep.subr.mxu0 0.0
            %2116 = vmatpush1.msra.mxu0 0.0
            %2117 = vmatprep.subr.mxu0 0.0
            %2118 = vmatpush1.msra.mxu0 0.0
            %2119 = vmatprep.subr.mxu0 0.0
            %2120 = vmatpush1.msra.mxu0 0.0
            %2121 = vmatprep.subr.mxu0 0.0
            %2122 = vmatpush1.msra.mxu0 0.0
            %2123 = vmatprep.mubr.f32.mxu0 0.0
            %v2124 = vand.u32 %v2050, 4294901760
            %v2125 = vsub.f32 %v2050, %v2124
            %v2126 = vand.u32 %v2125, 4294901760
            %v2127 = vsub.f32 %v2125, %v2126
            %v2128 = vand.u32 %v2127, 4294901760
            %2129 = vmatmul.mubr.f32.gmra.mrb[0].mxu0 %v2128
            %v2130 = vpop.f32.mrb[0].mxu0
            %v2131 = vadd.f32 0.0, %v2130
            %v2132 = vpop.f32.mrb[0].mxu0
            %2133 = vmatprep.mubr.f32.mxu0 0.0
            %v2134 = vand.u32 %v2053, 4294901760
            %v2135 = vsub.f32 %v2053, %v2134
            %v2136 = vand.u32 %v2135, 4294901760
            %v2137 = vsub.f32 %v2135, %v2136
            %v2138 = vand.u32 %v2137, 4294901760
            %2139 = vmatmul.mubr.f32.gmra.mrb[0].mxu0 %v2138
            %v2140 = vpop.f32.mrb[0].mxu0
            %v2141 = vadd.f32 0.0, %v2140
            %v2142 = vpop.f32.mrb[0].mxu0
            %2143 = vdwg.mxu0
            %2144 = vmatprep.subr.mxu0 0.0
            %v2145 = vand.u32 %v2056, 4294901760
            %v2146 = vsub.f32 %v2056, %v2145
            %v2147 = vand.u32 %v2146, 4294901760
            %v2148 = vsub.f32 %v2146, %v2147
            %v2149 = vand.u32 %v2148, 4294901760
            %2150 = vmatpush1.msra.mxu0 %v2149
            %2151 = vmatprep.subr.mxu0 0.0
            %2152 = vmatpush1.msra.mxu0 0.0
            %2153 = vmatprep.subr.mxu0 0.0
            %2154 = vmatpush1.msra.mxu0 0.0
            %2155 = vmatprep.subr.mxu0 0.0
            %2156 = vmatpush1.msra.mxu0 0.0
            %2157 = vmatprep.subr.mxu0 0.0
            %2158 = vmatpush1.msra.mxu0 0.0
            %2159 = vmatprep.subr.mxu0 0.0
            %2160 = vmatpush1.msra.mxu0 0.0
            %2161 = vmatprep.subr.mxu0 0.0
            %2162 = vmatpush1.msra.mxu0 0.0
            %2163 = vmatprep.subr.mxu0 0.0
            %2164 = vmatpush1.msra.mxu0 0.0
            %2165 = vmatprep.subr.mxu0 0.0
            %2166 = vmatpush1.msra.mxu0 0.0
            %2167 = vmatprep.subr.mxu0 0.0
            %2168 = vmatpush1.msra.mxu0 0.0
            %2169 = vmatprep.subr.mxu0 0.0
            %2170 = vmatpush1.msra.mxu0 0.0
            %2171 = vmatprep.subr.mxu0 0.0
            %2172 = vmatpush1.msra.mxu0 0.0
            %2173 = vmatprep.subr.mxu0 0.0
            %2174 = vmatpush1.msra.mxu0 0.0
            %2175 = vmatprep.subr.mxu0 0.0
            %2176 = vmatpush1.msra.mxu0 0.0
            %2177 = vmatprep.subr.mxu0 0.0
            %2178 = vmatpush1.msra.mxu0 0.0
            %2179 = vmatprep.subr.mxu0 0.0
            %2180 = vmatpush1.msra.mxu0 0.0
            %2181 = vmatprep.subr.mxu0 0.0
            %2182 = vmatpush1.msra.mxu0 0.0
            %2183 = vmatprep.subr.mxu0 0.0
            %2184 = vmatpush1.msra.mxu0 0.0
            %2185 = vmatprep.subr.mxu0 0.0
            %2186 = vmatpush1.msra.mxu0 0.0
            %2187 = vmatprep.subr.mxu0 0.0
            %2188 = vmatpush1.msra.mxu0 0.0
            %2189 = vmatprep.subr.mxu0 0.0
            %2190 = vmatpush1.msra.mxu0 0.0
            %2191 = vmatprep.subr.mxu0 0.0
            %2192 = vmatpush1.msra.mxu0 0.0
            %2193 = vmatprep.subr.mxu0 0.0
            %2194 = vmatpush1.msra.mxu0 0.0
            %2195 = vmatprep.subr.mxu0 0.0
            %2196 = vmatpush1.msra.mxu0 0.0
            %2197 = vmatprep.subr.mxu0 0.0
            %2198 = vmatpush1.msra.mxu0 0.0
            %2199 = vmatprep.subr.mxu0 0.0
            %2200 = vmatpush1.msra.mxu0 0.0
            %2201 = vmatprep.subr.mxu0 0.0
            %2202 = vmatpush1.msra.mxu0 0.0
            %2203 = vmatprep.subr.mxu0 0.0
            %2204 = vmatpush1.msra.mxu0 0.0
            %2205 = vmatprep.subr.mxu0 0.0
            %2206 = vmatpush1.msra.mxu0 0.0
            %2207 = vmatprep.subr.mxu0 0.0
            %2208 = vmatpush1.msra.mxu0 0.0
            %2209 = vmatprep.subr.mxu0 0.0
            %2210 = vmatpush1.msra.mxu0 0.0
            %2211 = vmatprep.subr.mxu0 0.0
            %2212 = vmatpush1.msra.mxu0 0.0
            %2213 = vmatprep.mubr.f32.mxu0 0.0
            %v2214 = vand.u32 %v2050, 4294901760
            %2215 = vmatmul.mubr.f32.gmra.mrb[0].mxu0 %v2214
            %v2216 = vpop.f32.mrb[0].mxu0
            %v2217 = vadd.f32 %v2131, %v2216
            %v2218 = vpop.f32.mrb[0].mxu0
            %2219 = vmatprep.mubr.f32.mxu0 0.0
            %v2220 = vand.u32 %v2053, 4294901760
            %2221 = vmatmul.mubr.f32.gmra.mrb[0].mxu0 %v2220
            %v2222 = vpop.f32.mrb[0].mxu0
            %v2223 = vadd.f32 %v2141, %v2222
            %v2224 = vpop.f32.mrb[0].mxu0
            %2225 = vdwg.mxu0
            %2226 = vmatprep.subr.mxu0 0.0
            %v2227 = vand.u32 %v2056, 4294901760
            %v2228 = vsub.f32 %v2056, %v2227
            %2229 = vmatpush1.msra.mxu0 %v2228
            %2230 = vmatprep.subr.mxu0 0.0
            %2231 = vmatpush1.msra.mxu0 0.0
            %2232 = vmatprep.subr.mxu0 0.0
            %2233 = vmatpush1.msra.mxu0 0.0
            %2234 = vmatprep.subr.mxu0 0.0
            %2235 = vmatpush1.msra.mxu0 0.0
            %2236 = vmatprep.subr.mxu0 0.0
            %2237 = vmatpush1.msra.mxu0 0.0
            %2238 = vmatprep.subr.mxu0 0.0
            %2239 = vmatpush1.msra.mxu0 0.0
            %2240 = vmatprep.subr.mxu0 0.0
            %2241 = vmatpush1.msra.mxu0 0.0
            %2242 = vmatprep.subr.mxu0 0.0
            %2243 = vmatpush1.msra.mxu0 0.0
            %2244 = vmatprep.subr.mxu0 0.0
            %2245 = vmatpush1.msra.mxu0 0.0
            %2246 = vmatprep.subr.mxu0 0.0
            %2247 = vmatpush1.msra.mxu0 0.0
            %2248 = vmatprep.subr.mxu0 0.0
            %2249 = vmatpush1.msra.mxu0 0.0
            %2250 = vmatprep.subr.mxu0 0.0
            %2251 = vmatpush1.msra.mxu0 0.0
            %2252 = vmatprep.subr.mxu0 0.0
            %2253 = vmatpush1.msra.mxu0 0.0
            %2254 = vmatprep.subr.mxu0 0.0
            %2255 = vmatpush1.msra.mxu0 0.0
            %2256 = vmatprep.subr.mxu0 0.0
            %2257 = vmatpush1.msra.mxu0 0.0
            %2258 = vmatprep.subr.mxu0 0.0
            %2259 = vmatpush1.msra.mxu0 0.0
            %2260 = vmatprep.subr.mxu0 0.0
            %2261 = vmatpush1.msra.mxu0 0.0
            %2262 = vmatprep.subr.mxu0 0.0
            %2263 = vmatpush1.msra.mxu0 0.0
            %2264 = vmatprep.subr.mxu0 0.0
            %2265 = vmatpush1.msra.mxu0 0.0
            %2266 = vmatprep.subr.mxu0 0.0
            %2267 = vmatpush1.msra.mxu0 0.0
            %2268 = vmatprep.subr.mxu0 0.0
            %2269 = vmatpush1.msra.mxu0 0.0
            %2270 = vmatprep.subr.mxu0 0.0
            %2271 = vmatpush1.msra.mxu0 0.0
            %2272 = vmatprep.subr.mxu0 0.0
            %2273 = vmatpush1.msra.mxu0 0.0
            %2274 = vmatprep.subr.mxu0 0.0
            %2275 = vmatpush1.msra.mxu0 0.0
            %2276 = vmatprep.subr.mxu0 0.0
            %2277 = vmatpush1.msra.mxu0 0.0
            %2278 = vmatprep.subr.mxu0 0.0
            %2279 = vmatpush1.msra.mxu0 0.0
            %2280 = vmatprep.subr.mxu0 0.0
            %2281 = vmatpush1.msra.mxu0 0.0
            %2282 = vmatprep.subr.mxu0 0.0
            %2283 = vmatpush1.msra.mxu0 0.0
            %2284 = vmatprep.subr.mxu0 0.0
            %2285 = vmatpush1.msra.mxu0 0.0
            %2286 = vmatprep.subr.mxu0 0.0
            %2287 = vmatpush1.msra.mxu0 0.0
            %2288 = vmatprep.subr.mxu0 0.0
            %2289 = vmatpush1.msra.mxu0 0.0
            %2290 = vmatprep.subr.mxu0 0.0
            %2291 = vmatpush1.msra.mxu0 0.0
            %2292 = vmatprep.mubr.f32.mxu0 0.0
            %v2293 = vand.u32 %v2050, 4294901760
            %v2294 = vsub.f32 %v2050, %v2293
            %2295 = vmatmul.mubr.f32.gmra.mrb[0].mxu0 %v2294
            %v2296 = vpop.f32.mrb[0].mxu0
            %v2297 = vadd.f32 %v2217, %v2296
            %v2298 = vpop.f32.mrb[0].mxu0
            %2299 = vmatprep.mubr.f32.mxu0 0.0
            %v2300 = vand.u32 %v2053, 4294901760
            %v2301 = vsub.f32 %v2053, %v2300
            %2302 = vmatmul.mubr.f32.gmra.mrb[0].mxu0 %v2301
            %v2303 = vpop.f32.mrb[0].mxu0
            %v2304 = vadd.f32 %v2223, %v2303
            %v2305 = vpop.f32.mrb[0].mxu0
            %2306 = vdwg.mxu0
            %2307 = vmatprep.subr.mxu0 0.0
            %v2308 = vand.u32 %v2056, 4294901760
            %2309 = vmatpush1.msra.mxu0 %v2308
            %2310 = vmatprep.subr.mxu0 0.0
            %2311 = vmatpush1.msra.mxu0 0.0
            %2312 = vmatprep.subr.mxu0 0.0
            %2313 = vmatpush1.msra.mxu0 0.0
            %2314 = vmatprep.subr.mxu0 0.0
            %2315 = vmatpush1.msra.mxu0 0.0
            %2316 = vmatprep.subr.mxu0 0.0
            %2317 = vmatpush1.msra.mxu0 0.0
            %2318 = vmatprep.subr.mxu0 0.0
            %2319 = vmatpush1.msra.mxu0 0.0
            %2320 = vmatprep.subr.mxu0 0.0
            %2321 = vmatpush1.msra.mxu0 0.0
            %2322 = vmatprep.subr.mxu0 0.0
            %2323 = vmatpush1.msra.mxu0 0.0
            %2324 = vmatprep.subr.mxu0 0.0
            %2325 = vmatpush1.msra.mxu0 0.0
            %2326 = vmatprep.subr.mxu0 0.0
            %2327 = vmatpush1.msra.mxu0 0.0
            %2328 = vmatprep.subr.mxu0 0.0
            %2329 = vmatpush1.msra.mxu0 0.0
            %2330 = vmatprep.subr.mxu0 0.0
            %2331 = vmatpush1.msra.mxu0 0.0
            %2332 = vmatprep.subr.mxu0 0.0
            %2333 = vmatpush1.msra.mxu0 0.0
            %2334 = vmatprep.subr.mxu0 0.0
            %2335 = vmatpush1.msra.mxu0 0.0
            %2336 = vmatprep.subr.mxu0 0.0
            %2337 = vmatpush1.msra.mxu0 0.0
            %2338 = vmatprep.subr.mxu0 0.0
            %2339 = vmatpush1.msra.mxu0 0.0
            %2340 = vmatprep.subr.mxu0 0.0
            %2341 = vmatpush1.msra.mxu0 0.0
            %2342 = vmatprep.subr.mxu0 0.0
            %2343 = vmatpush1.msra.mxu0 0.0
            %2344 = vmatprep.subr.mxu0 0.0
            %2345 = vmatpush1.msra.mxu0 0.0
            %2346 = vmatprep.subr.mxu0 0.0
            %2347 = vmatpush1.msra.mxu0 0.0
            %2348 = vmatprep.subr.mxu0 0.0
            %2349 = vmatpush1.msra.mxu0 0.0
            %2350 = vmatprep.subr.mxu0 0.0
            %2351 = vmatpush1.msra.mxu0 0.0
            %2352 = vmatprep.subr.mxu0 0.0
            %2353 = vmatpush1.msra.mxu0 0.0
            %2354 = vmatprep.subr.mxu0 0.0
            %2355 = vmatpush1.msra.mxu0 0.0
            %2356 = vmatprep.subr.mxu0 0.0
            %2357 = vmatpush1.msra.mxu0 0.0
            %2358 = vmatprep.subr.mxu0 0.0
            %2359 = vmatpush1.msra.mxu0 0.0
            %2360 = vmatprep.subr.mxu0 0.0
            %2361 = vmatpush1.msra.mxu0 0.0
            %2362 = vmatprep.subr.mxu0 0.0
            %2363 = vmatpush1.msra.mxu0 0.0
            %2364 = vmatprep.subr.mxu0 0.0
            %2365 = vmatpush1.msra.mxu0 0.0
            %2366 = vmatprep.subr.mxu0 0.0
            %2367 = vmatpush1.msra.mxu0 0.0
            %2368 = vmatprep.subr.mxu0 0.0
            %2369 = vmatpush1.msra.mxu0 0.0
            %2370 = vmatprep.subr.mxu0 0.0
            %2371 = vmatpush1.msra.mxu0 0.0
            %2372 = vmatprep.mubr.f32.mxu0 0.0
            %v2373 = vand.u32 %v2050, 4294901760
            %v2374 = vsub.f32 %v2050, %v2373
            %v2375 = vand.u32 %v2374, 4294901760
            %2376 = vmatmul.mubr.f32.gmra.mrb[0].mxu0 %v2375
            %v2377 = vpop.f32.mrb[0].mxu0
            %v2378 = vadd.f32 %v2297, %v2377
            %v2379 = vpop.f32.mrb[0].mxu0
            %2380 = vmatprep.mubr.f32.mxu0 0.0
            %v2381 = vand.u32 %v2053, 4294901760
            %v2382 = vsub.f32 %v2053, %v2381
            %v2383 = vand.u32 %v2382, 4294901760
            %2384 = vmatmul.mubr.f32.gmra.mrb[0].mxu0 %v2383
            %v2385 = vpop.f32.mrb[0].mxu0
            %v2386 = vadd.f32 %v2304, %v2385
            %v2387 = vpop.f32.mrb[0].mxu0
            %2388 = vdwg.mxu0
            %2389 = vmatprep.subr.mxu0 0.0
            %v2390 = vand.u32 %v2056, 4294901760
            %v2391 = vsub.f32 %v2056, %v2390
            %v2392 = vand.u32 %v2391, 4294901760
            %2393 = vmatpush1.msra.mxu0 %v2392
            %2394 = vmatprep.subr.mxu0 0.0
            %2395 = vmatpush1.msra.mxu0 0.0
            %2396 = vmatprep.subr.mxu0 0.0
            %2397 = vmatpush1.msra.mxu0 0.0
            %2398 = vmatprep.subr.mxu0 0.0
            %2399 = vmatpush1.msra.mxu0 0.0
            %2400 = vmatprep.subr.mxu0 0.0
            %2401 = vmatpush1.msra.mxu0 0.0
            %2402 = vmatprep.subr.mxu0 0.0
            %2403 = vmatpush1.msra.mxu0 0.0
            %2404 = vmatprep.subr.mxu0 0.0
            %2405 = vmatpush1.msra.mxu0 0.0
            %2406 = vmatprep.subr.mxu0 0.0
            %2407 = vmatpush1.msra.mxu0 0.0
            %2408 = vmatprep.subr.mxu0 0.0
            %2409 = vmatpush1.msra.mxu0 0.0
            %2410 = vmatprep.subr.mxu0 0.0
            %2411 = vmatpush1.msra.mxu0 0.0
            %2412 = vmatprep.subr.mxu0 0.0
            %2413 = vmatpush1.msra.mxu0 0.0
            %2414 = vmatprep.subr.mxu0 0.0
            %2415 = vmatpush1.msra.mxu0 0.0
            %2416 = vmatprep.subr.mxu0 0.0
            %2417 = vmatpush1.msra.mxu0 0.0
            %2418 = vmatprep.subr.mxu0 0.0
            %2419 = vmatpush1.msra.mxu0 0.0
            %2420 = vmatprep.subr.mxu0 0.0
            %2421 = vmatpush1.msra.mxu0 0.0
            %2422 = vmatprep.subr.mxu0 0.0
            %2423 = vmatpush1.msra.mxu0 0.0
            %2424 = vmatprep.subr.mxu0 0.0
            %2425 = vmatpush1.msra.mxu0 0.0
            %2426 = vmatprep.subr.mxu0 0.0
            %2427 = vmatpush1.msra.mxu0 0.0
            %2428 = vmatprep.subr.mxu0 0.0
            %2429 = vmatpush1.msra.mxu0 0.0
            %2430 = vmatprep.subr.mxu0 0.0
            %2431 = vmatpush1.msra.mxu0 0.0
            %2432 = vmatprep.subr.mxu0 0.0
            %2433 = vmatpush1.msra.mxu0 0.0
            %2434 = vmatprep.subr.mxu0 0.0
            %2435 = vmatpush1.msra.mxu0 0.0
            %2436 = vmatprep.subr.mxu0 0.0
            %2437 = vmatpush1.msra.mxu0 0.0
            %2438 = vmatprep.subr.mxu0 0.0
            %2439 = vmatpush1.msra.mxu0 0.0
            %2440 = vmatprep.subr.mxu0 0.0
            %2441 = vmatpush1.msra.mxu0 0.0
            %2442 = vmatprep.subr.mxu0 0.0
            %2443 = vmatpush1.msra.mxu0 0.0
            %2444 = vmatprep.subr.mxu0 0.0
            %2445 = vmatpush1.msra.mxu0 0.0
            %2446 = vmatprep.subr.mxu0 0.0
            %2447 = vmatpush1.msra.mxu0 0.0
            %2448 = vmatprep.subr.mxu0 0.0
            %2449 = vmatpush1.msra.mxu0 0.0
            %2450 = vmatprep.subr.mxu0 0.0
            %2451 = vmatpush1.msra.mxu0 0.0
            %2452 = vmatprep.subr.mxu0 0.0
            %2453 = vmatpush1.msra.mxu0 0.0
            %2454 = vmatprep.subr.mxu0 0.0
            %2455 = vmatpush1.msra.mxu0 0.0
            %2456 = vmatprep.mubr.f32.mxu0 0.0
            %v2457 = vand.u32 %v2050, 4294901760
            %2458 = vmatmul.mubr.f32.gmra.mrb[0].mxu0 %v2457
            %v2459 = vpop.f32.mrb[0].mxu0
            %v2460 = vadd.f32 %v2378, %v2459
            %v2461 = vpop.f32.mrb[0].mxu0
            %2462 = vmatprep.mubr.f32.mxu0 0.0
            %v2463 = vand.u32 %v2053, 4294901760
            %2464 = vmatmul.mubr.f32.gmra.mrb[0].mxu0 %v2463
            %v2465 = vpop.f32.mrb[0].mxu0
            %v2466 = vadd.f32 %v2386, %v2465
            %v2467 = vpop.f32.mrb[0].mxu0
            %2468 = vdwg.mxu0
            %2469 = vmatprep.subr.mxu0 0.0
            %v2470 = vand.u32 %v2056, 4294901760
            %2471 = vmatpush1.msra.mxu0 %v2470
            %2472 = vmatprep.subr.mxu0 0.0
            %2473 = vmatpush1.msra.mxu0 0.0
            %2474 = vmatprep.subr.mxu0 0.0
            %2475 = vmatpush1.msra.mxu0 0.0
            %2476 = vmatprep.subr.mxu0 0.0
            %2477 = vmatpush1.msra.mxu0 0.0
            %2478 = vmatprep.subr.mxu0 0.0
            %2479 = vmatpush1.msra.mxu0 0.0
            %2480 = vmatprep.subr.mxu0 0.0
            %2481 = vmatpush1.msra.mxu0 0.0
            %2482 = vmatprep.subr.mxu0 0.0
            %2483 = vmatpush1.msra.mxu0 0.0
            %2484 = vmatprep.subr.mxu0 0.0
            %2485 = vmatpush1.msra.mxu0 0.0
            %2486 = vmatprep.subr.mxu0 0.0
            %2487 = vmatpush1.msra.mxu0 0.0
            %2488 = vmatprep.subr.mxu0 0.0
            %2489 = vmatpush1.msra.mxu0 0.0
            %2490 = vmatprep.subr.mxu0 0.0
            %2491 = vmatpush1.msra.mxu0 0.0
            %2492 = vmatprep.subr.mxu0 0.0
            %2493 = vmatpush1.msra.mxu0 0.0
            %2494 = vmatprep.subr.mxu0 0.0
            %2495 = vmatpush1.msra.mxu0 0.0
            %2496 = vmatprep.subr.mxu0 0.0
            %2497 = vmatpush1.msra.mxu0 0.0
            %2498 = vmatprep.subr.mxu0 0.0
            %2499 = vmatpush1.msra.mxu0 0.0
            %2500 = vmatprep.subr.mxu0 0.0
            %2501 = vmatpush1.msra.mxu0 0.0
            %2502 = vmatprep.subr.mxu0 0.0
            %2503 = vmatpush1.msra.mxu0 0.0
            %2504 = vmatprep.subr.mxu0 0.0
            %2505 = vmatpush1.msra.mxu0 0.0
            %2506 = vmatprep.subr.mxu0 0.0
            %2507 = vmatpush1.msra.mxu0 0.0
            %2508 = vmatprep.subr.mxu0 0.0
            %2509 = vmatpush1.msra.mxu0 0.0
            %2510 = vmatprep.subr.mxu0 0.0
            %2511 = vmatpush1.msra.mxu0 0.0
            %2512 = vmatprep.subr.mxu0 0.0
            %2513 = vmatpush1.msra.mxu0 0.0
            %2514 = vmatprep.subr.mxu0 0.0
            %2515 = vmatpush1.msra.mxu0 0.0
            %2516 = vmatprep.subr.mxu0 0.0
            %2517 = vmatpush1.msra.mxu0 0.0
            %2518 = vmatprep.subr.mxu0 0.0
            %2519 = vmatpush1.msra.mxu0 0.0
            %2520 = vmatprep.subr.mxu0 0.0
            %2521 = vmatpush1.msra.mxu0 0.0
            %2522 = vmatprep.subr.mxu0 0.0
            %2523 = vmatpush1.msra.mxu0 0.0
            %2524 = vmatprep.subr.mxu0 0.0
            %2525 = vmatpush1.msra.mxu0 0.0
            %2526 = vmatprep.subr.mxu0 0.0
            %2527 = vmatpush1.msra.mxu0 0.0
            %2528 = vmatprep.subr.mxu0 0.0
            %2529 = vmatpush1.msra.mxu0 0.0
            %2530 = vmatprep.subr.mxu0 0.0
            %2531 = vmatpush1.msra.mxu0 0.0
            %2532 = vmatprep.subr.mxu0 0.0
            %2533 = vmatpush1.msra.mxu0 0.0
            %2534 = vmatprep.mubr.f32.mxu0 0.0
            %v2535 = vand.u32 %v2050, 4294901760
            %2536 = vmatmul.mubr.f32.gmra.mrb[0].mxu0 %v2535
            %v2537 = vpop.f32.mrb[0].mxu0
            %v2538 = vadd.f32 %v2460, %v2537
            %v2539 = vpop.f32.mrb[0].mxu0
            %2540 = vmatprep.mubr.f32.mxu0 0.0
            %v2541 = vand.u32 %v2053, 4294901760
            %2542 = vmatmul.mubr.f32.gmra.mrb[0].mxu0 %v2541
            %v2543 = vpop.f32.mrb[0].mxu0
            %v2544 = vadd.f32 %v2466, %v2543
            %v2545 = vpop.f32.mrb[0].mxu0
            %2546 = vdwg.mxu0
            %s2547 = smul.u32 %s1587, 16
            %s2548 = scalar_lea.vmem %s557, %s2547 [#allocation11]
            %vm2549 = vcmask 130048
            %2550 = vst.msk [vmem:[%s2548] sm:$0xff] %vm2549, %v2538
            %2551 = vst.msk [vmem:[%s2548 + $0x8] sm:$0xff] %vm2549, %v2544
          $region100: #{ffm_forward.1} parent=94 // loop_footer
            %s1591 = sadd.s32 1, %s1587
          $region101: #{ffm_forward.1} parent=94 // loop_footer_branch
            %1586 = sbr.rel target = $region97
          $region102: #{ffm_forward.1} parent=94 // loop_exit
            _
        $region95: #{ffm_forward.1} parent=59 // pred_fallthru
          _
        %p2552 = scmp.eq.s32.totalorder %s38, 3
        // Predicated region
        $region103: #{ffm_forward.1} parent=59 // pred_check
          %p2553 = pneg %p2552
        $region104: #{ffm_forward.1} parent=59 // pred_check_branch
          %2555 = sbr.rel (%p2553) target = $region106
        $region105: #{ffm_forward.1} parent=59 // pred_region
          %v2556 = vld [vmem:[#allocation9] sm:$0xff]
          %v2557 = vld [vmem:[#allocation9 + $0x8] sm:$0xff]
          %v2558 = vld [vmem:[%s5] sm:$0xff]
          %v2559 = vld [vmem:[%s489] sm:$0xff]
          %v2560 = vld [vmem:[%s489 + $0x8] sm:$0xff]
          %v2561 = vld [vmem:[%s489 + $0x10] sm:$0xff]
          %v2562 = vld [vmem:[%s489 + $0x18] sm:$0xff]
          %vm2563 = vcmask 64512
          %v2565 = vsel %vm2563, %v2559, 0
          %v2568 = vsel %vm2563, %v2560, 0
          %v2571 = vsel %vm2563, %v2561, 0
          %v2574 = vsel %vm2563, %v2562, 0
          %2576 = vmatprep.subr.mxu0 0.0
          %v2577 = vand.u32 %v2558, 4294901760
          %2578 = vmatpush1.msra.mxu0 %v2577
          %2579 = vmatprep.subr.mxu0 0.0
          %2580 = vmatpush1.msra.mxu0 0.0
          %2581 = vmatprep.subr.mxu0 0.0
          %2582 = vmatpush1.msra.mxu0 0.0
          %2583 = vmatprep.subr.mxu0 0.0
          %2584 = vmatpush1.msra.mxu0 0.0
          %2585 = vmatprep.subr.mxu0 0.0
          %2586 = vmatpush1.msra.mxu0 0.0
          %2587 = vmatprep.subr.mxu0 0.0
          %2588 = vmatpush1.msra.mxu0 0.0
          %2589 = vmatprep.subr.mxu0 0.0
          %2590 = vmatpush1.msra.mxu0 0.0
          %2591 = vmatprep.subr.mxu0 0.0
          %2592 = vmatpush1.msra.mxu0 0.0
          %2593 = vmatprep.subr.mxu0 0.0
          %2594 = vmatpush1.msra.mxu0 0.0
          %2595 = vmatprep.subr.mxu0 0.0
          %2596 = vmatpush1.msra.mxu0 0.0
          %2597 = vmatprep.subr.mxu0 0.0
          %2598 = vmatpush1.msra.mxu0 0.0
          %2599 = vmatprep.subr.mxu0 0.0
          %2600 = vmatpush1.msra.mxu0 0.0
          %2601 = vmatprep.subr.mxu0 0.0
          %2602 = vmatpush1.msra.mxu0 0.0
          %2603 = vmatprep.subr.mxu0 0.0
          %2604 = vmatpush1.msra.mxu0 0.0
          %2605 = vmatprep.subr.mxu0 0.0
          %2606 = vmatpush1.msra.mxu0 0.0
          %2607 = vmatprep.subr.mxu0 0.0
          %2608 = vmatpush1.msra.mxu0 0.0
          %2609 = vmatprep.subr.mxu0 0.0
          %2610 = vmatpush1.msra.mxu0 0.0
          %2611 = vmatprep.subr.mxu0 0.0
          %2612 = vmatpush1.msra.mxu0 0.0
          %2613 = vmatprep.subr.mxu0 0.0
          %2614 = vmatpush1.msra.mxu0 0.0
          %2615 = vmatprep.subr.mxu0 0.0
          %2616 = vmatpush1.msra.mxu0 0.0
          %2617 = vmatprep.subr.mxu0 0.0
          %2618 = vmatpush1.msra.mxu0 0.0
          %2619 = vmatprep.subr.mxu0 0.0
          %2620 = vmatpush1.msra.mxu0 0.0
          %2621 = vmatprep.subr.mxu0 0.0
          %2622 = vmatpush1.msra.mxu0 0.0
          %2623 = vmatprep.subr.mxu0 0.0
          %2624 = vmatpush1.msra.mxu0 0.0
          %2625 = vmatprep.subr.mxu0 0.0
          %2626 = vmatpush1.msra.mxu0 0.0
          %2627 = vmatprep.subr.mxu0 0.0
          %2628 = vmatpush1.msra.mxu0 0.0
          %2629 = vmatprep.subr.mxu0 0.0
          %2630 = vmatpush1.msra.mxu0 0.0
          %2631 = vmatprep.subr.mxu0 0.0
          %2632 = vmatpush1.msra.mxu0 0.0
          %2633 = vmatprep.subr.mxu0 0.0
          %2634 = vmatpush1.msra.mxu0 0.0
          %2635 = vmatprep.subr.mxu0 0.0
          %2636 = vmatpush1.msra.mxu0 0.0
          %2637 = vmatprep.subr.mxu0 0.0
          %2638 = vmatpush1.msra.mxu0 0.0
          %2639 = vmatprep.subr.mxu0 0.0
          %2640 = vmatpush1.msra.mxu0 0.0
          %2641 = vmatprep.mubr.f32.mxu0 0.0
          %v2642 = vand.u32 %v2565, 4294901760
          %v2643 = vsub.f32 %v2565, %v2642
          %v2644 = vand.u32 %v2643, 4294901760
          %v2645 = vsub.f32 %v2643, %v2644
          %v2646 = vand.u32 %v2645, 4294901760
          %2647 = vmatmul.mubr.f32.gmra.mrb[0].mxu0 %v2646
          %v2648 = vpop.f32.mrb[0].mxu0
          %v2649 = vadd.f32 0.0, %v2648
          %v2650 = vpop.f32.mrb[0].mxu0
          %2651 = vmatprep.mubr.f32.mxu0 0.0
          %v2652 = vand.u32 %v2568, 4294901760
          %v2653 = vsub.f32 %v2568, %v2652
          %v2654 = vand.u32 %v2653, 4294901760
          %v2655 = vsub.f32 %v2653, %v2654
          %v2656 = vand.u32 %v2655, 4294901760
          %2657 = vmatmul.mubr.f32.gmra.mrb[0].mxu0 %v2656
          %v2658 = vpop.f32.mrb[0].mxu0
          %v2659 = vadd.f32 0.0, %v2658
          %v2660 = vpop.f32.mrb[0].mxu0
          %2661 = vmatprep.mubr.f32.mxu0 0.0
          %v2662 = vand.u32 %v2571, 4294901760
          %v2663 = vsub.f32 %v2571, %v2662
          %v2664 = vand.u32 %v2663, 4294901760
          %v2665 = vsub.f32 %v2663, %v2664
          %v2666 = vand.u32 %v2665, 4294901760
          %2667 = vmatmul.mubr.f32.gmra.mrb[0].mxu0 %v2666
          %v2668 = vpop.f32.mrb[0].mxu0
          %v2669 = vadd.f32 0.0, %v2668
          %v2670 = vpop.f32.mrb[0].mxu0
          %2671 = vmatprep.mubr.f32.mxu0 0.0
          %v2672 = vand.u32 %v2574, 4294901760
          %v2673 = vsub.f32 %v2574, %v2672
          %v2674 = vand.u32 %v2673, 4294901760
          %v2675 = vsub.f32 %v2673, %v2674
          %v2676 = vand.u32 %v2675, 4294901760
          %2677 = vmatmul.mubr.f32.gmra.mrb[0].mxu0 %v2676
          %v2678 = vpop.f32.mrb[0].mxu0
          %v2679 = vadd.f32 0.0, %v2678
          %v2680 = vpop.f32.mrb[0].mxu0
          %2681 = vdwg.mxu0
          %2682 = vmatprep.subr.mxu0 0.0
          %v2683 = vand.u32 %v2558, 4294901760
          %v2684 = vsub.f32 %v2558, %v2683
          %v2685 = vand.u32 %v2684, 4294901760
          %v2686 = vsub.f32 %v2684, %v2685
          %v2687 = vand.u32 %v2686, 4294901760
          %2688 = vmatpush1.msra.mxu0 %v2687
          %2689 = vmatprep.subr.mxu0 0.0
          %2690 = vmatpush1.msra.mxu0 0.0
          %2691 = vmatprep.subr.mxu0 0.0
          %2692 = vmatpush1.msra.mxu0 0.0
          %2693 = vmatprep.subr.mxu0 0.0
          %2694 = vmatpush1.msra.mxu0 0.0
          %2695 = vmatprep.subr.mxu0 0.0
          %2696 = vmatpush1.msra.mxu0 0.0
          %2697 = vmatprep.subr.mxu0 0.0
          %2698 = vmatpush1.msra.mxu0 0.0
          %2699 = vmatprep.subr.mxu0 0.0
          %2700 = vmatpush1.msra.mxu0 0.0
          %2701 = vmatprep.subr.mxu0 0.0
          %2702 = vmatpush1.msra.mxu0 0.0
          %2703 = vmatprep.subr.mxu0 0.0
          %2704 = vmatpush1.msra.mxu0 0.0
          %2705 = vmatprep.subr.mxu0 0.0
          %2706 = vmatpush1.msra.mxu0 0.0
          %2707 = vmatprep.subr.mxu0 0.0
          %2708 = vmatpush1.msra.mxu0 0.0
          %2709 = vmatprep.subr.mxu0 0.0
          %2710 = vmatpush1.msra.mxu0 0.0
          %2711 = vmatprep.subr.mxu0 0.0
          %2712 = vmatpush1.msra.mxu0 0.0
          %2713 = vmatprep.subr.mxu0 0.0
          %2714 = vmatpush1.msra.mxu0 0.0
          %2715 = vmatprep.subr.mxu0 0.0
          %2716 = vmatpush1.msra.mxu0 0.0
          %2717 = vmatprep.subr.mxu0 0.0
          %2718 = vmatpush1.msra.mxu0 0.0
          %2719 = vmatprep.subr.mxu0 0.0
          %2720 = vmatpush1.msra.mxu0 0.0
          %2721 = vmatprep.subr.mxu0 0.0
          %2722 = vmatpush1.msra.mxu0 0.0
          %2723 = vmatprep.subr.mxu0 0.0
          %2724 = vmatpush1.msra.mxu0 0.0
          %2725 = vmatprep.subr.mxu0 0.0
          %2726 = vmatpush1.msra.mxu0 0.0
          %2727 = vmatprep.subr.mxu0 0.0
          %2728 = vmatpush1.msra.mxu0 0.0
          %2729 = vmatprep.subr.mxu0 0.0
          %2730 = vmatpush1.msra.mxu0 0.0
          %2731 = vmatprep.subr.mxu0 0.0
          %2732 = vmatpush1.msra.mxu0 0.0
          %2733 = vmatprep.subr.mxu0 0.0
          %2734 = vmatpush1.msra.mxu0 0.0
          %2735 = vmatprep.subr.mxu0 0.0
          %2736 = vmatpush1.msra.mxu0 0.0
          %2737 = vmatprep.subr.mxu0 0.0
          %2738 = vmatpush1.msra.mxu0 0.0
          %2739 = vmatprep.subr.mxu0 0.0
          %2740 = vmatpush1.msra.mxu0 0.0
          %2741 = vmatprep.subr.mxu0 0.0
          %2742 = vmatpush1.msra.mxu0 0.0
          %2743 = vmatprep.subr.mxu0 0.0
          %2744 = vmatpush1.msra.mxu0 0.0
          %2745 = vmatprep.subr.mxu0 0.0
          %2746 = vmatpush1.msra.mxu0 0.0
          %2747 = vmatprep.subr.mxu0 0.0
          %2748 = vmatpush1.msra.mxu0 0.0
          %2749 = vmatprep.subr.mxu0 0.0
          %2750 = vmatpush1.msra.mxu0 0.0
          %2751 = vmatprep.mubr.f32.mxu0 0.0
          %v2752 = vand.u32 %v2565, 4294901760
          %2753 = vmatmul.mubr.f32.gmra.mrb[0].mxu0 %v2752
          %v2754 = vpop.f32.mrb[0].mxu0
          %v2755 = vadd.f32 %v2649, %v2754
          %v2756 = vpop.f32.mrb[0].mxu0
          %2757 = vmatprep.mubr.f32.mxu0 0.0
          %v2758 = vand.u32 %v2568, 4294901760
          %2759 = vmatmul.mubr.f32.gmra.mrb[0].mxu0 %v2758
          %v2760 = vpop.f32.mrb[0].mxu0
          %v2761 = vadd.f32 %v2659, %v2760
          %v2762 = vpop.f32.mrb[0].mxu0
          %2763 = vmatprep.mubr.f32.mxu0 0.0
          %v2764 = vand.u32 %v2571, 4294901760
          %2765 = vmatmul.mubr.f32.gmra.mrb[0].mxu0 %v2764
          %v2766 = vpop.f32.mrb[0].mxu0
          %v2767 = vadd.f32 %v2669, %v2766
          %v2768 = vpop.f32.mrb[0].mxu0
          %2769 = vmatprep.mubr.f32.mxu0 0.0
          %v2770 = vand.u32 %v2574, 4294901760
          %2771 = vmatmul.mubr.f32.gmra.mrb[0].mxu0 %v2770
          %v2772 = vpop.f32.mrb[0].mxu0
          %v2773 = vadd.f32 %v2679, %v2772
          %v2774 = vpop.f32.mrb[0].mxu0
          %2775 = vdwg.mxu0
          %2776 = vmatprep.subr.mxu0 0.0
          %v2777 = vand.u32 %v2558, 4294901760
          %v2778 = vsub.f32 %v2558, %v2777
          %2779 = vmatpush1.msra.mxu0 %v2778
          %2780 = vmatprep.subr.mxu0 0.0
          %2781 = vmatpush1.msra.mxu0 0.0
          %2782 = vmatprep.subr.mxu0 0.0
          %2783 = vmatpush1.msra.mxu0 0.0
          %2784 = vmatprep.subr.mxu0 0.0
          %2785 = vmatpush1.msra.mxu0 0.0
          %2786 = vmatprep.subr.mxu0 0.0
          %2787 = vmatpush1.msra.mxu0 0.0
          %2788 = vmatprep.subr.mxu0 0.0
          %2789 = vmatpush1.msra.mxu0 0.0
          %2790 = vmatprep.subr.mxu0 0.0
          %2791 = vmatpush1.msra.mxu0 0.0
          %2792 = vmatprep.subr.mxu0 0.0
          %2793 = vmatpush1.msra.mxu0 0.0
          %2794 = vmatprep.subr.mxu0 0.0
          %2795 = vmatpush1.msra.mxu0 0.0
          %2796 = vmatprep.subr.mxu0 0.0
          %2797 = vmatpush1.msra.mxu0 0.0
          %2798 = vmatprep.subr.mxu0 0.0
          %2799 = vmatpush1.msra.mxu0 0.0
          %2800 = vmatprep.subr.mxu0 0.0
          %2801 = vmatpush1.msra.mxu0 0.0
          %2802 = vmatprep.subr.mxu0 0.0
          %2803 = vmatpush1.msra.mxu0 0.0
          %2804 = vmatprep.subr.mxu0 0.0
          %2805 = vmatpush1.msra.mxu0 0.0
          %2806 = vmatprep.subr.mxu0 0.0
          %2807 = vmatpush1.msra.mxu0 0.0
          %2808 = vmatprep.subr.mxu0 0.0
          %2809 = vmatpush1.msra.mxu0 0.0
          %2810 = vmatprep.subr.mxu0 0.0
          %2811 = vmatpush1.msra.mxu0 0.0
          %2812 = vmatprep.subr.mxu0 0.0
          %2813 = vmatpush1.msra.mxu0 0.0
          %2814 = vmatprep.subr.mxu0 0.0
          %2815 = vmatpush1.msra.mxu0 0.0
          %2816 = vmatprep.subr.mxu0 0.0
          %2817 = vmatpush1.msra.mxu0 0.0
          %2818 = vmatprep.subr.mxu0 0.0
          %2819 = vmatpush1.msra.mxu0 0.0
          %2820 = vmatprep.subr.mxu0 0.0
          %2821 = vmatpush1.msra.mxu0 0.0
          %2822 = vmatprep.subr.mxu0 0.0
          %2823 = vmatpush1.msra.mxu0 0.0
          %2824 = vmatprep.subr.mxu0 0.0
          %2825 = vmatpush1.msra.mxu0 0.0
          %2826 = vmatprep.subr.mxu0 0.0
          %2827 = vmatpush1.msra.mxu0 0.0
          %2828 = vmatprep.subr.mxu0 0.0
          %2829 = vmatpush1.msra.mxu0 0.0
          %2830 = vmatprep.subr.mxu0 0.0
          %2831 = vmatpush1.msra.mxu0 0.0
          %2832 = vmatprep.subr.mxu0 0.0
          %2833 = vmatpush1.msra.mxu0 0.0
          %2834 = vmatprep.subr.mxu0 0.0
          %2835 = vmatpush1.msra.mxu0 0.0
          %2836 = vmatprep.subr.mxu0 0.0
          %2837 = vmatpush1.msra.mxu0 0.0
          %2838 = vmatprep.subr.mxu0 0.0
          %2839 = vmatpush1.msra.mxu0 0.0
          %2840 = vmatprep.subr.mxu0 0.0
          %2841 = vmatpush1.msra.mxu0 0.0
          %2842 = vmatprep.mubr.f32.mxu0 0.0
          %v2843 = vand.u32 %v2565, 4294901760
          %v2844 = vsub.f32 %v2565, %v2843
          %2845 = vmatmul.mubr.f32.gmra.mrb[0].mxu0 %v2844
          %v2846 = vpop.f32.mrb[0].mxu0
          %v2847 = vadd.f32 %v2755, %v2846
          %v2848 = vpop.f32.mrb[0].mxu0
          %2849 = vmatprep.mubr.f32.mxu0 0.0
          %v2850 = vand.u32 %v2568, 4294901760
          %v2851 = vsub.f32 %v2568, %v2850
          %2852 = vmatmul.mubr.f32.gmra.mrb[0].mxu0 %v2851
          %v2853 = vpop.f32.mrb[0].mxu0
          %v2854 = vadd.f32 %v2761, %v2853
          %v2855 = vpop.f32.mrb[0].mxu0
          %2856 = vmatprep.mubr.f32.mxu0 0.0
          %v2857 = vand.u32 %v2571, 4294901760
          %v2858 = vsub.f32 %v2571, %v2857
          %2859 = vmatmul.mubr.f32.gmra.mrb[0].mxu0 %v2858
          %v2860 = vpop.f32.mrb[0].mxu0
          %v2861 = vadd.f32 %v2767, %v2860
          %v2862 = vpop.f32.mrb[0].mxu0
          %2863 = vmatprep.mubr.f32.mxu0 0.0
          %v2864 = vand.u32 %v2574, 4294901760
          %v2865 = vsub.f32 %v2574, %v2864
          %2866 = vmatmul.mubr.f32.gmra.mrb[0].mxu0 %v2865
          %v2867 = vpop.f32.mrb[0].mxu0
          %v2868 = vadd.f32 %v2773, %v2867
          %v2869 = vpop.f32.mrb[0].mxu0
          %2870 = vdwg.mxu0
          %2871 = vmatprep.subr.mxu0 0.0
          %v2872 = vand.u32 %v2558, 4294901760
          %2873 = vmatpush1.msra.mxu0 %v2872
          %2874 = vmatprep.subr.mxu0 0.0
          %2875 = vmatpush1.msra.mxu0 0.0
          %2876 = vmatprep.subr.mxu0 0.0
          %2877 = vmatpush1.msra.mxu0 0.0
          %2878 = vmatprep.subr.mxu0 0.0
          %2879 = vmatpush1.msra.mxu0 0.0
          %2880 = vmatprep.subr.mxu0 0.0
          %2881 = vmatpush1.msra.mxu0 0.0
          %2882 = vmatprep.subr.mxu0 0.0
          %2883 = vmatpush1.msra.mxu0 0.0
          %2884 = vmatprep.subr.mxu0 0.0
          %2885 = vmatpush1.msra.mxu0 0.0
          %2886 = vmatprep.subr.mxu0 0.0
          %2887 = vmatpush1.msra.mxu0 0.0
          %2888 = vmatprep.subr.mxu0 0.0
          %2889 = vmatpush1.msra.mxu0 0.0
          %2890 = vmatprep.subr.mxu0 0.0
          %2891 = vmatpush1.msra.mxu0 0.0
          %2892 = vmatprep.subr.mxu0 0.0
          %2893 = vmatpush1.msra.mxu0 0.0
          %2894 = vmatprep.subr.mxu0 0.0
          %2895 = vmatpush1.msra.mxu0 0.0
          %2896 = vmatprep.subr.mxu0 0.0
          %2897 = vmatpush1.msra.mxu0 0.0
          %2898 = vmatprep.subr.mxu0 0.0
          %2899 = vmatpush1.msra.mxu0 0.0
          %2900 = vmatprep.subr.mxu0 0.0
          %2901 = vmatpush1.msra.mxu0 0.0
          %2902 = vmatprep.subr.mxu0 0.0
          %2903 = vmatpush1.msra.mxu0 0.0
          %2904 = vmatprep.subr.mxu0 0.0
          %2905 = vmatpush1.msra.mxu0 0.0
          %2906 = vmatprep.subr.mxu0 0.0
          %2907 = vmatpush1.msra.mxu0 0.0
          %2908 = vmatprep.subr.mxu0 0.0
          %2909 = vmatpush1.msra.mxu0 0.0
          %2910 = vmatprep.subr.mxu0 0.0
          %2911 = vmatpush1.msra.mxu0 0.0
          %2912 = vmatprep.subr.mxu0 0.0
          %2913 = vmatpush1.msra.mxu0 0.0
          %2914 = vmatprep.subr.mxu0 0.0
          %2915 = vmatpush1.msra.mxu0 0.0
          %2916 = vmatprep.subr.mxu0 0.0
          %2917 = vmatpush1.msra.mxu0 0.0
          %2918 = vmatprep.subr.mxu0 0.0
          %2919 = vmatpush1.msra.mxu0 0.0
          %2920 = vmatprep.subr.mxu0 0.0
          %2921 = vmatpush1.msra.mxu0 0.0
          %2922 = vmatprep.subr.mxu0 0.0
          %2923 = vmatpush1.msra.mxu0 0.0
          %2924 = vmatprep.subr.mxu0 0.0
          %2925 = vmatpush1.msra.mxu0 0.0
          %2926 = vmatprep.subr.mxu0 0.0
          %2927 = vmatpush1.msra.mxu0 0.0
          %2928 = vmatprep.subr.mxu0 0.0
          %2929 = vmatpush1.msra.mxu0 0.0
          %2930 = vmatprep.subr.mxu0 0.0
          %2931 = vmatpush1.msra.mxu0 0.0
          %2932 = vmatprep.subr.mxu0 0.0
          %2933 = vmatpush1.msra.mxu0 0.0
          %2934 = vmatprep.subr.mxu0 0.0
          %2935 = vmatpush1.msra.mxu0 0.0
          %2936 = vmatprep.mubr.f32.mxu0 0.0
          %v2937 = vand.u32 %v2565, 4294901760
          %v2938 = vsub.f32 %v2565, %v2937
          %v2939 = vand.u32 %v2938, 4294901760
          %2940 = vmatmul.mubr.f32.gmra.mrb[0].mxu0 %v2939
          %v2941 = vpop.f32.mrb[0].mxu0
          %v2942 = vadd.f32 %v2847, %v2941
          %v2943 = vpop.f32.mrb[0].mxu0
          %2944 = vmatprep.mubr.f32.mxu0 0.0
          %v2945 = vand.u32 %v2568, 4294901760
          %v2946 = vsub.f32 %v2568, %v2945
          %v2947 = vand.u32 %v2946, 4294901760
          %2948 = vmatmul.mubr.f32.gmra.mrb[0].mxu0 %v2947
          %v2949 = vpop.f32.mrb[0].mxu0
          %v2950 = vadd.f32 %v2854, %v2949
          %v2951 = vpop.f32.mrb[0].mxu0
          %2952 = vmatprep.mubr.f32.mxu0 0.0
          %v2953 = vand.u32 %v2571, 4294901760
          %v2954 = vsub.f32 %v2571, %v2953
          %v2955 = vand.u32 %v2954, 4294901760
          %2956 = vmatmul.mubr.f32.gmra.mrb[0].mxu0 %v2955
          %v2957 = vpop.f32.mrb[0].mxu0
          %v2958 = vadd.f32 %v2861, %v2957
          %v2959 = vpop.f32.mrb[0].mxu0
          %2960 = vmatprep.mubr.f32.mxu0 0.0
          %v2961 = vand.u32 %v2574, 4294901760
          %v2962 = vsub.f32 %v2574, %v2961
          %v2963 = vand.u32 %v2962, 4294901760
          %2964 = vmatmul.mubr.f32.gmra.mrb[0].mxu0 %v2963
          %v2965 = vpop.f32.mrb[0].mxu0
          %v2966 = vadd.f32 %v2868, %v2965
          %v2967 = vpop.f32.mrb[0].mxu0
          %2968 = vdwg.mxu0
          %2969 = vmatprep.subr.mxu0 0.0
          %v2970 = vand.u32 %v2558, 4294901760
          %v2971 = vsub.f32 %v2558, %v2970
          %v2972 = vand.u32 %v2971, 4294901760
          %2973 = vmatpush1.msra.mxu0 %v2972
          %2974 = vmatprep.subr.mxu0 0.0
          %2975 = vmatpush1.msra.mxu0 0.0
          %2976 = vmatprep.subr.mxu0 0.0
          %2977 = vmatpush1.msra.mxu0 0.0
          %2978 = vmatprep.subr.mxu0 0.0
          %2979 = vmatpush1.msra.mxu0 0.0
          %2980 = vmatprep.subr.mxu0 0.0
          %2981 = vmatpush1.msra.mxu0 0.0
          %2982 = vmatprep.subr.mxu0 0.0
          %2983 = vmatpush1.msra.mxu0 0.0
          %2984 = vmatprep.subr.mxu0 0.0
          %2985 = vmatpush1.msra.mxu0 0.0
          %2986 = vmatprep.subr.mxu0 0.0
          %2987 = vmatpush1.msra.mxu0 0.0
          %2988 = vmatprep.subr.mxu0 0.0
          %2989 = vmatpush1.msra.mxu0 0.0
          %2990 = vmatprep.subr.mxu0 0.0
          %2991 = vmatpush1.msra.mxu0 0.0
          %2992 = vmatprep.subr.mxu0 0.0
          %2993 = vmatpush1.msra.mxu0 0.0
          %2994 = vmatprep.subr.mxu0 0.0
          %2995 = vmatpush1.msra.mxu0 0.0
          %2996 = vmatprep.subr.mxu0 0.0
          %2997 = vmatpush1.msra.mxu0 0.0
          %2998 = vmatprep.subr.mxu0 0.0
          %2999 = vmatpush1.msra.mxu0 0.0
          %3000 = vmatprep.subr.mxu0 0.0
          %3001 = vmatpush1.msra.mxu0 0.0
          %3002 = vmatprep.subr.mxu0 0.0
          %3003 = vmatpush1.msra.mxu0 0.0
          %3004 = vmatprep.subr.mxu0 0.0
          %3005 = vmatpush1.msra.mxu0 0.0
          %3006 = vmatprep.subr.mxu0 0.0
          %3007 = vmatpush1.msra.mxu0 0.0
          %3008 = vmatprep.subr.mxu0 0.0
          %3009 = vmatpush1.msra.mxu0 0.0
          %3010 = vmatprep.subr.mxu0 0.0
          %3011 = vmatpush1.msra.mxu0 0.0
          %3012 = vmatprep.subr.mxu0 0.0
          %3013 = vmatpush1.msra.mxu0 0.0
          %3014 = vmatprep.subr.mxu0 0.0
          %3015 = vmatpush1.msra.mxu0 0.0
          %3016 = vmatprep.subr.mxu0 0.0
          %3017 = vmatpush1.msra.mxu0 0.0
          %3018 = vmatprep.subr.mxu0 0.0
          %3019 = vmatpush1.msra.mxu0 0.0
          %3020 = vmatprep.subr.mxu0 0.0
          %3021 = vmatpush1.msra.mxu0 0.0
          %3022 = vmatprep.subr.mxu0 0.0
          %3023 = vmatpush1.msra.mxu0 0.0
          %3024 = vmatprep.subr.mxu0 0.0
          %3025 = vmatpush1.msra.mxu0 0.0
          %3026 = vmatprep.subr.mxu0 0.0
          %3027 = vmatpush1.msra.mxu0 0.0
          %3028 = vmatprep.subr.mxu0 0.0
          %3029 = vmatpush1.msra.mxu0 0.0
          %3030 = vmatprep.subr.mxu0 0.0
          %3031 = vmatpush1.msra.mxu0 0.0
          %3032 = vmatprep.subr.mxu0 0.0
          %3033 = vmatpush1.msra.mxu0 0.0
          %3034 = vmatprep.subr.mxu0 0.0
          %3035 = vmatpush1.msra.mxu0 0.0
          %3036 = vmatprep.mubr.f32.mxu0 0.0
          %v3037 = vand.u32 %v2565, 4294901760
          %3038 = vmatmul.mubr.f32.gmra.mrb[0].mxu0 %v3037
          %v3039 = vpop.f32.mrb[0].mxu0
          %v3040 = vadd.f32 %v2942, %v3039
          %v3041 = vpop.f32.mrb[0].mxu0
          %3042 = vmatprep.mubr.f32.mxu0 0.0
          %v3043 = vand.u32 %v2568, 4294901760
          %3044 = vmatmul.mubr.f32.gmra.mrb[0].mxu0 %v3043
          %v3045 = vpop.f32.mrb[0].mxu0
          %v3046 = vadd.f32 %v2950, %v3045
          %v3047 = vpop.f32.mrb[0].mxu0
          %3048 = vmatprep.mubr.f32.mxu0 0.0
          %v3049 = vand.u32 %v2571, 4294901760
          %3050 = vmatmul.mubr.f32.gmra.mrb[0].mxu0 %v3049
          %v3051 = vpop.f32.mrb[0].mxu0
          %v3052 = vadd.f32 %v2958, %v3051
          %v3053 = vpop.f32.mrb[0].mxu0
          %3054 = vmatprep.mubr.f32.mxu0 0.0
          %v3055 = vand.u32 %v2574, 4294901760
          %3056 = vmatmul.mubr.f32.gmra.mrb[0].mxu0 %v3055
          %v3057 = vpop.f32.mrb[0].mxu0
          %v3058 = vadd.f32 %v2966, %v3057
          %v3059 = vpop.f32.mrb[0].mxu0
          %3060 = vdwg.mxu0
          %3061 = vmatprep.subr.mxu0 0.0
          %v3062 = vand.u32 %v2558, 4294901760
          %3063 = vmatpush1.msra.mxu0 %v3062
          %3064 = vmatprep.subr.mxu0 0.0
          %3065 = vmatpush1.msra.mxu0 0.0
          %3066 = vmatprep.subr.mxu0 0.0
          %3067 = vmatpush1.msra.mxu0 0.0
          %3068 = vmatprep.subr.mxu0 0.0
          %3069 = vmatpush1.msra.mxu0 0.0
          %3070 = vmatprep.subr.mxu0 0.0
          %3071 = vmatpush1.msra.mxu0 0.0
          %3072 = vmatprep.subr.mxu0 0.0
          %3073 = vmatpush1.msra.mxu0 0.0
          %3074 = vmatprep.subr.mxu0 0.0
          %3075 = vmatpush1.msra.mxu0 0.0
          %3076 = vmatprep.subr.mxu0 0.0
          %3077 = vmatpush1.msra.mxu0 0.0
          %3078 = vmatprep.subr.mxu0 0.0
          %3079 = vmatpush1.msra.mxu0 0.0
          %3080 = vmatprep.subr.mxu0 0.0
          %3081 = vmatpush1.msra.mxu0 0.0
          %3082 = vmatprep.subr.mxu0 0.0
          %3083 = vmatpush1.msra.mxu0 0.0
          %3084 = vmatprep.subr.mxu0 0.0
          %3085 = vmatpush1.msra.mxu0 0.0
          %3086 = vmatprep.subr.mxu0 0.0
          %3087 = vmatpush1.msra.mxu0 0.0
          %3088 = vmatprep.subr.mxu0 0.0
          %3089 = vmatpush1.msra.mxu0 0.0
          %3090 = vmatprep.subr.mxu0 0.0
          %3091 = vmatpush1.msra.mxu0 0.0
          %3092 = vmatprep.subr.mxu0 0.0
          %3093 = vmatpush1.msra.mxu0 0.0
          %3094 = vmatprep.subr.mxu0 0.0
          %3095 = vmatpush1.msra.mxu0 0.0
          %3096 = vmatprep.subr.mxu0 0.0
          %3097 = vmatpush1.msra.mxu0 0.0
          %3098 = vmatprep.subr.mxu0 0.0
          %3099 = vmatpush1.msra.mxu0 0.0
          %3100 = vmatprep.subr.mxu0 0.0
          %3101 = vmatpush1.msra.mxu0 0.0
          %3102 = vmatprep.subr.mxu0 0.0
          %3103 = vmatpush1.msra.mxu0 0.0
          %3104 = vmatprep.subr.mxu0 0.0
          %3105 = vmatpush1.msra.mxu0 0.0
          %3106 = vmatprep.subr.mxu0 0.0
          %3107 = vmatpush1.msra.mxu0 0.0
          %3108 = vmatprep.subr.mxu0 0.0
          %3109 = vmatpush1.msra.mxu0 0.0
          %3110 = vmatprep.subr.mxu0 0.0
          %3111 = vmatpush1.msra.mxu0 0.0
          %3112 = vmatprep.subr.mxu0 0.0
          %3113 = vmatpush1.msra.mxu0 0.0
          %3114 = vmatprep.subr.mxu0 0.0
          %3115 = vmatpush1.msra.mxu0 0.0
          %3116 = vmatprep.subr.mxu0 0.0
          %3117 = vmatpush1.msra.mxu0 0.0
          %3118 = vmatprep.subr.mxu0 0.0
          %3119 = vmatpush1.msra.mxu0 0.0
          %3120 = vmatprep.subr.mxu0 0.0
          %3121 = vmatpush1.msra.mxu0 0.0
          %3122 = vmatprep.subr.mxu0 0.0
          %3123 = vmatpush1.msra.mxu0 0.0
          %3124 = vmatprep.subr.mxu0 0.0
          %3125 = vmatpush1.msra.mxu0 0.0
          %3126 = vmatprep.mubr.f32.mxu0 0.0
          %v3127 = vand.u32 %v2565, 4294901760
          %3128 = vmatmul.mubr.f32.gmra.mrb[0].mxu0 %v3127
          %v3129 = vpop.f32.mrb[0].mxu0
          %v3130 = vadd.f32 %v3040, %v3129
          %v3131 = vpop.f32.mrb[0].mxu0
          %3132 = vmatprep.mubr.f32.mxu0 0.0
          %v3133 = vand.u32 %v2568, 4294901760
          %3134 = vmatmul.mubr.f32.gmra.mrb[0].mxu0 %v3133
          %v3135 = vpop.f32.mrb[0].mxu0
          %v3136 = vadd.f32 %v3046, %v3135
          %v3137 = vpop.f32.mrb[0].mxu0
          %3138 = vmatprep.mubr.f32.mxu0 0.0
          %v3139 = vand.u32 %v2571, 4294901760
          %3140 = vmatmul.mubr.f32.gmra.mrb[0].mxu0 %v3139
          %v3141 = vpop.f32.mrb[0].mxu0
          %v3142 = vadd.f32 %v3052, %v3141
          %v3143 = vpop.f32.mrb[0].mxu0
          %3144 = vmatprep.mubr.f32.mxu0 0.0
          %v3145 = vand.u32 %v2574, 4294901760
          %3146 = vmatmul.mubr.f32.gmra.mrb[0].mxu0 %v3145
          %v3147 = vpop.f32.mrb[0].mxu0
          %v3148 = vadd.f32 %v3058, %v3147
          %v3149 = vpop.f32.mrb[0].mxu0
          %3150 = vdwg.mxu0
          %vm3151 = vcmask 130048
          %3152 = vst.msk [vmem:[#allocation2] sm:$0xff] %vm3151, %v3130
          %3153 = vst.msk [vmem:[#allocation2 + $0x8] sm:$0xff] %vm3151, %v3136
          %3154 = vst.msk [vmem:[#allocation2 + $0x10] sm:$0xff] %vm3151, %v3142
          %3155 = vst.msk [vmem:[#allocation2 + $0x18] sm:$0xff] %vm3151, %v3148
          loop: start=0, step=1, limit=4
          $region107: #{ffm_forward.1} parent=105 // loop_pre_header
            _
          $region108: #{ffm_forward.1} parent=105 // loop_header
            %s3157 = sphi 0, %s3161
            %p3158 = scmp.ge.s32.totalorder %s3157, 4
          $region109: #{ffm_forward.1} parent=105 // loop_header_branch
            %3160 = sbr.rel (%p3158) target = $region113
          $region110: #{ffm_forward.1} parent=105 // loop_body
            %s3162 = smul.u32 %s3157, 8
            %s3163 = scalar_lea.vmem [#allocation2], %s3162
            %v3164 = vld [vmem:[%s3163] sm:$0xff]
            %v3166 = vsel %vm2563, %v2556, 0
            %v3169 = vsel %vm2563, %v2557, 0
            %3171 = vmatprep.subr.mxu0 0.0
            %v3172 = vand.u32 %v3164, 4294901760
            %3173 = vmatpush1.msra.mxu0 %v3172
            %3174 = vmatprep.subr.mxu0 0.0
            %3175 = vmatpush1.msra.mxu0 0.0
            %3176 = vmatprep.subr.mxu0 0.0
            %3177 = vmatpush1.msra.mxu0 0.0
            %3178 = vmatprep.subr.mxu0 0.0
            %3179 = vmatpush1.msra.mxu0 0.0
            %3180 = vmatprep.subr.mxu0 0.0
            %3181 = vmatpush1.msra.mxu0 0.0
            %3182 = vmatprep.subr.mxu0 0.0
            %3183 = vmatpush1.msra.mxu0 0.0
            %3184 = vmatprep.subr.mxu0 0.0
            %3185 = vmatpush1.msra.mxu0 0.0
            %3186 = vmatprep.subr.mxu0 0.0
            %3187 = vmatpush1.msra.mxu0 0.0
            %3188 = vmatprep.subr.mxu0 0.0
            %3189 = vmatpush1.msra.mxu0 0.0
            %3190 = vmatprep.subr.mxu0 0.0
            %3191 = vmatpush1.msra.mxu0 0.0
            %3192 = vmatprep.subr.mxu0 0.0
            %3193 = vmatpush1.msra.mxu0 0.0
            %3194 = vmatprep.subr.mxu0 0.0
            %3195 = vmatpush1.msra.mxu0 0.0
            %3196 = vmatprep.subr.mxu0 0.0
            %3197 = vmatpush1.msra.mxu0 0.0
            %3198 = vmatprep.subr.mxu0 0.0
            %3199 = vmatpush1.msra.mxu0 0.0
            %3200 = vmatprep.subr.mxu0 0.0
            %3201 = vmatpush1.msra.mxu0 0.0
            %3202 = vmatprep.subr.mxu0 0.0
            %3203 = vmatpush1.msra.mxu0 0.0
            %3204 = vmatprep.subr.mxu0 0.0
            %3205 = vmatpush1.msra.mxu0 0.0
            %3206 = vmatprep.subr.mxu0 0.0
            %3207 = vmatpush1.msra.mxu0 0.0
            %3208 = vmatprep.subr.mxu0 0.0
            %3209 = vmatpush1.msra.mxu0 0.0
            %3210 = vmatprep.subr.mxu0 0.0
            %3211 = vmatpush1.msra.mxu0 0.0
            %3212 = vmatprep.subr.mxu0 0.0
            %3213 = vmatpush1.msra.mxu0 0.0
            %3214 = vmatprep.subr.mxu0 0.0
            %3215 = vmatpush1.msra.mxu0 0.0
            %3216 = vmatprep.subr.mxu0 0.0
            %3217 = vmatpush1.msra.mxu0 0.0
            %3218 = vmatprep.subr.mxu0 0.0
            %3219 = vmatpush1.msra.mxu0 0.0
            %3220 = vmatprep.subr.mxu0 0.0
            %3221 = vmatpush1.msra.mxu0 0.0
            %3222 = vmatprep.subr.mxu0 0.0
            %3223 = vmatpush1.msra.mxu0 0.0
            %3224 = vmatprep.subr.mxu0 0.0
            %3225 = vmatpush1.msra.mxu0 0.0
            %3226 = vmatprep.subr.mxu0 0.0
            %3227 = vmatpush1.msra.mxu0 0.0
            %3228 = vmatprep.subr.mxu0 0.0
            %3229 = vmatpush1.msra.mxu0 0.0
            %3230 = vmatprep.subr.mxu0 0.0
            %3231 = vmatpush1.msra.mxu0 0.0
            %3232 = vmatprep.subr.mxu0 0.0
            %3233 = vmatpush1.msra.mxu0 0.0
            %3234 = vmatprep.subr.mxu0 0.0
            %3235 = vmatpush1.msra.mxu0 0.0
            %3236 = vmatprep.mubr.f32.mxu0 0.0
            %v3237 = vand.u32 %v3166, 4294901760
            %v3238 = vsub.f32 %v3166, %v3237
            %v3239 = vand.u32 %v3238, 4294901760
            %v3240 = vsub.f32 %v3238, %v3239
            %v3241 = vand.u32 %v3240, 4294901760
            %3242 = vmatmul.mubr.f32.gmra.mrb[0].mxu0 %v3241
            %v3243 = vpop.f32.mrb[0].mxu0
            %v3244 = vadd.f32 0.0, %v3243
            %v3245 = vpop.f32.mrb[0].mxu0
            %3246 = vmatprep.mubr.f32.mxu0 0.0
            %v3247 = vand.u32 %v3169, 4294901760
            %v3248 = vsub.f32 %v3169, %v3247
            %v3249 = vand.u32 %v3248, 4294901760
            %v3250 = vsub.f32 %v3248, %v3249
            %v3251 = vand.u32 %v3250, 4294901760
            %3252 = vmatmul.mubr.f32.gmra.mrb[0].mxu0 %v3251
            %v3253 = vpop.f32.mrb[0].mxu0
            %v3254 = vadd.f32 0.0, %v3253
            %v3255 = vpop.f32.mrb[0].mxu0
            %3256 = vdwg.mxu0
            %3257 = vmatprep.subr.mxu0 0.0
            %v3258 = vand.u32 %v3164, 4294901760
            %v3259 = vsub.f32 %v3164, %v3258
            %v3260 = vand.u32 %v3259, 4294901760
            %v3261 = vsub.f32 %v3259, %v3260
            %v3262 = vand.u32 %v3261, 4294901760
            %3263 = vmatpush1.msra.mxu0 %v3262
            %3264 = vmatprep.subr.mxu0 0.0
            %3265 = vmatpush1.msra.mxu0 0.0
            %3266 = vmatprep.subr.mxu0 0.0
            %3267 = vmatpush1.msra.mxu0 0.0
            %3268 = vmatprep.subr.mxu0 0.0
            %3269 = vmatpush1.msra.mxu0 0.0
            %3270 = vmatprep.subr.mxu0 0.0
            %3271 = vmatpush1.msra.mxu0 0.0
            %3272 = vmatprep.subr.mxu0 0.0
            %3273 = vmatpush1.msra.mxu0 0.0
            %3274 = vmatprep.subr.mxu0 0.0
            %3275 = vmatpush1.msra.mxu0 0.0
            %3276 = vmatprep.subr.mxu0 0.0
            %3277 = vmatpush1.msra.mxu0 0.0
            %3278 = vmatprep.subr.mxu0 0.0
            %3279 = vmatpush1.msra.mxu0 0.0
            %3280 = vmatprep.subr.mxu0 0.0
            %3281 = vmatpush1.msra.mxu0 0.0
            %3282 = vmatprep.subr.mxu0 0.0
            %3283 = vmatpush1.msra.mxu0 0.0
            %3284 = vmatprep.subr.mxu0 0.0
            %3285 = vmatpush1.msra.mxu0 0.0
            %3286 = vmatprep.subr.mxu0 0.0
            %3287 = vmatpush1.msra.mxu0 0.0
            %3288 = vmatprep.subr.mxu0 0.0
            %3289 = vmatpush1.msra.mxu0 0.0
            %3290 = vmatprep.subr.mxu0 0.0
            %3291 = vmatpush1.msra.mxu0 0.0
            %3292 = vmatprep.subr.mxu0 0.0
            %3293 = vmatpush1.msra.mxu0 0.0
            %3294 = vmatprep.subr.mxu0 0.0
            %3295 = vmatpush1.msra.mxu0 0.0
            %3296 = vmatprep.subr.mxu0 0.0
            %3297 = vmatpush1.msra.mxu0 0.0
            %3298 = vmatprep.subr.mxu0 0.0
            %3299 = vmatpush1.msra.mxu0 0.0
            %3300 = vmatprep.subr.mxu0 0.0
            %3301 = vmatpush1.msra.mxu0 0.0
            %3302 = vmatprep.subr.mxu0 0.0
            %3303 = vmatpush1.msra.mxu0 0.0
            %3304 = vmatprep.subr.mxu0 0.0
            %3305 = vmatpush1.msra.mxu0 0.0
            %3306 = vmatprep.subr.mxu0 0.0
            %3307 = vmatpush1.msra.mxu0 0.0
            %3308 = vmatprep.subr.mxu0 0.0
            %3309 = vmatpush1.msra.mxu0 0.0
            %3310 = vmatprep.subr.mxu0 0.0
            %3311 = vmatpush1.msra.mxu0 0.0
            %3312 = vmatprep.subr.mxu0 0.0
            %3313 = vmatpush1.msra.mxu0 0.0
            %3314 = vmatprep.subr.mxu0 0.0
            %3315 = vmatpush1.msra.mxu0 0.0
            %3316 = vmatprep.subr.mxu0 0.0
            %3317 = vmatpush1.msra.mxu0 0.0
            %3318 = vmatprep.subr.mxu0 0.0
            %3319 = vmatpush1.msra.mxu0 0.0
            %3320 = vmatprep.subr.mxu0 0.0
            %3321 = vmatpush1.msra.mxu0 0.0
            %3322 = vmatprep.subr.mxu0 0.0
            %3323 = vmatpush1.msra.mxu0 0.0
            %3324 = vmatprep.subr.mxu0 0.0
            %3325 = vmatpush1.msra.mxu0 0.0
            %3326 = vmatprep.mubr.f32.mxu0 0.0
            %v3327 = vand.u32 %v3166, 4294901760
            %3328 = vmatmul.mubr.f32.gmra.mrb[0].mxu0 %v3327
            %v3329 = vpop.f32.mrb[0].mxu0
            %v3330 = vadd.f32 %v3244, %v3329
            %v3331 = vpop.f32.mrb[0].mxu0
            %3332 = vmatprep.mubr.f32.mxu0 0.0
            %v3333 = vand.u32 %v3169, 4294901760
            %3334 = vmatmul.mubr.f32.gmra.mrb[0].mxu0 %v3333
            %v3335 = vpop.f32.mrb[0].mxu0
            %v3336 = vadd.f32 %v3254, %v3335
            %v3337 = vpop.f32.mrb[0].mxu0
            %3338 = vdwg.mxu0
            %3339 = vmatprep.subr.mxu0 0.0
            %v3340 = vand.u32 %v3164, 4294901760
            %v3341 = vsub.f32 %v3164, %v3340
            %3342 = vmatpush1.msra.mxu0 %v3341
            %3343 = vmatprep.subr.mxu0 0.0
            %3344 = vmatpush1.msra.mxu0 0.0
            %3345 = vmatprep.subr.mxu0 0.0
            %3346 = vmatpush1.msra.mxu0 0.0
            %3347 = vmatprep.subr.mxu0 0.0
            %3348 = vmatpush1.msra.mxu0 0.0
            %3349 = vmatprep.subr.mxu0 0.0
            %3350 = vmatpush1.msra.mxu0 0.0
            %3351 = vmatprep.subr.mxu0 0.0
            %3352 = vmatpush1.msra.mxu0 0.0
            %3353 = vmatprep.subr.mxu0 0.0
            %3354 = vmatpush1.msra.mxu0 0.0
            %3355 = vmatprep.subr.mxu0 0.0
            %3356 = vmatpush1.msra.mxu0 0.0
            %3357 = vmatprep.subr.mxu0 0.0
            %3358 = vmatpush1.msra.mxu0 0.0
            %3359 = vmatprep.subr.mxu0 0.0
            %3360 = vmatpush1.msra.mxu0 0.0
            %3361 = vmatprep.subr.mxu0 0.0
            %3362 = vmatpush1.msra.mxu0 0.0
            %3363 = vmatprep.subr.mxu0 0.0
            %3364 = vmatpush1.msra.mxu0 0.0
            %3365 = vmatprep.subr.mxu0 0.0
            %3366 = vmatpush1.msra.mxu0 0.0
            %3367 = vmatprep.subr.mxu0 0.0
            %3368 = vmatpush1.msra.mxu0 0.0
            %3369 = vmatprep.subr.mxu0 0.0
            %3370 = vmatpush1.msra.mxu0 0.0
            %3371 = vmatprep.subr.mxu0 0.0
            %3372 = vmatpush1.msra.mxu0 0.0
            %3373 = vmatprep.subr.mxu0 0.0
            %3374 = vmatpush1.msra.mxu0 0.0
            %3375 = vmatprep.subr.mxu0 0.0
            %3376 = vmatpush1.msra.mxu0 0.0
            %3377 = vmatprep.subr.mxu0 0.0
            %3378 = vmatpush1.msra.mxu0 0.0
            %3379 = vmatprep.subr.mxu0 0.0
            %3380 = vmatpush1.msra.mxu0 0.0
            %3381 = vmatprep.subr.mxu0 0.0
            %3382 = vmatpush1.msra.mxu0 0.0
            %3383 = vmatprep.subr.mxu0 0.0
            %3384 = vmatpush1.msra.mxu0 0.0
            %3385 = vmatprep.subr.mxu0 0.0
            %3386 = vmatpush1.msra.mxu0 0.0
            %3387 = vmatprep.subr.mxu0 0.0
            %3388 = vmatpush1.msra.mxu0 0.0
            %3389 = vmatprep.subr.mxu0 0.0
            %3390 = vmatpush1.msra.mxu0 0.0
            %3391 = vmatprep.subr.mxu0 0.0
            %3392 = vmatpush1.msra.mxu0 0.0
            %3393 = vmatprep.subr.mxu0 0.0
            %3394 = vmatpush1.msra.mxu0 0.0
            %3395 = vmatprep.subr.mxu0 0.0
            %3396 = vmatpush1.msra.mxu0 0.0
            %3397 = vmatprep.subr.mxu0 0.0
            %3398 = vmatpush1.msra.mxu0 0.0
            %3399 = vmatprep.subr.mxu0 0.0
            %3400 = vmatpush1.msra.mxu0 0.0
            %3401 = vmatprep.subr.mxu0 0.0
            %3402 = vmatpush1.msra.mxu0 0.0
            %3403 = vmatprep.subr.mxu0 0.0
            %3404 = vmatpush1.msra.mxu0 0.0
            %3405 = vmatprep.mubr.f32.mxu0 0.0
            %v3406 = vand.u32 %v3166, 4294901760
            %v3407 = vsub.f32 %v3166, %v3406
            %3408 = vmatmul.mubr.f32.gmra.mrb[0].mxu0 %v3407
            %v3409 = vpop.f32.mrb[0].mxu0
            %v3410 = vadd.f32 %v3330, %v3409
            %v3411 = vpop.f32.mrb[0].mxu0
            %3412 = vmatprep.mubr.f32.mxu0 0.0
            %v3413 = vand.u32 %v3169, 4294901760
            %v3414 = vsub.f32 %v3169, %v3413
            %3415 = vmatmul.mubr.f32.gmra.mrb[0].mxu0 %v3414
            %v3416 = vpop.f32.mrb[0].mxu0
            %v3417 = vadd.f32 %v3336, %v3416
            %v3418 = vpop.f32.mrb[0].mxu0
            %3419 = vdwg.mxu0
            %3420 = vmatprep.subr.mxu0 0.0
            %v3421 = vand.u32 %v3164, 4294901760
            %3422 = vmatpush1.msra.mxu0 %v3421
            %3423 = vmatprep.subr.mxu0 0.0
            %3424 = vmatpush1.msra.mxu0 0.0
            %3425 = vmatprep.subr.mxu0 0.0
            %3426 = vmatpush1.msra.mxu0 0.0
            %3427 = vmatprep.subr.mxu0 0.0
            %3428 = vmatpush1.msra.mxu0 0.0
            %3429 = vmatprep.subr.mxu0 0.0
            %3430 = vmatpush1.msra.mxu0 0.0
            %3431 = vmatprep.subr.mxu0 0.0
            %3432 = vmatpush1.msra.mxu0 0.0
            %3433 = vmatprep.subr.mxu0 0.0
            %3434 = vmatpush1.msra.mxu0 0.0
            %3435 = vmatprep.subr.mxu0 0.0
            %3436 = vmatpush1.msra.mxu0 0.0
            %3437 = vmatprep.subr.mxu0 0.0
            %3438 = vmatpush1.msra.mxu0 0.0
            %3439 = vmatprep.subr.mxu0 0.0
            %3440 = vmatpush1.msra.mxu0 0.0
            %3441 = vmatprep.subr.mxu0 0.0
            %3442 = vmatpush1.msra.mxu0 0.0
            %3443 = vmatprep.subr.mxu0 0.0
            %3444 = vmatpush1.msra.mxu0 0.0
            %3445 = vmatprep.subr.mxu0 0.0
            %3446 = vmatpush1.msra.mxu0 0.0
            %3447 = vmatprep.subr.mxu0 0.0
            %3448 = vmatpush1.msra.mxu0 0.0
            %3449 = vmatprep.subr.mxu0 0.0
            %3450 = vmatpush1.msra.mxu0 0.0
            %3451 = vmatprep.subr.mxu0 0.0
            %3452 = vmatpush1.msra.mxu0 0.0
            %3453 = vmatprep.subr.mxu0 0.0
            %3454 = vmatpush1.msra.mxu0 0.0
            %3455 = vmatprep.subr.mxu0 0.0
            %3456 = vmatpush1.msra.mxu0 0.0
            %3457 = vmatprep.subr.mxu0 0.0
            %3458 = vmatpush1.msra.mxu0 0.0
            %3459 = vmatprep.subr.mxu0 0.0
            %3460 = vmatpush1.msra.mxu0 0.0
            %3461 = vmatprep.subr.mxu0 0.0
            %3462 = vmatpush1.msra.mxu0 0.0
            %3463 = vmatprep.subr.mxu0 0.0
            %3464 = vmatpush1.msra.mxu0 0.0
            %3465 = vmatprep.subr.mxu0 0.0
            %3466 = vmatpush1.msra.mxu0 0.0
            %3467 = vmatprep.subr.mxu0 0.0
            %3468 = vmatpush1.msra.mxu0 0.0
            %3469 = vmatprep.subr.mxu0 0.0
            %3470 = vmatpush1.msra.mxu0 0.0
            %3471 = vmatprep.subr.mxu0 0.0
            %3472 = vmatpush1.msra.mxu0 0.0
            %3473 = vmatprep.subr.mxu0 0.0
            %3474 = vmatpush1.msra.mxu0 0.0
            %3475 = vmatprep.subr.mxu0 0.0
            %3476 = vmatpush1.msra.mxu0 0.0
            %3477 = vmatprep.subr.mxu0 0.0
            %3478 = vmatpush1.msra.mxu0 0.0
            %3479 = vmatprep.subr.mxu0 0.0
            %3480 = vmatpush1.msra.mxu0 0.0
            %3481 = vmatprep.subr.mxu0 0.0
            %3482 = vmatpush1.msra.mxu0 0.0
            %3483 = vmatprep.subr.mxu0 0.0
            %3484 = vmatpush1.msra.mxu0 0.0
            %3485 = vmatprep.mubr.f32.mxu0 0.0
            %v3486 = vand.u32 %v3166, 4294901760
            %v3487 = vsub.f32 %v3166, %v3486
            %v3488 = vand.u32 %v3487, 4294901760
            %3489 = vmatmul.mubr.f32.gmra.mrb[0].mxu0 %v3488
            %v3490 = vpop.f32.mrb[0].mxu0
            %v3491 = vadd.f32 %v3410, %v3490
            %v3492 = vpop.f32.mrb[0].mxu0
            %3493 = vmatprep.mubr.f32.mxu0 0.0
            %v3494 = vand.u32 %v3169, 4294901760
            %v3495 = vsub.f32 %v3169, %v3494
            %v3496 = vand.u32 %v3495, 4294901760
            %3497 = vmatmul.mubr.f32.gmra.mrb[0].mxu0 %v3496
            %v3498 = vpop.f32.mrb[0].mxu0
            %v3499 = vadd.f32 %v3417, %v3498
            %v3500 = vpop.f32.mrb[0].mxu0
            %3501 = vdwg.mxu0
            %3502 = vmatprep.subr.mxu0 0.0
            %v3503 = vand.u32 %v3164, 4294901760
            %v3504 = vsub.f32 %v3164, %v3503
            %v3505 = vand.u32 %v3504, 4294901760
            %3506 = vmatpush1.msra.mxu0 %v3505
            %3507 = vmatprep.subr.mxu0 0.0
            %3508 = vmatpush1.msra.mxu0 0.0
            %3509 = vmatprep.subr.mxu0 0.0
            %3510 = vmatpush1.msra.mxu0 0.0
            %3511 = vmatprep.subr.mxu0 0.0
            %3512 = vmatpush1.msra.mxu0 0.0
            %3513 = vmatprep.subr.mxu0 0.0
            %3514 = vmatpush1.msra.mxu0 0.0
            %3515 = vmatprep.subr.mxu0 0.0
            %3516 = vmatpush1.msra.mxu0 0.0
            %3517 = vmatprep.subr.mxu0 0.0
            %3518 = vmatpush1.msra.mxu0 0.0
            %3519 = vmatprep.subr.mxu0 0.0
            %3520 = vmatpush1.msra.mxu0 0.0
            %3521 = vmatprep.subr.mxu0 0.0
            %3522 = vmatpush1.msra.mxu0 0.0
            %3523 = vmatprep.subr.mxu0 0.0
            %3524 = vmatpush1.msra.mxu0 0.0
            %3525 = vmatprep.subr.mxu0 0.0
            %3526 = vmatpush1.msra.mxu0 0.0
            %3527 = vmatprep.subr.mxu0 0.0
            %3528 = vmatpush1.msra.mxu0 0.0
            %3529 = vmatprep.subr.mxu0 0.0
            %3530 = vmatpush1.msra.mxu0 0.0
            %3531 = vmatprep.subr.mxu0 0.0
            %3532 = vmatpush1.msra.mxu0 0.0
            %3533 = vmatprep.subr.mxu0 0.0
            %3534 = vmatpush1.msra.mxu0 0.0
            %3535 = vmatprep.subr.mxu0 0.0
            %3536 = vmatpush1.msra.mxu0 0.0
            %3537 = vmatprep.subr.mxu0 0.0
            %3538 = vmatpush1.msra.mxu0 0.0
            %3539 = vmatprep.subr.mxu0 0.0
            %3540 = vmatpush1.msra.mxu0 0.0
            %3541 = vmatprep.subr.mxu0 0.0
            %3542 = vmatpush1.msra.mxu0 0.0
            %3543 = vmatprep.subr.mxu0 0.0
            %3544 = vmatpush1.msra.mxu0 0.0
            %3545 = vmatprep.subr.mxu0 0.0
            %3546 = vmatpush1.msra.mxu0 0.0
            %3547 = vmatprep.subr.mxu0 0.0
            %3548 = vmatpush1.msra.mxu0 0.0
            %3549 = vmatprep.subr.mxu0 0.0
            %3550 = vmatpush1.msra.mxu0 0.0
            %3551 = vmatprep.subr.mxu0 0.0
            %3552 = vmatpush1.msra.mxu0 0.0
            %3553 = vmatprep.subr.mxu0 0.0
            %3554 = vmatpush1.msra.mxu0 0.0
            %3555 = vmatprep.subr.mxu0 0.0
            %3556 = vmatpush1.msra.mxu0 0.0
            %3557 = vmatprep.subr.mxu0 0.0
            %3558 = vmatpush1.msra.mxu0 0.0
            %3559 = vmatprep.subr.mxu0 0.0
            %3560 = vmatpush1.msra.mxu0 0.0
            %3561 = vmatprep.subr.mxu0 0.0
            %3562 = vmatpush1.msra.mxu0 0.0
            %3563 = vmatprep.subr.mxu0 0.0
            %3564 = vmatpush1.msra.mxu0 0.0
            %3565 = vmatprep.subr.mxu0 0.0
            %3566 = vmatpush1.msra.mxu0 0.0
            %3567 = vmatprep.subr.mxu0 0.0
            %3568 = vmatpush1.msra.mxu0 0.0
            %3569 = vmatprep.mubr.f32.mxu0 0.0
            %v3570 = vand.u32 %v3166, 4294901760
            %3571 = vmatmul.mubr.f32.gmra.mrb[0].mxu0 %v3570
            %v3572 = vpop.f32.mrb[0].mxu0
            %v3573 = vadd.f32 %v3491, %v3572
            %v3574 = vpop.f32.mrb[0].mxu0
            %3575 = vmatprep.mubr.f32.mxu0 0.0
            %v3576 = vand.u32 %v3169, 4294901760
            %3577 = vmatmul.mubr.f32.gmra.mrb[0].mxu0 %v3576
            %v3578 = vpop.f32.mrb[0].mxu0
            %v3579 = vadd.f32 %v3499, %v3578
            %v3580 = vpop.f32.mrb[0].mxu0
            %3581 = vdwg.mxu0
            %3582 = vmatprep.subr.mxu0 0.0
            %v3583 = vand.u32 %v3164, 4294901760
            %3584 = vmatpush1.msra.mxu0 %v3583
            %3585 = vmatprep.subr.mxu0 0.0
            %3586 = vmatpush1.msra.mxu0 0.0
            %3587 = vmatprep.subr.mxu0 0.0
            %3588 = vmatpush1.msra.mxu0 0.0
            %3589 = vmatprep.subr.mxu0 0.0
            %3590 = vmatpush1.msra.mxu0 0.0
            %3591 = vmatprep.subr.mxu0 0.0
            %3592 = vmatpush1.msra.mxu0 0.0
            %3593 = vmatprep.subr.mxu0 0.0
            %3594 = vmatpush1.msra.mxu0 0.0
            %3595 = vmatprep.subr.mxu0 0.0
            %3596 = vmatpush1.msra.mxu0 0.0
            %3597 = vmatprep.subr.mxu0 0.0
            %3598 = vmatpush1.msra.mxu0 0.0
            %3599 = vmatprep.subr.mxu0 0.0
            %3600 = vmatpush1.msra.mxu0 0.0
            %3601 = vmatprep.subr.mxu0 0.0
            %3602 = vmatpush1.msra.mxu0 0.0
            %3603 = vmatprep.subr.mxu0 0.0
            %3604 = vmatpush1.msra.mxu0 0.0
            %3605 = vmatprep.subr.mxu0 0.0
            %3606 = vmatpush1.msra.mxu0 0.0
            %3607 = vmatprep.subr.mxu0 0.0
            %3608 = vmatpush1.msra.mxu0 0.0
            %3609 = vmatprep.subr.mxu0 0.0
            %3610 = vmatpush1.msra.mxu0 0.0
            %3611 = vmatprep.subr.mxu0 0.0
            %3612 = vmatpush1.msra.mxu0 0.0
            %3613 = vmatprep.subr.mxu0 0.0
            %3614 = vmatpush1.msra.mxu0 0.0
            %3615 = vmatprep.subr.mxu0 0.0
            %3616 = vmatpush1.msra.mxu0 0.0
            %3617 = vmatprep.subr.mxu0 0.0
            %3618 = vmatpush1.msra.mxu0 0.0
            %3619 = vmatprep.subr.mxu0 0.0
            %3620 = vmatpush1.msra.mxu0 0.0
            %3621 = vmatprep.subr.mxu0 0.0
            %3622 = vmatpush1.msra.mxu0 0.0
            %3623 = vmatprep.subr.mxu0 0.0
            %3624 = vmatpush1.msra.mxu0 0.0
            %3625 = vmatprep.subr.mxu0 0.0
            %3626 = vmatpush1.msra.mxu0 0.0
            %3627 = vmatprep.subr.mxu0 0.0
            %3628 = vmatpush1.msra.mxu0 0.0
            %3629 = vmatprep.subr.mxu0 0.0
            %3630 = vmatpush1.msra.mxu0 0.0
            %3631 = vmatprep.subr.mxu0 0.0
            %3632 = vmatpush1.msra.mxu0 0.0
            %3633 = vmatprep.subr.mxu0 0.0
            %3634 = vmatpush1.msra.mxu0 0.0
            %3635 = vmatprep.subr.mxu0 0.0
            %3636 = vmatpush1.msra.mxu0 0.0
            %3637 = vmatprep.subr.mxu0 0.0
            %3638 = vmatpush1.msra.mxu0 0.0
            %3639 = vmatprep.subr.mxu0 0.0
            %3640 = vmatpush1.msra.mxu0 0.0
            %3641 = vmatprep.subr.mxu0 0.0
            %3642 = vmatpush1.msra.mxu0 0.0
            %3643 = vmatprep.subr.mxu0 0.0
            %3644 = vmatpush1.msra.mxu0 0.0
            %3645 = vmatprep.subr.mxu0 0.0
            %3646 = vmatpush1.msra.mxu0 0.0
            %3647 = vmatprep.mubr.f32.mxu0 0.0
            %v3648 = vand.u32 %v3166, 4294901760
            %3649 = vmatmul.mubr.f32.gmra.mrb[0].mxu0 %v3648
            %v3650 = vpop.f32.mrb[0].mxu0
            %v3651 = vadd.f32 %v3573, %v3650
            %v3652 = vpop.f32.mrb[0].mxu0
            %3653 = vmatprep.mubr.f32.mxu0 0.0
            %v3654 = vand.u32 %v3169, 4294901760
            %3655 = vmatmul.mubr.f32.gmra.mrb[0].mxu0 %v3654
            %v3656 = vpop.f32.mrb[0].mxu0
            %v3657 = vadd.f32 %v3579, %v3656
            %v3658 = vpop.f32.mrb[0].mxu0
            %3659 = vdwg.mxu0
            %s3660 = smul.u32 %s3157, 16
            %s3661 = scalar_lea.vmem %s557, %s3660 [#allocation11]
            %3662 = vst.msk [vmem:[%s3661] sm:$0xff] %vm3151, %v3651
            %3663 = vst.msk [vmem:[%s3661 + $0x8] sm:$0xff] %vm3151, %v3657
          $region111: #{ffm_forward.1} parent=105 // loop_footer
            %s3161 = sadd.s32 1, %s3157
          $region112: #{ffm_forward.1} parent=105 // loop_footer_branch
            %3156 = sbr.rel target = $region108
          $region113: #{ffm_forward.1} parent=105 // loop_exit
            _
        $region106: #{ffm_forward.1} parent=59 // pred_fallthru
          _
        %s3664 = sand.u32 %s326, 1
        %s3665 = scalar_lea.sflag [#allocation5], %s3664
        %s3666 = sand.u32 %s326, 1
        %s3667 = smul.addr %s3666, 64
        %s3668 = scalar_lea.vmem [#allocation11], %s3667
        // Predicated region
        $region114: #{ffm_forward.1} parent=59 // pred_check
          %p3669 = pneg %p336
        $region115: #{ffm_forward.1} parent=59 // pred_check_branch
          %3671 = sbr.rel (%p3669) target = $region117
        $region116: #{ffm_forward.1} parent=59 // pred_region
          %s3672 = ssub.s32 4, %s38
          %p3673 = scmp.lt.s32.totalorder %s3672, 0
          %s3674 = ssub.s32 0, %s3672
          %s3675 = scalar_select %p3673, %s3674, %s3672
          %s3676 = sand.u32 %s3675, 3
          %s3677 = ssub.s32 0, %s3676
          %s3678 = scalar_select %p3673, %s3677, %s3676
          %p3679 = scmp.ne.s32.totalorder %s3678, 0
          %p3680 = scmp.lt.s32.totalorder %s3678, 0
          %p3681 = pnand %p3680, %p3679
          %p3682 = pneg %p3681
          %s3683 = sadd.s32 %s3678, 4
          %s3684 = scalar_select %p3682, %s3683, %s3678
          %s3685 = smul.u32 4, %s37
          %s3687 = ssub.s32 1024, 1024
          %3688 = vsyncadd %s3665, %s3687
          %s3689 = smul.addr %s3685, 2
          %s3690 = smul.addr %s3684, 8
          %s3691 = sadd.s32 %s3689, %s3690
          %s3692 = smul.addr %s36, 32
          %s3693 = sadd.s32 %s3691, %s3692
          %s3694 = smul.addr %s3693, 128
          %s3695 = scalar_lea.hbm %s10, %s3694
          %s3696 = sshll.u32 %s3668, 4
          %s3697 = int_to_ptr.vmem [resolvable:$true] %s3696
          %3702 = dma.vmem_to_hbm [thread:$0]  %s3697, 1024, %s3695, %s3665, 128, 128, 8
        $region117: #{ffm_forward.1} parent=59 // pred_fallthru
          _
      $region60: #{ffm_forward.1} parent=5 // pred_fallthru
        _
      %p3703 = scmp.le.s32.totalorder 2, %s26
      // Predicated region
      $region118: #{ffm_forward.1} parent=5 // pred_check
        %p3704 = pneg %p3703
      $region119: #{ffm_forward.1} parent=5 // pred_check_branch
        %3706 = sbr.rel (%p3704) target = $region121
      $region120: #{ffm_forward.1} parent=5 // pred_region
        %s3707 = ssub.s32 %s26, 2
        // Predicated region
        $region122: #{ffm_forward.1} parent=120 // pred_check
          %p3708 = pneg %p342
        $region123: #{ffm_forward.1} parent=120 // pred_check_branch
          %3710 = sbr.rel (%p3708) target = $region125
        $region124: #{ffm_forward.1} parent=120 // pred_region
          %s3711 = sand.u32 %s327, 1
          %s3712 = scalar_lea.sflag [#allocation5], %s3711
          %s3713 = sand.u32 %s327, 1
          %s3714 = smul.addr %s3713, 64
          %s3715 = scalar_lea.vmem [#allocation11], %s3714
          %3716 = dma.done %s3712, 1024
        $region125: #{ffm_forward.1} parent=120 // pred_fallthru
          _
      $region121: #{ffm_forward.1} parent=5 // pred_fallthru
        _
    $region6: #{ffm_forward.1} parent=1 // loop_footer
      %s30 = sadd.s32 1, %s26
    $region7: #{ffm_forward.1} parent=1 // loop_footer_branch
      %25 = sbr.rel target = $region3
    $region8: #{ffm_forward.1} parent=1 // loop_exit
      _
    %3717 = vsyncpa [#allocation4], 1
    %s3718 = scalar_lea.sflag [#allocation4], 1
    %3719 = vsyncpa %s3718, 1
    %3720 = vsyncpa [#allocation7], 1
    %s3721 = scalar_lea.sflag [#allocation7], 1
    %3722 = vsyncpa %s3721, 1
    %3723 = vsyncpa [#allocation10], 1
    %3724 = vsyncpa [#allocation5], 1
    %s3725 = scalar_lea.sflag [#allocation5], 1
    %3726 = vsyncpa %s3725, 1

</llo_original>
